<compile_context>
chip_gen: v5e
topology: v5e:2x2
jax: 0.10.0
libtpu: 0.0.40
codegen_flags: <defaults>
</compile_context>

<pallas_src>
import functools

import jax
import jax.numpy as jnp
from jax.experimental import pallas as pl
from jax.experimental.pallas import tpu as pltpu

EPS = 1e-5
EXPANSION = 4                       # Bottleneck expansion


def _round_up(x, m):
    return (x + m - 1) // m * m


def _vmem_limit_bytes():
    """~75% of the chip's VMEM (v5e/v6e: ~96 MiB, v7x: ~48 MiB); 48 MiB fallback."""
    try:
        cap = pltpu.get_tpu_info().vmem_capacity_bytes
        return int(cap * 3 // 4)
    except Exception:
        return 48 * 1024 * 1024


VMEM_LIMIT = _vmem_limit_bytes()


def _choose_row_tile(M, tm_max=512, min_steps=2):
    """Pick (tm, Mp) for a flat row-tiled 1x1-conv grid.

    Prefers a tile that divides the (8-rounded) row count exactly -- avoiding a
    jnp.pad copy of the activation -- and caps the tile so the 'parallel' grid
    has at least `min_steps` steps (both v7x TensorCores get work)."""
    Mp = _round_up(M, 8)
    cap = min(Mp, tm_max, max(8, _round_up(-(-Mp // min_steps), 8)))
    best = None
    for t in range(cap, 7, -8):
        if Mp % t == 0:
            best = t
            break
    if best is not None and (best >= 64 or Mp <= 256):
        return best, Mp
    return cap, _round_up(Mp, cap)      # rare fallback: pad rows up to the tile


def _row_group(Ho, Wo, m_cap=128):
    """Output rows fused into one MXU push: M = rg*Wo <= m_cap keeps the fp32
    accumulator well under the vreg budget; rg must divide Ho."""
    rg = max(1, min(Ho, m_cap // max(Wo, 1)))
    while Ho % rg:
        rg -= 1
    return rg


# ---------------------------------------------------------------------------
# Pallas kernels
# ---------------------------------------------------------------------------
def _mm_bias_kernel(x_ref, w_ref, b_ref, o_ref, *, relu):
    """(tm, K) @ (K, Cout); BN scale pre-folded into w; + bias; optional ReLU."""
    y = jnp.dot(x_ref[...], w_ref[...], preferred_element_type=jnp.float32)
    y = y + b_ref[...]
    if relu:
        y = jnp.maximum(y, 0.0)
    o_ref[...] = y.astype(o_ref.dtype)


def _mm_bias_residual_kernel(x_ref, w_ref, b_ref, r_ref, o_ref):
    """Fused: conv3(1x1)+bn3 + identity residual + ReLU."""
    y = jnp.dot(x_ref[...], w_ref[...], preferred_element_type=jnp.float32) + b_ref[...]
    y = y + r_ref[...].astype(jnp.float32)
    o_ref[...] = jnp.maximum(y, 0.0).astype(o_ref.dtype)


def _conv3x3_kernel(x_ref, w_ref, b_ref, o_ref, *, stride, relu, cin, row_group):
    """3x3 conv (pad=1, stride 1|2) for one batch image per grid step.

    x_ref: (1, Hp, Wc, Ceff) -- stride 1: Wc = W+2,  Ceff = Cin
                                stride 2: Wc = Wp/2, Ceff = 2*Cin (even/odd W
                                columns lane-packed, so every slice below is a
                                static *contiguous* slice; no strided access).
    w_ref: (9*Cin, Cout), tap-major (kh*3+kw), BN scale folded in.
    All 9 taps of `row_group` output rows are fused along the contraction dim
    into a single (row_group*Wo, 9*Cin) MXU push with an fp32 accumulator.
    """
    Ho, Wo = o_ref.shape[1], o_ref.shape[2]
    w = w_ref[...]
    bias = b_ref[...]

    def tap(r, kh, kw):
        h = stride * r + kh                           # static Python ints
        if stride == 1:
            return x_ref[0, h, kw:kw + Wo, :]
        p0, half = kw // 2, kw % 2
        return x_ref[0, h, p0:p0 + Wo, half * cin:(half + 1) * cin]

    for r0 in range(0, Ho, row_group):
        taps = []
        for kh in range(3):
            for kw in range(3):
                rows = [tap(r0 + j, kh, kw) for j in range(row_group)]
                taps.append(rows[0] if row_group == 1
                            else jnp.concatenate(rows, axis=0))
        lhs = jnp.concatenate(taps, axis=-1)          # (row_group*Wo, 9*Cin)
        y = jnp.dot(lhs, w, preferred_element_type=jnp.float32) + bias
        if relu:
            y = jnp.maximum(y, 0.0)
        y = y.astype(o_ref.dtype)
        for j in range(row_group):
            o_ref[0, r0 + j] = y[j * Wo:(j + 1) * Wo, :]


def _proj_out_kernel(o2_ref, xs_ref, w3_ref, b3_ref, ws_ref, bs_ref, out_ref,
                     *, stride, cin, row_group):
    """Fused block epilogue: conv3(1x1)+bn3 + projection shortcut (1x1+bn, with
    the stride-s subsample folded in) + ReLU; one batch image per grid step.

    o2_ref: (1, Ho, Wo, planes)   conv2 output
    xs_ref: (1, H, Wc, Ceff)      block input; stride 2 packs even/odd W columns
                                  on lanes, so the subsample is an even-row index
                                  plus a contiguous lane slice (no gather).
    """
    Ho, Wo = out_ref.shape[1], out_ref.shape[2]
    w3, b3 = w3_ref[...], b3_ref[...]
    ws, bs = ws_ref[...], bs_ref[...]

    def stack(rows):
        return rows[0] if len(rows) == 1 else jnp.concatenate(rows, axis=0)

    for r0 in range(0, Ho, row_group):
        main = stack([o2_ref[0, r0 + j] for j in range(row_group)])
        sc = stack([xs_ref[0, stride * (r0 + j), 0:Wo, 0:cin]
                    for j in range(row_group)])
        y = jnp.dot(main, w3, preferred_element_type=jnp.float32) + b3
        y = y + jnp.dot(sc, ws, preferred_element_type=jnp.float32) + bs
        y = jnp.maximum(y, 0.0).astype(out_ref.dtype)
        for j in range(row_group):
            out_ref[0, r0 + j] = y[j * Wo:(j + 1) * Wo, :]


# ---------------------------------------------------------------------------
# Pallas wrappers
# ---------------------------------------------------------------------------
def conv1x1_block(x, w, b, *, relu=True, residual=None, out_dtype=None,
                  tm_max=512, min_steps=2):
    """y = act( x @ w + b [+ residual] ) over flat rows.  x:(M,K), w:(K,Cout)."""
    M, K = x.shape
    Cout = w.shape[1]
    out_dtype = out_dtype or x.dtype
    tm, Mp = _choose_row_tile(M, tm_max, min_steps)

    def pad_rows(a):
        return a if a.shape[0] == Mp else jnp.pad(a, ((0, Mp - a.shape[0]), (0, 0)))

    # TODO(synk): on v7x, single-buffer the constant w/b blocks
    # (pipeline_mode=pl.Buffered(1)) to halve their VMEM footprint.
    args = [pad_rows(x), w, b.reshape(1, Cout).astype(jnp.float32)]
    in_specs = [pl.BlockSpec((tm, K), lambda i: (i, 0)),
                pl.BlockSpec((K, Cout), lambda i: (0, 0)),
                pl.BlockSpec((1, Cout), lambda i: (0, 0))]

    if residual is not None:                  # fused identity residual (+ ReLU)
        args.append(pad_rows(residual))
        in_specs.append(pl.BlockSpec((tm, Cout), lambda i: (i, 0)))
        kernel = _mm_bias_residual_kernel
    else:
        kernel = functools.partial(_mm_bias_kernel, relu=relu)

    out = pl.pallas_call(
        kernel,
        out_shape=jax.ShapeDtypeStruct((Mp, Cout), out_dtype),
        grid_spec=pltpu.PrefetchScalarGridSpec(
            num_scalar_prefetch=0,
            grid=(Mp // tm,),
            in_specs=in_specs,
            out_specs=pl.BlockSpec((tm, Cout), lambda i: (i, 0))),
        compiler_params=pltpu.CompilerParams(
            dimension_semantics=("parallel",),
            vmem_limit_bytes=VMEM_LIMIT),
    )(*args)
    return out if Mp == M else out[:M]


def conv3x3_bn(x, w9, b, *, stride, relu=True, out_dtype=None):
    """3x3 conv, padding=1, stride in {1,2}; BN folded into w9; + bias; ReLU.

    x:(N,H,W,Cin) NHWC.  w9:(9*Cinp, Cout), tap order kh*3+kw, Cin padded to Cinp.
    Grid = (N,): one whole feature map per grid step (amortizes per-step overhead,
    fetches every input row exactly once); row groups fused into deep-K MXU pushes.
    """
    assert stride in (1, 2)
    N, H, W, Cin = x.shape
    Cout = w9.shape[1]
    cinp = w9.shape[0] // 9
    assert cinp >= Cin
    out_dtype = out_dtype or x.dtype
    Ho = (H - 1) // stride + 1
    Wo = (W - 1) // stride + 1
    Hp = H + 2

    if stride == 1:
        Wp = W + 2
        wc, ceff = Wp, cinp
    else:
        Wp = max(W + 2, 2 * Wo + 2)
        Wp += Wp % 2                          # pairs view needs an even padded W
        wc, ceff = Wp // 2, 2 * cinp

    # one pad covers the 3x3 halo, the stride-2 right pad and the channel pad
    xp = jnp.pad(x, ((0, 0), (1, 1), (1, Wp - W - 1), (0, cinp - Cin)))
    if stride == 2:
        # lane-pack even/odd W columns; flat-order-preserving reshape (no gather)
        xp = xp.reshape(N, Hp, wc, ceff)

    rg = _row_group(Ho, Wo)
    kernel = functools.partial(_conv3x3_kernel, stride=stride, relu=relu,
                               cin=cinp, row_group=rg)
    return pl.pallas_call(
        kernel,
        out_shape=jax.ShapeDtypeStruct((N, Ho, Wo, Cout), out_dtype),
        grid_spec=pltpu.PrefetchScalarGridSpec(
            num_scalar_prefetch=0,
            grid=(N,),
            in_specs=[pl.BlockSpec((1, Hp, wc, ceff), lambda n: (n, 0, 0, 0)),
                      pl.BlockSpec((9 * cinp, Cout), lambda n: (0, 0)),
                      pl.BlockSpec((1, Cout), lambda n: (0, 0))],
            out_specs=pl.BlockSpec((1, Ho, Wo, Cout), lambda n: (n, 0, 0, 0))),
        compiler_params=pltpu.CompilerParams(
            dimension_semantics=("parallel",),
            vmem_limit_bytes=VMEM_LIMIT),
    )(xp, w9, b.reshape(1, Cout).astype(jnp.float32))


def conv3_proj_fused(o2, x_in, w3, b3, ws, bs, *, stride, out_dtype=None):
    """Fused final kernel of a projection block; the stride subsample of the
    block input is done inside the kernel (no XLA strided gather)."""
    assert stride in (1, 2)
    N, Ho, Wo, planes = o2.shape
    _, H, W, Cin = x_in.shape
    Cout = w3.shape[1]
    out_dtype = out_dtype or o2.dtype

    if stride == 2:
        if W % 2:                             # keep the pairs view valid for odd W
            x_in = jnp.pad(x_in, ((0, 0), (0, 0), (0, 1), (0, 0)))
            W += 1
        xs = x_in.reshape(N, H, W // 2, 2 * Cin)
    else:
        xs = x_in
    _, Hs, Ws, Cs = xs.shape

    rg = _row_group(Ho, Wo)
    kernel = functools.partial(_proj_out_kernel, stride=stride, cin=Cin,
                               row_group=rg)
    return pl.pallas_call(
        kernel,
        out_shape=jax.ShapeDtypeStruct((N, Ho, Wo, Cout), out_dtype),
        grid_spec=pltpu.PrefetchScalarGridSpec(
            num_scalar_prefetch=0,
            grid=(N,),
            in_specs=[pl.BlockSpec((1, Ho, Wo, planes), lambda n: (n, 0, 0, 0)),
                      pl.BlockSpec((1, Hs, Ws, Cs), lambda n: (n, 0, 0, 0)),
                      pl.BlockSpec((planes, Cout), lambda n: (0, 0)),
                      pl.BlockSpec((1, Cout), lambda n: (0, 0)),
                      pl.BlockSpec((Cin, Cout), lambda n: (0, 0)),
                      pl.BlockSpec((1, Cout), lambda n: (0, 0))],
            out_specs=pl.BlockSpec((1, Ho, Wo, Cout), lambda n: (n, 0, 0, 0))),
        compiler_params=pltpu.CompilerParams(
            dimension_semantics=("parallel",),
            vmem_limit_bytes=VMEM_LIMIT),
    )(o2, xs, w3, b3.reshape(1, Cout).astype(jnp.float32),
      ws, bs.reshape(1, Cout).astype(jnp.float32))


# ---------------------------------------------------------------------------
# Network: Bottleneck block + full ResNet forward (NHWC end-to-end)
# ---------------------------------------------------------------------------
def bottleneck_block(x, bp):
    """One Bottleneck block (NHWC in/out, eval-mode BN folded into params)."""
    N, H, W, Cin = x.shape
    s = bp['stride']
    planes = bp['w1'].shape[1]
    Cout = bp['w3'].shape[1]

    # conv1 (1x1) + bn1 + relu
    o = conv1x1_block(x.reshape(N * H * W, Cin), bp['w1'], bp['b1'], relu=True)
    o = o.reshape(N, H, W, planes)
    # TODO(synk): optionally fuse conv1 into the 3x3 kernel (recompute halo rows)
    # to drop one HBM round trip of the widest intermediate per block.

    # conv2 (3x3, stride, pad=1) + bn2 + relu -- fused-tap, whole image per step
    o = conv3x3_bn(o, bp['w2'], bp['b2'], stride=s, relu=True)
    _, Ho, Wo, _ = o.shape

    # conv3 (1x1) + bn3 + shortcut + relu, single fused kernel
    if bp['ws'] is not None:
        y = conv3_proj_fused(o, x, bp['w3'], bp['b3'], bp['ws'], bp['bs'], stride=s)
    else:
        M = N * Ho * Wo
        y = conv1x1_block(o.reshape(M, planes), bp['w3'], bp['b3'],
                          residual=x.reshape(M, Cout))
        y = y.reshape(N, Ho, Wo, Cout)
    return y


def resnet_forward(x_nchw, p, compute_dtype=jnp.bfloat16):
    """Pallas ResNet forward: feature extraction + classification head."""
    # single layout change for the whole network; everything below stays NHWC
    x = jnp.transpose(x_nchw, (0, 2, 3, 1)).astype(compute_dtype)

    # stem: conv1 (3x3, s=1, pad=1) + bn1 + relu
    x = conv3x3_bn(x, p['stem_w'], p['stem_b'], stride=1, relu=True)

    # layer1..layer4
    for bp in p['blocks']:
        x = bottleneck_block(x, bp)

    # classify: adaptive_avg_pool2d((1,1)) + Linear + softmax.
    # The (N, C) x (C, classes) GEMM is tiny: plain XLA beats a padded pallas_call.
    feat = jnp.mean(x.astype(jnp.float32), axis=(1, 2))           # (N, C)
    logits = feat @ p['lin_w'] + p['lin_b']
    probs = jax.nn.softmax(logits, axis=-1)
    return probs, x


# ---------------------------------------------------------------------------
# Parameters: PyTorch-style raw params + Pallas-format folded params
# ---------------------------------------------------------------------------
def _bn_init(key, c):
    k1, k2, k3, k4 = jax.random.split(key, 4)
    gamma = jax.random.uniform(k1, (c,), jnp.float32, 0.5, 1.5)
    beta = jax.random.normal(k2, (c,), jnp.float32) * 0.1
    mean = jax.random.normal(k3, (c,), jnp.float32) * 0.1
    var = jax.random.uniform(k4, (c,), jnp.float32, 0.5, 1.5)
    return (gamma, beta, mean, var)


def _conv_init(key, cout, cin, k):
    fan_in = cin * k * k
    return jax.random.normal(key, (cout, cin, k, k), jnp.float32) * (2.0 / fan_in) ** 0.5


def make_resnet_params(key, *, a=0.25, num_blocks=(2, 1, 1, 1), in_channels=3,
                       num_classes=10):
    """PyTorch-layout (OIHW conv / BN running stats) params for ResNet(Bottleneck)."""
    base = int(a * 64)
    kit = iter(jax.random.split(key, 256))
    raw = {'conv1': _conv_init(next(kit), base, in_channels, 3),
           'bn1': _bn_init(next(kit), base),
           'blocks': []}
    in_planes = base
    for planes, nb, s0 in zip([base, 2 * base, 4 * base, 8 * base], num_blocks,
                              [1, 2, 2, 2]):
        for bi in range(nb):
            s = s0 if bi == 0 else 1
            out_planes = EXPANSION * planes
            blk = {'stride': s,
                   'w1': _conv_init(next(kit), planes, in_planes, 1),
                   'bn1': _bn_init(next(kit), planes),
                   'w2': _conv_init(next(kit), planes, planes, 3),
                   'bn2': _bn_init(next(kit), planes),
                   'w3': _conv_init(next(kit), out_planes, planes, 1),
                   'bn3': _bn_init(next(kit), out_planes)}
            if s != 1 or in_planes != out_planes:
                blk['ws'] = _conv_init(next(kit), out_planes, in_planes, 1)
                blk['bns'] = _bn_init(next(kit), out_planes)
            else:
                blk['ws'], blk['bns'] = None, None
            raw['blocks'].append(blk)
            in_planes = out_planes
    raw['lin_w'] = jax.random.normal(next(kit), (num_classes, in_planes),
                                     jnp.float32) * 0.01
    raw['lin_b'] = jax.random.normal(next(kit), (num_classes,), jnp.float32) * 0.01
    return raw


def _fold_bn(bn):
    g, b, m, v = bn
    scale = g / jnp.sqrt(v + EPS)
    return scale, b - m * scale


def fold_params(raw, dtype):
    """Fold eval-mode BN into the conv weights; produce matmul-layout weights."""
    def conv1x1(w, bn):
        scale, bias = _fold_bn(bn)
        return (w[:, :, 0, 0].T * scale[None, :]).astype(dtype), bias.astype(jnp.float32)

    def conv3x3(w, bn):
        scale, bias = _fold_bn(bn)
        cout, cin = w.shape[0], w.shape[1]
        cinp = _round_up(cin, 16)              # bf16 packs 2 rows/sublane -> pad to 16
        w9 = jnp.transpose(w, (2, 3, 1, 0)) * scale[None, None, None, :]
        w9 = jnp.pad(w9, ((0, 0), (0, 0), (0, cinp - cin), (0, 0)))
        return w9.reshape(9 * cinp, cout).astype(dtype), bias.astype(jnp.float32)

    p = {'blocks': []}
    p['stem_w'], p['stem_b'] = conv3x3(raw['conv1'], raw['bn1'])
    for blk in raw['blocks']:
        bp = {'stride': blk['stride']}
        bp['w1'], bp['b1'] = conv1x1(blk['w1'], blk['bn1'])
        bp['w2'], bp['b2'] = conv3x3(blk['w2'], blk['bn2'])
        bp['w3'], bp['b3'] = conv1x1(blk['w3'], blk['bn3'])
        if blk['ws'] is not None:
            bp['ws'], bp['bs'] = conv1x1(blk['ws'], blk['bns'])
        else:
            bp['ws'], bp['bs'] = None, None
        p['blocks'].append(bp)
    p['lin_w'] = raw['lin_w'].T.astype(jnp.float32)
    p['lin_b'] = raw['lin_b'].astype(jnp.float32)
    return p


# ---------------------------------------------------------------------------
# Plain-JAX reference (NCHW, fp32, eval-mode BN) for verification
# ---------------------------------------------------------------------------
def reference_forward(x, raw):
    P = jax.lax.Precision.HIGHEST

    def conv(h, w, s=1, p=0):
        return jax.lax.conv_general_dilated(
            h, w, (s, s), [(p, p), (p, p)],
            dimension_numbers=("NCHW", "OIHW", "NCHW"), precision=P)

    def bn(h, prm):
        g, b, m, v = prm
        sh = (1, -1, 1, 1)
        return (h - m.reshape(sh)) / jnp.sqrt(v.reshape(sh) + EPS) * g.reshape(sh) \
            + b.reshape(sh)

    out = jax.nn.relu(bn(conv(x, raw['conv1'], 1, 1), raw['bn1']))
    for blk in raw['blocks']:
        o = jax.nn.relu(bn(conv(out, blk['w1']), blk['bn1']))
        o = jax.nn.relu(bn(conv(o, blk['w2'], s=blk['stride'], p=1), blk['bn2']))
        o = bn(conv(o, blk['w3']), blk['bn3'])
        sc = (bn(conv(out, blk['ws'], s=blk['stride']), blk['bns'])
              if blk['ws'] is not None else out)
        out = jax.nn.relu(o + sc)
    feat = jnp.mean(out, axis=(2, 3))
    logits = jnp.matmul(feat, raw['lin_w'].T, precision=P) + raw['lin_b']
    return jax.nn.softmax(logits, axis=1), out


# ---------------------------------------------------------------------------
if __name__ == "__main__":
    key = jax.random.PRNGKey(0)
    k_x, k_p = jax.random.split(key)

    N, C, H, W = 2, 3, 16, 16
    num_classes = 10
    x = jax.random.normal(k_x, (N, C, H, W), jnp.float32)
    raw = make_resnet_params(k_p, a=0.25, num_blocks=(2, 1, 1, 1),
                             in_channels=C, num_classes=num_classes)

    ref_probs, ref_feat = reference_forward(x, raw)
    ref_probs = jax.block_until_ready(ref_probs)
    ref_feat_nhwc = jnp.transpose(ref_feat, (0, 2, 3, 1))

    def rel_l2(a, b):
        a = a.astype(jnp.float32)
        b = b.astype(jnp.float32)
        return float(jnp.linalg.norm((a - b).ravel()) /
                     (jnp.linalg.norm(b.ravel()) + 1e-12))

    # 1) fp32 Pallas path: structural/logic check.  Tolerance allows for the
    #    (possibly reduced-precision) default fp32 matmul lowering on the MXU.
    p32 = fold_params(raw, jnp.float32)
    probs32, feat32 = resnet_forward(x, p32, compute_dtype=jnp.float32)
    probs32 = jax.block_until_ready(probs32)
    assert probs32.shape == (N, num_classes)
    assert feat32.shape == ref_feat_nhwc.shape
    e_f = rel_l2(feat32, ref_feat_nhwc)
    e_p = float(jnp.max(jnp.abs(probs32 - ref_probs)))
    assert e_f < 0.05, f"fp32 feature rel-L2 err {e_f}"
    assert e_p < 0.05, f"fp32 prob abs err {e_p}"

    # 2) bf16 Pallas path (the performance configuration): loose numeric check.
    pbf16 = fold_params(raw, jnp.bfloat16)
    probs_bf, feat_bf = resnet_forward(x, pbf16, compute_dtype=jnp.bfloat16)
    probs_bf = jax.block_until_ready(probs_bf)
    assert probs_bf.shape == (N, num_classes)
    e_f = rel_l2(feat_bf, ref_feat_nhwc)
    e_p = float(jnp.max(jnp.abs(probs_bf - ref_probs)))
    assert e_f < 0.15, f"bf16 feature rel-L2 err {e_f}"
    assert e_p < 0.10, f"bf16 prob abs err {e_p}"

    print("KERNEL_OK")
</pallas_src>

<mosaic_0001>
module attributes {stable_mosaic.version = 11 : i64} {
  func.func @_conv3x3_kernel(%arg0: i32, %arg1: memref<1x18x18x16xf32, #tpu.memory_space<vmem>>, %arg2: memref<144x16xf32, #tpu.memory_space<vmem>>, %arg3: memref<1x16xf32, #tpu.memory_space<vmem>>, %arg4: memref<1x16x16x16xf32, #tpu.memory_space<vmem>>) attributes {dimension_semantics = [#tpu.dimension_semantics<parallel>], iteration_bounds = array<i64: 2>, scalar_prefetch = 0 : i64, scratch_operands = 0 : i64, tpu.core_type = #tpu.core_type<tc>, window_params = [{transform_indices = @transform_0, window_bounds = array<i64: 1, 18, 18, 16>}, {pipeline_mode = #tpu.pipeline_mode<synchronous>, transform_indices = @transform_1, window_bounds = array<i64: 144, 16>}, {pipeline_mode = #tpu.pipeline_mode<synchronous>, transform_indices = @transform_2, window_bounds = array<i64: 1, 16>}, {transform_indices = @transform_3, window_bounds = array<i64: 1, 16, 16, 16>}]} {
    %c0 = arith.constant 0 : index
    %c0_0 = arith.constant 0 : index
    %0 = vector.load %arg2[%c0, %c0_0] : memref<144x16xf32, #tpu.memory_space<vmem>>, vector<144x16xf32>
    %c0_1 = arith.constant 0 : index
    %c0_2 = arith.constant 0 : index
    %1 = vector.load %arg3[%c0_1, %c0_2] : memref<1x16xf32, #tpu.memory_space<vmem>>, vector<1x16xf32>
    %c0_3 = arith.constant 0 : index
    %c0_4 = arith.constant 0 : index
    %c0_5 = arith.constant 0 : index
    %c0_6 = arith.constant 0 : index
    %2 = vector.load %arg1[%c0_3, %c0_4, %c0_5, %c0_6] : memref<1x18x18x16xf32, #tpu.memory_space<vmem>>, vector<1x1x16x16xf32>
    %3 = vector.shape_cast %2 : vector<1x1x16x16xf32> to vector<16x16xf32>
    %c0_7 = arith.constant 0 : index
    %c1 = arith.constant 1 : index
    %c0_8 = arith.constant 0 : index
    %c0_9 = arith.constant 0 : index
    %4 = vector.load %arg1[%c0_7, %c1, %c0_8, %c0_9] : memref<1x18x18x16xf32, #tpu.memory_space<vmem>>, vector<1x1x16x16xf32>
    %5 = vector.shape_cast %4 : vector<1x1x16x16xf32> to vector<16x16xf32>
    %c0_10 = arith.constant 0 : index
    %c2 = arith.constant 2 : index
    %c0_11 = arith.constant 0 : index
    %c0_12 = arith.constant 0 : index
    %6 = vector.load %arg1[%c0_10, %c2, %c0_11, %c0_12] : memref<1x18x18x16xf32, #tpu.memory_space<vmem>>, vector<1x1x16x16xf32>
    %7 = vector.shape_cast %6 : vector<1x1x16x16xf32> to vector<16x16xf32>
    %c0_13 = arith.constant 0 : index
    %c3 = arith.constant 3 : index
    %c0_14 = arith.constant 0 : index
    %c0_15 = arith.constant 0 : index
    %8 = vector.load %arg1[%c0_13, %c3, %c0_14, %c0_15] : memref<1x18x18x16xf32, #tpu.memory_space<vmem>>, vector<1x1x16x16xf32>
    %9 = vector.shape_cast %8 : vector<1x1x16x16xf32> to vector<16x16xf32>
    %c0_16 = arith.constant 0 : index
    %c4 = arith.constant 4 : index
    %c0_17 = arith.constant 0 : index
    %c0_18 = arith.constant 0 : index
    %10 = vector.load %arg1[%c0_16, %c4, %c0_17, %c0_18] : memref<1x18x18x16xf32, #tpu.memory_space<vmem>>, vector<1x1x16x16xf32>
    %11 = vector.shape_cast %10 : vector<1x1x16x16xf32> to vector<16x16xf32>
    %c0_19 = arith.constant 0 : index
    %c5 = arith.constant 5 : index
    %c0_20 = arith.constant 0 : index
    %c0_21 = arith.constant 0 : index
    %12 = vector.load %arg1[%c0_19, %c5, %c0_20, %c0_21] : memref<1x18x18x16xf32, #tpu.memory_space<vmem>>, vector<1x1x16x16xf32>
    %13 = vector.shape_cast %12 : vector<1x1x16x16xf32> to vector<16x16xf32>
    %c0_22 = arith.constant 0 : index
    %c6 = arith.constant 6 : index
    %c0_23 = arith.constant 0 : index
    %c0_24 = arith.constant 0 : index
    %14 = vector.load %arg1[%c0_22, %c6, %c0_23, %c0_24] : memref<1x18x18x16xf32, #tpu.memory_space<vmem>>, vector<1x1x16x16xf32>
    %15 = vector.shape_cast %14 : vector<1x1x16x16xf32> to vector<16x16xf32>
    %c0_25 = arith.constant 0 : index
    %c7 = arith.constant 7 : index
    %c0_26 = arith.constant 0 : index
    %c0_27 = arith.constant 0 : index
    %16 = vector.load %arg1[%c0_25, %c7, %c0_26, %c0_27] : memref<1x18x18x16xf32, #tpu.memory_space<vmem>>, vector<1x1x16x16xf32>
    %17 = vector.shape_cast %16 : vector<1x1x16x16xf32> to vector<16x16xf32>
    %18 = tpu.concatenate %3, %5, %7, %9, %11, %13, %15, %17 in 0 : vector<16x16xf32>, vector<16x16xf32>, vector<16x16xf32>, vector<16x16xf32>, vector<16x16xf32>, vector<16x16xf32>, vector<16x16xf32>, vector<16x16xf32> -> vector<128x16xf32>
    %c0_28 = arith.constant 0 : index
    %c0_29 = arith.constant 0 : index
    %c1_30 = arith.constant 1 : index
    %c0_31 = arith.constant 0 : index
    %19 = vector.load %arg1[%c0_28, %c0_29, %c1_30, %c0_31] : memref<1x18x18x16xf32, #tpu.memory_space<vmem>>, vector<1x1x16x16xf32>
    %20 = vector.shape_cast %19 : vector<1x1x16x16xf32> to vector<16x16xf32>
    %c0_32 = arith.constant 0 : index
    %c1_33 = arith.constant 1 : index
    %c1_34 = arith.constant 1 : index
    %c0_35 = arith.constant 0 : index
    %21 = vector.load %arg1[%c0_32, %c1_33, %c1_34, %c0_35] : memref<1x18x18x16xf32, #tpu.memory_space<vmem>>, vector<1x1x16x16xf32>
    %22 = vector.shape_cast %21 : vector<1x1x16x16xf32> to vector<16x16xf32>
    %c0_36 = arith.constant 0 : index
    %c2_37 = arith.constant 2 : index
    %c1_38 = arith.constant 1 : index
    %c0_39 = arith.constant 0 : index
    %23 = vector.load %arg1[%c0_36, %c2_37, %c1_38, %c0_39] : memref<1x18x18x16xf32, #tpu.memory_space<vmem>>, vector<1x1x16x16xf32>
    %24 = vector.shape_cast %23 : vector<1x1x16x16xf32> to vector<16x16xf32>
    %c0_40 = arith.constant 0 : index
    %c3_41 = arith.constant 3 : index
    %c1_42 = arith.constant 1 : index
    %c0_43 = arith.constant 0 : index
    %25 = vector.load %arg1[%c0_40, %c3_41, %c1_42, %c0_43] : memref<1x18x18x16xf32, #tpu.memory_space<vmem>>, vector<1x1x16x16xf32>
    %26 = vector.shape_cast %25 : vector<1x1x16x16xf32> to vector<16x16xf32>
    %c0_44 = arith.constant 0 : index
    %c4_45 = arith.constant 4 : index
    %c1_46 = arith.constant 1 : index
    %c0_47 = arith.constant 0 : index
    %27 = vector.load %arg1[%c0_44, %c4_45, %c1_46, %c0_47] : memref<1x18x18x16xf32, #tpu.memory_space<vmem>>, vector<1x1x16x16xf32>
    %28 = vector.shape_cast %27 : vector<1x1x16x16xf32> to vector<16x16xf32>
    %c0_48 = arith.constant 0 : index
    %c5_49 = arith.constant 5 : index
    %c1_50 = arith.constant 1 : index
    %c0_51 = arith.constant 0 : index
    %29 = vector.load %arg1[%c0_48, %c5_49, %c1_50, %c0_51] : memref<1x18x18x16xf32, #tpu.memory_space<vmem>>, vector<1x1x16x16xf32>
    %30 = vector.shape_cast %29 : vector<1x1x16x16xf32> to vector<16x16xf32>
    %c0_52 = arith.constant 0 : index
    %c6_53 = arith.constant 6 : index
    %c1_54 = arith.constant 1 : index
    %c0_55 = arith.constant 0 : index
    %31 = vector.load %arg1[%c0_52, %c6_53, %c1_54, %c0_55] : memref<1x18x18x16xf32, #tpu.memory_space<vmem>>, vector<1x1x16x16xf32>
    %32 = vector.shape_cast %31 : vector<1x1x16x16xf32> to vector<16x16xf32>
    %c0_56 = arith.constant 0 : index
    %c7_57 = arith.constant 7 : index
    %c1_58 = arith.constant 1 : index
    %c0_59 = arith.constant 0 : index
    %33 = vector.load %arg1[%c0_56, %c7_57, %c1_58, %c0_59] : memref<1x18x18x16xf32, #tpu.memory_space<vmem>>, vector<1x1x16x16xf32>
    %34 = vector.shape_cast %33 : vector<1x1x16x16xf32> to vector<16x16xf32>
    %35 = tpu.concatenate %20, %22, %24, %26, %28, %30, %32, %34 in 0 : vector<16x16xf32>, vector<16x16xf32>, vector<16x16xf32>, vector<16x16xf32>, vector<16x16xf32>, vector<16x16xf32>, vector<16x16xf32>, vector<16x16xf32> -> vector<128x16xf32>
    %c0_60 = arith.constant 0 : index
    %c0_61 = arith.constant 0 : index
    %c2_62 = arith.constant 2 : index
    %c0_63 = arith.constant 0 : index
    %36 = vector.load %arg1[%c0_60, %c0_61, %c2_62, %c0_63] : memref<1x18x18x16xf32, #tpu.memory_space<vmem>>, vector<1x1x16x16xf32>
    %37 = vector.shape_cast %36 : vector<1x1x16x16xf32> to vector<16x16xf32>
    %c0_64 = arith.constant 0 : index
    %c1_65 = arith.constant 1 : index
    %c2_66 = arith.constant 2 : index
    %c0_67 = arith.constant 0 : index
    %38 = vector.load %arg1[%c0_64, %c1_65, %c2_66, %c0_67] : memref<1x18x18x16xf32, #tpu.memory_space<vmem>>, vector<1x1x16x16xf32>
    %39 = vector.shape_cast %38 : vector<1x1x16x16xf32> to vector<16x16xf32>
    %c0_68 = arith.constant 0 : index
    %c2_69 = arith.constant 2 : index
    %c2_70 = arith.constant 2 : index
    %c0_71 = arith.constant 0 : index
    %40 = vector.load %arg1[%c0_68, %c2_69, %c2_70, %c0_71] : memref<1x18x18x16xf32, #tpu.memory_space<vmem>>, vector<1x1x16x16xf32>
    %41 = vector.shape_cast %40 : vector<1x1x16x16xf32> to vector<16x16xf32>
    %c0_72 = arith.constant 0 : index
    %c3_73 = arith.constant 3 : index
    %c2_74 = arith.constant 2 : index
    %c0_75 = arith.constant 0 : index
    %42 = vector.load %arg1[%c0_72, %c3_73, %c2_74, %c0_75] : memref<1x18x18x16xf32, #tpu.memory_space<vmem>>, vector<1x1x16x16xf32>
    %43 = vector.shape_cast %42 : vector<1x1x16x16xf32> to vector<16x16xf32>
    %c0_76 = arith.constant 0 : index
    %c4_77 = arith.constant 4 : index
    %c2_78 = arith.constant 2 : index
    %c0_79 = arith.constant 0 : index
    %44 = vector.load %arg1[%c0_76, %c4_77, %c2_78, %c0_79] : memref<1x18x18x16xf32, #tpu.memory_space<vmem>>, vector<1x1x16x16xf32>
    %45 = vector.shape_cast %44 : vector<1x1x16x16xf32> to vector<16x16xf32>
    %c0_80 = arith.constant 0 : index
    %c5_81 = arith.constant 5 : index
    %c2_82 = arith.constant 2 : index
    %c0_83 = arith.constant 0 : index
    %46 = vector.load %arg1[%c0_80, %c5_81, %c2_82, %c0_83] : memref<1x18x18x16xf32, #tpu.memory_space<vmem>>, vector<1x1x16x16xf32>
    %47 = vector.shape_cast %46 : vector<1x1x16x16xf32> to vector<16x16xf32>
    %c0_84 = arith.constant 0 : index
    %c6_85 = arith.constant 6 : index
    %c2_86 = arith.constant 2 : index
    %c0_87 = arith.constant 0 : index
    %48 = vector.load %arg1[%c0_84, %c6_85, %c2_86, %c0_87] : memref<1x18x18x16xf32, #tpu.memory_space<vmem>>, vector<1x1x16x16xf32>
    %49 = vector.shape_cast %48 : vector<1x1x16x16xf32> to vector<16x16xf32>
    %c0_88 = arith.constant 0 : index
    %c7_89 = arith.constant 7 : index
    %c2_90 = arith.constant 2 : index
    %c0_91 = arith.constant 0 : index
    %50 = vector.load %arg1[%c0_88, %c7_89, %c2_90, %c0_91] : memref<1x18x18x16xf32, #tpu.memory_space<vmem>>, vector<1x1x16x16xf32>
    %51 = vector.shape_cast %50 : vector<1x1x16x16xf32> to vector<16x16xf32>
    %52 = tpu.concatenate %37, %39, %41, %43, %45, %47, %49, %51 in 0 : vector<16x16xf32>, vector<16x16xf32>, vector<16x16xf32>, vector<16x16xf32>, vector<16x16xf32>, vector<16x16xf32>, vector<16x16xf32>, vector<16x16xf32> -> vector<128x16xf32>
    %c0_92 = arith.constant 0 : index
    %c1_93 = arith.constant 1 : index
    %c0_94 = arith.constant 0 : index
    %c0_95 = arith.constant 0 : index
    %53 = vector.load %arg1[%c0_92, %c1_93, %c0_94, %c0_95] : memref<1x18x18x16xf32, #tpu.memory_space<vmem>>, vector<1x1x16x16xf32>
    %54 = vector.shape_cast %53 : vector<1x1x16x16xf32> to vector<16x16xf32>
    %c0_96 = arith.constant 0 : index
    %c2_97 = arith.constant 2 : index
    %c0_98 = arith.constant 0 : index
    %c0_99 = arith.constant 0 : index
    %55 = vector.load %arg1[%c0_96, %c2_97, %c0_98, %c0_99] : memref<1x18x18x16xf32, #tpu.memory_space<vmem>>, vector<1x1x16x16xf32>
    %56 = vector.shape_cast %55 : vector<1x1x16x16xf32> to vector<16x16xf32>
    %c0_100 = arith.constant 0 : index
    %c3_101 = arith.constant 3 : index
    %c0_102 = arith.constant 0 : index
    %c0_103 = arith.constant 0 : index
    %57 = vector.load %arg1[%c0_100, %c3_101, %c0_102, %c0_103] : memref<1x18x18x16xf32, #tpu.memory_space<vmem>>, vector<1x1x16x16xf32>
    %58 = vector.shape_cast %57 : vector<1x1x16x16xf32> to vector<16x16xf32>
    %c0_104 = arith.constant 0 : index
    %c4_105 = arith.constant 4 : index
    %c0_106 = arith.constant 0 : index
    %c0_107 = arith.constant 0 : index
    %59 = vector.load %arg1[%c0_104, %c4_105, %c0_106, %c0_107] : memref<1x18x18x16xf32, #tpu.memory_space<vmem>>, vector<1x1x16x16xf32>
    %60 = vector.shape_cast %59 : vector<1x1x16x16xf32> to vector<16x16xf32>
    %c0_108 = arith.constant 0 : index
    %c5_109 = arith.constant 5 : index
    %c0_110 = arith.constant 0 : index
    %c0_111 = arith.constant 0 : index
    %61 = vector.load %arg1[%c0_108, %c5_109, %c0_110, %c0_111] : memref<1x18x18x16xf32, #tpu.memory_space<vmem>>, vector<1x1x16x16xf32>
    %62 = vector.shape_cast %61 : vector<1x1x16x16xf32> to vector<16x16xf32>
    %c0_112 = arith.constant 0 : index
    %c6_113 = arith.constant 6 : index
    %c0_114 = arith.constant 0 : index
    %c0_115 = arith.constant 0 : index
    %63 = vector.load %arg1[%c0_112, %c6_113, %c0_114, %c0_115] : memref<1x18x18x16xf32, #tpu.memory_space<vmem>>, vector<1x1x16x16xf32>
    %64 = vector.shape_cast %63 : vector<1x1x16x16xf32> to vector<16x16xf32>
    %c0_116 = arith.constant 0 : index
    %c7_117 = arith.constant 7 : index
    %c0_118 = arith.constant 0 : index
    %c0_119 = arith.constant 0 : index
    %65 = vector.load %arg1[%c0_116, %c7_117, %c0_118, %c0_119] : memref<1x18x18x16xf32, #tpu.memory_space<vmem>>, vector<1x1x16x16xf32>
    %66 = vector.shape_cast %65 : vector<1x1x16x16xf32> to vector<16x16xf32>
    %c0_120 = arith.constant 0 : index
    %c8 = arith.constant 8 : index
    %c0_121 = arith.constant 0 : index
    %c0_122 = arith.constant 0 : index
    %67 = vector.load %arg1[%c0_120, %c8, %c0_121, %c0_122] : memref<1x18x18x16xf32, #tpu.memory_space<vmem>>, vector<1x1x16x16xf32>
    %68 = vector.shape_cast %67 : vector<1x1x16x16xf32> to vector<16x16xf32>
    %69 = tpu.concatenate %54, %56, %58, %60, %62, %64, %66, %68 in 0 : vector<16x16xf32>, vector<16x16xf32>, vector<16x16xf32>, vector<16x16xf32>, vector<16x16xf32>, vector<16x16xf32>, vector<16x16xf32>, vector<16x16xf32> -> vector<128x16xf32>
    %c0_123 = arith.constant 0 : index
    %c1_124 = arith.constant 1 : index
    %c1_125 = arith.constant 1 : index
    %c0_126 = arith.constant 0 : index
    %70 = vector.load %arg1[%c0_123, %c1_124, %c1_125, %c0_126] : memref<1x18x18x16xf32, #tpu.memory_space<vmem>>, vector<1x1x16x16xf32>
    %71 = vector.shape_cast %70 : vector<1x1x16x16xf32> to vector<16x16xf32>
    %c0_127 = arith.constant 0 : index
    %c2_128 = arith.constant 2 : index
    %c1_129 = arith.constant 1 : index
    %c0_130 = arith.constant 0 : index
    %72 = vector.load %arg1[%c0_127, %c2_128, %c1_129, %c0_130] : memref<1x18x18x16xf32, #tpu.memory_space<vmem>>, vector<1x1x16x16xf32>
    %73 = vector.shape_cast %72 : vector<1x1x16x16xf32> to vector<16x16xf32>
    %c0_131 = arith.constant 0 : index
    %c3_132 = arith.constant 3 : index
    %c1_133 = arith.constant 1 : index
    %c0_134 = arith.constant 0 : index
    %74 = vector.load %arg1[%c0_131, %c3_132, %c1_133, %c0_134] : memref<1x18x18x16xf32, #tpu.memory_space<vmem>>, vector<1x1x16x16xf32>
    %75 = vector.shape_cast %74 : vector<1x1x16x16xf32> to vector<16x16xf32>
    %c0_135 = arith.constant 0 : index
    %c4_136 = arith.constant 4 : index
    %c1_137 = arith.constant 1 : index
    %c0_138 = arith.constant 0 : index
    %76 = vector.load %arg1[%c0_135, %c4_136, %c1_137, %c0_138] : memref<1x18x18x16xf32, #tpu.memory_space<vmem>>, vector<1x1x16x16xf32>
    %77 = vector.shape_cast %76 : vector<1x1x16x16xf32> to vector<16x16xf32>
    %c0_139 = arith.constant 0 : index
    %c5_140 = arith.constant 5 : index
    %c1_141 = arith.constant 1 : index
    %c0_142 = arith.constant 0 : index
    %78 = vector.load %arg1[%c0_139, %c5_140, %c1_141, %c0_142] : memref<1x18x18x16xf32, #tpu.memory_space<vmem>>, vector<1x1x16x16xf32>
    %79 = vector.shape_cast %78 : vector<1x1x16x16xf32> to vector<16x16xf32>
    %c0_143 = arith.constant 0 : index
    %c6_144 = arith.constant 6 : index
    %c1_145 = arith.constant 1 : index
    %c0_146 = arith.constant 0 : index
    %80 = vector.load %arg1[%c0_143, %c6_144, %c1_145, %c0_146] : memref<1x18x18x16xf32, #tpu.memory_space<vmem>>, vector<1x1x16x16xf32>
    %81 = vector.shape_cast %80 : vector<1x1x16x16xf32> to vector<16x16xf32>
    %c0_147 = arith.constant 0 : index
    %c7_148 = arith.constant 7 : index
    %c1_149 = arith.constant 1 : index
    %c0_150 = arith.constant 0 : index
    %82 = vector.load %arg1[%c0_147, %c7_148, %c1_149, %c0_150] : memref<1x18x18x16xf32, #tpu.memory_space<vmem>>, vector<1x1x16x16xf32>
    %83 = vector.shape_cast %82 : vector<1x1x16x16xf32> to vector<16x16xf32>
    %c0_151 = arith.constant 0 : index
    %c8_152 = arith.constant 8 : index
    %c1_153 = arith.constant 1 : index
    %c0_154 = arith.constant 0 : index
    %84 = vector.load %arg1[%c0_151, %c8_152, %c1_153, %c0_154] : memref<1x18x18x16xf32, #tpu.memory_space<vmem>>, vector<1x1x16x16xf32>
    %85 = vector.shape_cast %84 : vector<1x1x16x16xf32> to vector<16x16xf32>
    %86 = tpu.concatenate %71, %73, %75, %77, %79, %81, %83, %85 in 0 : vector<16x16xf32>, vector<16x16xf32>, vector<16x16xf32>, vector<16x16xf32>, vector<16x16xf32>, vector<16x16xf32>, vector<16x16xf32>, vector<16x16xf32> -> vector<128x16xf32>
    %c0_155 = arith.constant 0 : index
    %c1_156 = arith.constant 1 : index
    %c2_157 = arith.constant 2 : index
    %c0_158 = arith.constant 0 : index
    %87 = vector.load %arg1[%c0_155, %c1_156, %c2_157, %c0_158] : memref<1x18x18x16xf32, #tpu.memory_space<vmem>>, vector<1x1x16x16xf32>
    %88 = vector.shape_cast %87 : vector<1x1x16x16xf32> to vector<16x16xf32>
    %c0_159 = arith.constant 0 : index
    %c2_160 = arith.constant 2 : index
    %c2_161 = arith.constant 2 : index
    %c0_162 = arith.constant 0 : index
    %89 = vector.load %arg1[%c0_159, %c2_160, %c2_161, %c0_162] : memref<1x18x18x16xf32, #tpu.memory_space<vmem>>, vector<1x1x16x16xf32>
    %90 = vector.shape_cast %89 : vector<1x1x16x16xf32> to vector<16x16xf32>
    %c0_163 = arith.constant 0 : index
    %c3_164 = arith.constant 3 : index
    %c2_165 = arith.constant 2 : index
    %c0_166 = arith.constant 0 : index
    %91 = vector.load %arg1[%c0_163, %c3_164, %c2_165, %c0_166] : memref<1x18x18x16xf32, #tpu.memory_space<vmem>>, vector<1x1x16x16xf32>
    %92 = vector.shape_cast %91 : vector<1x1x16x16xf32> to vector<16x16xf32>
    %c0_167 = arith.constant 0 : index
    %c4_168 = arith.constant 4 : index
    %c2_169 = arith.constant 2 : index
    %c0_170 = arith.constant 0 : index
    %93 = vector.load %arg1[%c0_167, %c4_168, %c2_169, %c0_170] : memref<1x18x18x16xf32, #tpu.memory_space<vmem>>, vector<1x1x16x16xf32>
    %94 = vector.shape_cast %93 : vector<1x1x16x16xf32> to vector<16x16xf32>
    %c0_171 = arith.constant 0 : index
    %c5_172 = arith.constant 5 : index
    %c2_173 = arith.constant 2 : index
    %c0_174 = arith.constant 0 : index
    %95 = vector.load %arg1[%c0_171, %c5_172, %c2_173, %c0_174] : memref<1x18x18x16xf32, #tpu.memory_space<vmem>>, vector<1x1x16x16xf32>
    %96 = vector.shape_cast %95 : vector<1x1x16x16xf32> to vector<16x16xf32>
    %c0_175 = arith.constant 0 : index
    %c6_176 = arith.constant 6 : index
    %c2_177 = arith.constant 2 : index
    %c0_178 = arith.constant 0 : index
    %97 = vector.load %arg1[%c0_175, %c6_176, %c2_177, %c0_178] : memref<1x18x18x16xf32, #tpu.memory_space<vmem>>, vector<1x1x16x16xf32>
    %98 = vector.shape_cast %97 : vector<1x1x16x16xf32> to vector<16x16xf32>
    %c0_179 = arith.constant 0 : index
    %c7_180 = arith.constant 7 : index
    %c2_181 = arith.constant 2 : index
    %c0_182 = arith.constant 0 : index
    %99 = vector.load %arg1[%c0_179, %c7_180, %c2_181, %c0_182] : memref<1x18x18x16xf32, #tpu.memory_space<vmem>>, vector<1x1x16x16xf32>
    %100 = vector.shape_cast %99 : vector<1x1x16x16xf32> to vector<16x16xf32>
    %c0_183 = arith.constant 0 : index
    %c8_184 = arith.constant 8 : index
    %c2_185 = arith.constant 2 : index
    %c0_186 = arith.constant 0 : index
    %101 = vector.load %arg1[%c0_183, %c8_184, %c2_185, %c0_186] : memref<1x18x18x16xf32, #tpu.memory_space<vmem>>, vector<1x1x16x16xf32>
    %102 = vector.shape_cast %101 : vector<1x1x16x16xf32> to vector<16x16xf32>
    %103 = tpu.concatenate %88, %90, %92, %94, %96, %98, %100, %102 in 0 : vector<16x16xf32>, vector<16x16xf32>, vector<16x16xf32>, vector<16x16xf32>, vector<16x16xf32>, vector<16x16xf32>, vector<16x16xf32>, vector<16x16xf32> -> vector<128x16xf32>
    %c0_187 = arith.constant 0 : index
    %c2_188 = arith.constant 2 : index
    %c0_189 = arith.constant 0 : index
    %c0_190 = arith.constant 0 : index
    %104 = vector.load %arg1[%c0_187, %c2_188, %c0_189, %c0_190] : memref<1x18x18x16xf32, #tpu.memory_space<vmem>>, vector<1x1x16x16xf32>
    %105 = vector.shape_cast %104 : vector<1x1x16x16xf32> to vector<16x16xf32>
    %c0_191 = arith.constant 0 : index
    %c3_192 = arith.constant 3 : index
    %c0_193 = arith.constant 0 : index
    %c0_194 = arith.constant 0 : index
    %106 = vector.load %arg1[%c0_191, %c3_192, %c0_193, %c0_194] : memref<1x18x18x16xf32, #tpu.memory_space<vmem>>, vector<1x1x16x16xf32>
    %107 = vector.shape_cast %106 : vector<1x1x16x16xf32> to vector<16x16xf32>
    %c0_195 = arith.constant 0 : index
    %c4_196 = arith.constant 4 : index
    %c0_197 = arith.constant 0 : index
    %c0_198 = arith.constant 0 : index
    %108 = vector.load %arg1[%c0_195, %c4_196, %c0_197, %c0_198] : memref<1x18x18x16xf32, #tpu.memory_space<vmem>>, vector<1x1x16x16xf32>
    %109 = vector.shape_cast %108 : vector<1x1x16x16xf32> to vector<16x16xf32>
    %c0_199 = arith.constant 0 : index
    %c5_200 = arith.constant 5 : index
    %c0_201 = arith.constant 0 : index
    %c0_202 = arith.constant 0 : index
    %110 = vector.load %arg1[%c0_199, %c5_200, %c0_201, %c0_202] : memref<1x18x18x16xf32, #tpu.memory_space<vmem>>, vector<1x1x16x16xf32>
    %111 = vector.shape_cast %110 : vector<1x1x16x16xf32> to vector<16x16xf32>
    %c0_203 = arith.constant 0 : index
    %c6_204 = arith.constant 6 : index
    %c0_205 = arith.constant 0 : index
    %c0_206 = arith.constant 0 : index
    %112 = vector.load %arg1[%c0_203, %c6_204, %c0_205, %c0_206] : memref<1x18x18x16xf32, #tpu.memory_space<vmem>>, vector<1x1x16x16xf32>
    %113 = vector.shape_cast %112 : vector<1x1x16x16xf32> to vector<16x16xf32>
    %c0_207 = arith.constant 0 : index
    %c7_208 = arith.constant 7 : index
    %c0_209 = arith.constant 0 : index
    %c0_210 = arith.constant 0 : index
    %114 = vector.load %arg1[%c0_207, %c7_208, %c0_209, %c0_210] : memref<1x18x18x16xf32, #tpu.memory_space<vmem>>, vector<1x1x16x16xf32>
    %115 = vector.shape_cast %114 : vector<1x1x16x16xf32> to vector<16x16xf32>
    %c0_211 = arith.constant 0 : index
    %c8_212 = arith.constant 8 : index
    %c0_213 = arith.constant 0 : index
    %c0_214 = arith.constant 0 : index
    %116 = vector.load %arg1[%c0_211, %c8_212, %c0_213, %c0_214] : memref<1x18x18x16xf32, #tpu.memory_space<vmem>>, vector<1x1x16x16xf32>
    %117 = vector.shape_cast %116 : vector<1x1x16x16xf32> to vector<16x16xf32>
    %c0_215 = arith.constant 0 : index
    %c9 = arith.constant 9 : index
    %c0_216 = arith.constant 0 : index
    %c0_217 = arith.constant 0 : index
    %118 = vector.load %arg1[%c0_215, %c9, %c0_216, %c0_217] : memref<1x18x18x16xf32, #tpu.memory_space<vmem>>, vector<1x1x16x16xf32>
    %119 = vector.shape_cast %118 : vector<1x1x16x16xf32> to vector<16x16xf32>
    %120 = tpu.concatenate %105, %107, %109, %111, %113, %115, %117, %119 in 0 : vector<16x16xf32>, vector<16x16xf32>, vector<16x16xf32>, vector<16x16xf32>, vector<16x16xf32>, vector<16x16xf32>, vector<16x16xf32>, vector<16x16xf32> -> vector<128x16xf32>
    %c0_218 = arith.constant 0 : index
    %c2_219 = arith.constant 2 : index
    %c1_220 = arith.constant 1 : index
    %c0_221 = arith.constant 0 : index
    %121 = vector.load %arg1[%c0_218, %c2_219, %c1_220, %c0_221] : memref<1x18x18x16xf32, #tpu.memory_space<vmem>>, vector<1x1x16x16xf32>
    %122 = vector.shape_cast %121 : vector<1x1x16x16xf32> to vector<16x16xf32>
    %c0_222 = arith.constant 0 : index
    %c3_223 = arith.constant 3 : index
    %c1_224 = arith.constant 1 : index
    %c0_225 = arith.constant 0 : index
    %123 = vector.load %arg1[%c0_222, %c3_223, %c1_224, %c0_225] : memref<1x18x18x16xf32, #tpu.memory_space<vmem>>, vector<1x1x16x16xf32>
    %124 = vector.shape_cast %123 : vector<1x1x16x16xf32> to vector<16x16xf32>
    %c0_226 = arith.constant 0 : index
    %c4_227 = arith.constant 4 : index
    %c1_228 = arith.constant 1 : index
    %c0_229 = arith.constant 0 : index
    %125 = vector.load %arg1[%c0_226, %c4_227, %c1_228, %c0_229] : memref<1x18x18x16xf32, #tpu.memory_space<vmem>>, vector<1x1x16x16xf32>
    %126 = vector.shape_cast %125 : vector<1x1x16x16xf32> to vector<16x16xf32>
    %c0_230 = arith.constant 0 : index
    %c5_231 = arith.constant 5 : index
    %c1_232 = arith.constant 1 : index
    %c0_233 = arith.constant 0 : index
    %127 = vector.load %arg1[%c0_230, %c5_231, %c1_232, %c0_233] : memref<1x18x18x16xf32, #tpu.memory_space<vmem>>, vector<1x1x16x16xf32>
    %128 = vector.shape_cast %127 : vector<1x1x16x16xf32> to vector<16x16xf32>
    %c0_234 = arith.constant 0 : index
    %c6_235 = arith.constant 6 : index
    %c1_236 = arith.constant 1 : index
    %c0_237 = arith.constant 0 : index
    %129 = vector.load %arg1[%c0_234, %c6_235, %c1_236, %c0_237] : memref<1x18x18x16xf32, #tpu.memory_space<vmem>>, vector<1x1x16x16xf32>
    %130 = vector.shape_cast %129 : vector<1x1x16x16xf32> to vector<16x16xf32>
    %c0_238 = arith.constant 0 : index
    %c7_239 = arith.constant 7 : index
    %c1_240 = arith.constant 1 : index
    %c0_241 = arith.constant 0 : index
    %131 = vector.load %arg1[%c0_238, %c7_239, %c1_240, %c0_241] : memref<1x18x18x16xf32, #tpu.memory_space<vmem>>, vector<1x1x16x16xf32>
    %132 = vector.shape_cast %131 : vector<1x1x16x16xf32> to vector<16x16xf32>
    %c0_242 = arith.constant 0 : index
    %c8_243 = arith.constant 8 : index
    %c1_244 = arith.constant 1 : index
    %c0_245 = arith.constant 0 : index
    %133 = vector.load %arg1[%c0_242, %c8_243, %c1_244, %c0_245] : memref<1x18x18x16xf32, #tpu.memory_space<vmem>>, vector<1x1x16x16xf32>
    %134 = vector.shape_cast %133 : vector<1x1x16x16xf32> to vector<16x16xf32>
    %c0_246 = arith.constant 0 : index
    %c9_247 = arith.constant 9 : index
    %c1_248 = arith.constant 1 : index
    %c0_249 = arith.constant 0 : index
    %135 = vector.load %arg1[%c0_246, %c9_247, %c1_248, %c0_249] : memref<1x18x18x16xf32, #tpu.memory_space<vmem>>, vector<1x1x16x16xf32>
    %136 = vector.shape_cast %135 : vector<1x1x16x16xf32> to vector<16x16xf32>
    %137 = tpu.concatenate %122, %124, %126, %128, %130, %132, %134, %136 in 0 : vector<16x16xf32>, vector<16x16xf32>, vector<16x16xf32>, vector<16x16xf32>, vector<16x16xf32>, vector<16x16xf32>, vector<16x16xf32>, vector<16x16xf32> -> vector<128x16xf32>
    %c0_250 = arith.constant 0 : index
    %c2_251 = arith.constant 2 : index
    %c2_252 = arith.constant 2 : index
    %c0_253 = arith.constant 0 : index
    %138 = vector.load %arg1[%c0_250, %c2_251, %c2_252, %c0_253] : memref<1x18x18x16xf32, #tpu.memory_space<vmem>>, vector<1x1x16x16xf32>
    %139 = vector.shape_cast %138 : vector<1x1x16x16xf32> to vector<16x16xf32>
    %c0_254 = arith.constant 0 : index
    %c3_255 = arith.constant 3 : index
    %c2_256 = arith.constant 2 : index
    %c0_257 = arith.constant 0 : index
    %140 = vector.load %arg1[%c0_254, %c3_255, %c2_256, %c0_257] : memref<1x18x18x16xf32, #tpu.memory_space<vmem>>, vector<1x1x16x16xf32>
    %141 = vector.shape_cast %140 : vector<1x1x16x16xf32> to vector<16x16xf32>
    %c0_258 = arith.constant 0 : index
    %c4_259 = arith.constant 4 : index
    %c2_260 = arith.constant 2 : index
    %c0_261 = arith.constant 0 : index
    %142 = vector.load %arg1[%c0_258, %c4_259, %c2_260, %c0_261] : memref<1x18x18x16xf32, #tpu.memory_space<vmem>>, vector<1x1x16x16xf32>
    %143 = vector.shape_cast %142 : vector<1x1x16x16xf32> to vector<16x16xf32>
    %c0_262 = arith.constant 0 : index
    %c5_263 = arith.constant 5 : index
    %c2_264 = arith.constant 2 : index
    %c0_265 = arith.constant 0 : index
    %144 = vector.load %arg1[%c0_262, %c5_263, %c2_264, %c0_265] : memref<1x18x18x16xf32, #tpu.memory_space<vmem>>, vector<1x1x16x16xf32>
    %145 = vector.shape_cast %144 : vector<1x1x16x16xf32> to vector<16x16xf32>
    %c0_266 = arith.constant 0 : index
    %c6_267 = arith.constant 6 : index
    %c2_268 = arith.constant 2 : index
    %c0_269 = arith.constant 0 : index
    %146 = vector.load %arg1[%c0_266, %c6_267, %c2_268, %c0_269] : memref<1x18x18x16xf32, #tpu.memory_space<vmem>>, vector<1x1x16x16xf32>
    %147 = vector.shape_cast %146 : vector<1x1x16x16xf32> to vector<16x16xf32>
    %c0_270 = arith.constant 0 : index
    %c7_271 = arith.constant 7 : index
    %c2_272 = arith.constant 2 : index
    %c0_273 = arith.constant 0 : index
    %148 = vector.load %arg1[%c0_270, %c7_271, %c2_272, %c0_273] : memref<1x18x18x16xf32, #tpu.memory_space<vmem>>, vector<1x1x16x16xf32>
    %149 = vector.shape_cast %148 : vector<1x1x16x16xf32> to vector<16x16xf32>
    %c0_274 = arith.constant 0 : index
    %c8_275 = arith.constant 8 : index
    %c2_276 = arith.constant 2 : index
    %c0_277 = arith.constant 0 : index
    %150 = vector.load %arg1[%c0_274, %c8_275, %c2_276, %c0_277] : memref<1x18x18x16xf32, #tpu.memory_space<vmem>>, vector<1x1x16x16xf32>
    %151 = vector.shape_cast %150 : vector<1x1x16x16xf32> to vector<16x16xf32>
    %c0_278 = arith.constant 0 : index
    %c9_279 = arith.constant 9 : index
    %c2_280 = arith.constant 2 : index
    %c0_281 = arith.constant 0 : index
    %152 = vector.load %arg1[%c0_278, %c9_279, %c2_280, %c0_281] : memref<1x18x18x16xf32, #tpu.memory_space<vmem>>, vector<1x1x16x16xf32>
    %153 = vector.shape_cast %152 : vector<1x1x16x16xf32> to vector<16x16xf32>
    %154 = tpu.concatenate %139, %141, %143, %145, %147, %149, %151, %153 in 0 : vector<16x16xf32>, vector<16x16xf32>, vector<16x16xf32>, vector<16x16xf32>, vector<16x16xf32>, vector<16x16xf32>, vector<16x16xf32>, vector<16x16xf32> -> vector<128x16xf32>
    %155 = tpu.concatenate %18, %35, %52, %69, %86, %103, %120, %137, %154 in 1 : vector<128x16xf32>, vector<128x16xf32>, vector<128x16xf32>, vector<128x16xf32>, vector<128x16xf32>, vector<128x16xf32>, vector<128x16xf32>, vector<128x16xf32>, vector<128x16xf32> -> vector<128x144xf32>
    %cst = arith.constant dense<0.000000e+00> : vector<128x16xf32>
    %156 = tpu.matmul %155, %0, %cst {dimension_numbers = #tpu.dot_dimension_numbers<[1], [0], [0], [1], [0, 0, 1, 1], [], []>} : vector<128x144xf32>, vector<144x16xf32>, vector<128x16xf32> -> vector<128x16xf32>
    %157 = vector.broadcast %1 : vector<1x16xf32> to vector<128x16xf32>
    %158 = arith.addf %156, %157 : vector<128x16xf32>
    %cst_282 = arith.constant 0.000000e+00 : f32
    %159 = vector.broadcast %cst_282 : f32 to vector<128x16xf32>
    %160 = arith.maximumf %158, %159 : vector<128x16xf32>
    %161 = vector.extract_strided_slice %160 {offsets = [0, 0], sizes = [16, 16], strides = [1, 1]} : vector<128x16xf32> to vector<16x16xf32>
    %c0_283 = arith.constant 0 : index
    %c0_284 = arith.constant 0 : index
    %c0_285 = arith.constant 0 : index
    %c0_286 = arith.constant 0 : index
    %162 = vector.load %arg4[%c0_283, %c0_284, %c0_285, %c0_286] : memref<1x16x16x16xf32, #tpu.memory_space<vmem>>, vector<1x1x16x16xf32>
    %163 = vector.shape_cast %162 : vector<1x1x16x16xf32> to vector<16x16xf32>
    %164 = vector.shape_cast %161 : vector<16x16xf32> to vector<1x1x16x16xf32>
    tpu.vector_store %arg4[%c0_283, %c0_284, %c0_285, %c0_286], %164 {strides = array<i32>} : memref<1x16x16x16xf32, #tpu.memory_space<vmem>>, vector<1x1x16x16xf32>,
    %165 = vector.extract_strided_slice %160 {offsets = [16, 0], sizes = [16, 16], strides = [1, 1]} : vector<128x16xf32> to vector<16x16xf32>
    %c0_287 = arith.constant 0 : index
    %c1_288 = arith.constant 1 : index
    %c0_289 = arith.constant 0 : index
    %c0_290 = arith.constant 0 : index
    %166 = vector.load %arg4[%c0_287, %c1_288, %c0_289, %c0_290] : memref<1x16x16x16xf32, #tpu.memory_space<vmem>>, vector<1x1x16x16xf32>
    %167 = vector.shape_cast %166 : vector<1x1x16x16xf32> to vector<16x16xf32>
    %168 = vector.shape_cast %165 : vector<16x16xf32> to vector<1x1x16x16xf32>
    tpu.vector_store %arg4[%c0_287, %c1_288, %c0_289, %c0_290], %168 {strides = array<i32>} : memref<1x16x16x16xf32, #tpu.memory_space<vmem>>, vector<1x1x16x16xf32>,
    %169 = vector.extract_strided_slice %160 {offsets = [32, 0], sizes = [16, 16], strides = [1, 1]} : vector<128x16xf32> to vector<16x16xf32>
    %c0_291 = arith.constant 0 : index
    %c2_292 = arith.constant 2 : index
    %c0_293 = arith.constant 0 : index
    %c0_294 = arith.constant 0 : index
    %170 = vector.load %arg4[%c0_291, %c2_292, %c0_293, %c0_294] : memref<1x16x16x16xf32, #tpu.memory_space<vmem>>, vector<1x1x16x16xf32>
    %171 = vector.shape_cast %170 : vector<1x1x16x16xf32> to vector<16x16xf32>
    %172 = vector.shape_cast %169 : vector<16x16xf32> to vector<1x1x16x16xf32>
    tpu.vector_store %arg4[%c0_291, %c2_292, %c0_293, %c0_294], %172 {strides = array<i32>} : memref<1x16x16x16xf32, #tpu.memory_space<vmem>>, vector<1x1x16x16xf32>,
    %173 = vector.extract_strided_slice %160 {offsets = [48, 0], sizes = [16, 16], strides = [1, 1]} : vector<128x16xf32> to vector<16x16xf32>
    %c0_295 = arith.constant 0 : index
    %c3_296 = arith.constant 3 : index
    %c0_297 = arith.constant 0 : index
    %c0_298 = arith.constant 0 : index
    %174 = vector.load %arg4[%c0_295, %c3_296, %c0_297, %c0_298] : memref<1x16x16x16xf32, #tpu.memory_space<vmem>>, vector<1x1x16x16xf32>
    %175 = vector.shape_cast %174 : vector<1x1x16x16xf32> to vector<16x16xf32>
    %176 = vector.shape_cast %173 : vector<16x16xf32> to vector<1x1x16x16xf32>
    tpu.vector_store %arg4[%c0_295, %c3_296, %c0_297, %c0_298], %176 {strides = array<i32>} : memref<1x16x16x16xf32, #tpu.memory_space<vmem>>, vector<1x1x16x16xf32>,
    %177 = vector.extract_strided_slice %160 {offsets = [64, 0], sizes = [16, 16], strides = [1, 1]} : vector<128x16xf32> to vector<16x16xf32>
    %c0_299 = arith.constant 0 : index
    %c4_300 = arith.constant 4 : index
    %c0_301 = arith.constant 0 : index
    %c0_302 = arith.constant 0 : index
    %178 = vector.load %arg4[%c0_299, %c4_300, %c0_301, %c0_302] : memref<1x16x16x16xf32, #tpu.memory_space<vmem>>, vector<1x1x16x16xf32>
    %179 = vector.shape_cast %178 : vector<1x1x16x16xf32> to vector<16x16xf32>
    %180 = vector.shape_cast %177 : vector<16x16xf32> to vector<1x1x16x16xf32>
    tpu.vector_store %arg4[%c0_299, %c4_300, %c0_301, %c0_302], %180 {strides = array<i32>} : memref<1x16x16x16xf32, #tpu.memory_space<vmem>>, vector<1x1x16x16xf32>,
    %181 = vector.extract_strided_slice %160 {offsets = [80, 0], sizes = [16, 16], strides = [1, 1]} : vector<128x16xf32> to vector<16x16xf32>
    %c0_303 = arith.constant 0 : index
    %c5_304 = arith.constant 5 : index
    %c0_305 = arith.constant 0 : index
    %c0_306 = arith.constant 0 : index
    %182 = vector.load %arg4[%c0_303, %c5_304, %c0_305, %c0_306] : memref<1x16x16x16xf32, #tpu.memory_space<vmem>>, vector<1x1x16x16xf32>
    %183 = vector.shape_cast %182 : vector<1x1x16x16xf32> to vector<16x16xf32>
    %184 = vector.shape_cast %181 : vector<16x16xf32> to vector<1x1x16x16xf32>
    tpu.vector_store %arg4[%c0_303, %c5_304, %c0_305, %c0_306], %184 {strides = array<i32>} : memref<1x16x16x16xf32, #tpu.memory_space<vmem>>, vector<1x1x16x16xf32>,
    %185 = vector.extract_strided_slice %160 {offsets = [96, 0], sizes = [16, 16], strides = [1, 1]} : vector<128x16xf32> to vector<16x16xf32>
    %c0_307 = arith.constant 0 : index
    %c6_308 = arith.constant 6 : index
    %c0_309 = arith.constant 0 : index
    %c0_310 = arith.constant 0 : index
    %186 = vector.load %arg4[%c0_307, %c6_308, %c0_309, %c0_310] : memref<1x16x16x16xf32, #tpu.memory_space<vmem>>, vector<1x1x16x16xf32>
    %187 = vector.shape_cast %186 : vector<1x1x16x16xf32> to vector<16x16xf32>
    %188 = vector.shape_cast %185 : vector<16x16xf32> to vector<1x1x16x16xf32>
    tpu.vector_store %arg4[%c0_307, %c6_308, %c0_309, %c0_310], %188 {strides = array<i32>} : memref<1x16x16x16xf32, #tpu.memory_space<vmem>>, vector<1x1x16x16xf32>,
    %189 = vector.extract_strided_slice %160 {offsets = [112, 0], sizes = [16, 16], strides = [1, 1]} : vector<128x16xf32> to vector<16x16xf32>
    %c0_311 = arith.constant 0 : index
    %c7_312 = arith.constant 7 : index
    %c0_313 = arith.constant 0 : index
    %c0_314 = arith.constant 0 : index
    %190 = vector.load %arg4[%c0_311, %c7_312, %c0_313, %c0_314] : memref<1x16x16x16xf32, #tpu.memory_space<vmem>>, vector<1x1x16x16xf32>
    %191 = vector.shape_cast %190 : vector<1x1x16x16xf32> to vector<16x16xf32>
    %192 = vector.shape_cast %189 : vector<16x16xf32> to vector<1x1x16x16xf32>
    tpu.vector_store %arg4[%c0_311, %c7_312, %c0_313, %c0_314], %192 {strides = array<i32>} : memref<1x16x16x16xf32, #tpu.memory_space<vmem>>, vector<1x1x16x16xf32>,
    %c0_315 = arith.constant 0 : index
    %c8_316 = arith.constant 8 : index
    %c0_317 = arith.constant 0 : index
    %c0_318 = arith.constant 0 : index
    %193 = vector.load %arg1[%c0_315, %c8_316, %c0_317, %c0_318] : memref<1x18x18x16xf32, #tpu.memory_space<vmem>>, vector<1x1x16x16xf32>
    %194 = vector.shape_cast %193 : vector<1x1x16x16xf32> to vector<16x16xf32>
    %c0_319 = arith.constant 0 : index
    %c9_320 = arith.constant 9 : index
    %c0_321 = arith.constant 0 : index
    %c0_322 = arith.constant 0 : index
    %195 = vector.load %arg1[%c0_319, %c9_320, %c0_321, %c0_322] : memref<1x18x18x16xf32, #tpu.memory_space<vmem>>, vector<1x1x16x16xf32>
    %196 = vector.shape_cast %195 : vector<1x1x16x16xf32> to vector<16x16xf32>
    %c0_323 = arith.constant 0 : index
    %c10 = arith.constant 10 : index
    %c0_324 = arith.constant 0 : index
    %c0_325 = arith.constant 0 : index
    %197 = vector.load %arg1[%c0_323, %c10, %c0_324, %c0_325] : memref<1x18x18x16xf32, #tpu.memory_space<vmem>>, vector<1x1x16x16xf32>
    %198 = vector.shape_cast %197 : vector<1x1x16x16xf32> to vector<16x16xf32>
    %c0_326 = arith.constant 0 : index
    %c11 = arith.constant 11 : index
    %c0_327 = arith.constant 0 : index
    %c0_328 = arith.constant 0 : index
    %199 = vector.load %arg1[%c0_326, %c11, %c0_327, %c0_328] : memref<1x18x18x16xf32, #tpu.memory_space<vmem>>, vector<1x1x16x16xf32>
    %200 = vector.shape_cast %199 : vector<1x1x16x16xf32> to vector<16x16xf32>
    %c0_329 = arith.constant 0 : index
    %c12 = arith.constant 12 : index
    %c0_330 = arith.constant 0 : index
    %c0_331 = arith.constant 0 : index
    %201 = vector.load %arg1[%c0_329, %c12, %c0_330, %c0_331] : memref<1x18x18x16xf32, #tpu.memory_space<vmem>>, vector<1x1x16x16xf32>
    %202 = vector.shape_cast %201 : vector<1x1x16x16xf32> to vector<16x16xf32>
    %c0_332 = arith.constant 0 : index
    %c13 = arith.constant 13 : index
    %c0_333 = arith.constant 0 : index
    %c0_334 = arith.constant 0 : index
    %203 = vector.load %arg1[%c0_332, %c13, %c0_333, %c0_334] : memref<1x18x18x16xf32, #tpu.memory_space<vmem>>, vector<1x1x16x16xf32>
    %204 = vector.shape_cast %203 : vector<1x1x16x16xf32> to vector<16x16xf32>
    %c0_335 = arith.constant 0 : index
    %c14 = arith.constant 14 : index
    %c0_336 = arith.constant 0 : index
    %c0_337 = arith.constant 0 : index
    %205 = vector.load %arg1[%c0_335, %c14, %c0_336, %c0_337] : memref<1x18x18x16xf32, #tpu.memory_space<vmem>>, vector<1x1x16x16xf32>
    %206 = vector.shape_cast %205 : vector<1x1x16x16xf32> to vector<16x16xf32>
    %c0_338 = arith.constant 0 : index
    %c15 = arith.constant 15 : index
    %c0_339 = arith.constant 0 : index
    %c0_340 = arith.constant 0 : index
    %207 = vector.load %arg1[%c0_338, %c15, %c0_339, %c0_340] : memref<1x18x18x16xf32, #tpu.memory_space<vmem>>, vector<1x1x16x16xf32>
    %208 = vector.shape_cast %207 : vector<1x1x16x16xf32> to vector<16x16xf32>
    %209 = tpu.concatenate %194, %196, %198, %200, %202, %204, %206, %208 in 0 : vector<16x16xf32>, vector<16x16xf32>, vector<16x16xf32>, vector<16x16xf32>, vector<16x16xf32>, vector<16x16xf32>, vector<16x16xf32>, vector<16x16xf32> -> vector<128x16xf32>
    %c0_341 = arith.constant 0 : index
    %c8_342 = arith.constant 8 : index
    %c1_343 = arith.constant 1 : index
    %c0_344 = arith.constant 0 : index
    %210 = vector.load %arg1[%c0_341, %c8_342, %c1_343, %c0_344] : memref<1x18x18x16xf32, #tpu.memory_space<vmem>>, vector<1x1x16x16xf32>
    %211 = vector.shape_cast %210 : vector<1x1x16x16xf32> to vector<16x16xf32>
    %c0_345 = arith.constant 0 : index
    %c9_346 = arith.constant 9 : index
    %c1_347 = arith.constant 1 : index
    %c0_348 = arith.constant 0 : index
    %212 = vector.load %arg1[%c0_345, %c9_346, %c1_347, %c0_348] : memref<1x18x18x16xf32, #tpu.memory_space<vmem>>, vector<1x1x16x16xf32>
    %213 = vector.shape_cast %212 : vector<1x1x16x16xf32> to vector<16x16xf32>
    %c0_349 = arith.constant 0 : index
    %c10_350 = arith.constant 10 : index
    %c1_351 = arith.constant 1 : index
    %c0_352 = arith.constant 0 : index
    %214 = vector.load %arg1[%c0_349, %c10_350, %c1_351, %c0_352] : memref<1x18x18x16xf32, #tpu.memory_space<vmem>>, vector<1x1x16x16xf32>
    %215 = vector.shape_cast %214 : vector<1x1x16x16xf32> to vector<16x16xf32>
    %c0_353 = arith.constant 0 : index
    %c11_354 = arith.constant 11 : index
    %c1_355 = arith.constant 1 : index
    %c0_356 = arith.constant 0 : index
    %216 = vector.load %arg1[%c0_353, %c11_354, %c1_355, %c0_356] : memref<1x18x18x16xf32, #tpu.memory_space<vmem>>, vector<1x1x16x16xf32>
    %217 = vector.shape_cast %216 : vector<1x1x16x16xf32> to vector<16x16xf32>
    %c0_357 = arith.constant 0 : index
    %c12_358 = arith.constant 12 : index
    %c1_359 = arith.constant 1 : index
    %c0_360 = arith.constant 0 : index
    %218 = vector.load %arg1[%c0_357, %c12_358, %c1_359, %c0_360] : memref<1x18x18x16xf32, #tpu.memory_space<vmem>>, vector<1x1x16x16xf32>
    %219 = vector.shape_cast %218 : vector<1x1x16x16xf32> to vector<16x16xf32>
    %c0_361 = arith.constant 0 : index
    %c13_362 = arith.constant 13 : index
    %c1_363 = arith.constant 1 : index
    %c0_364 = arith.constant 0 : index
    %220 = vector.load %arg1[%c0_361, %c13_362, %c1_363, %c0_364] : memref<1x18x18x16xf32, #tpu.memory_space<vmem>>, vector<1x1x16x16xf32>
    %221 = vector.shape_cast %220 : vector<1x1x16x16xf32> to vector<16x16xf32>
    %c0_365 = arith.constant 0 : index
    %c14_366 = arith.constant 14 : index
    %c1_367 = arith.constant 1 : index
    %c0_368 = arith.constant 0 : index
    %222 = vector.load %arg1[%c0_365, %c14_366, %c1_367, %c0_368] : memref<1x18x18x16xf32, #tpu.memory_space<vmem>>, vector<1x1x16x16xf32>
    %223 = vector.shape_cast %222 : vector<1x1x16x16xf32> to vector<16x16xf32>
    %c0_369 = arith.constant 0 : index
    %c15_370 = arith.constant 15 : index
    %c1_371 = arith.constant 1 : index
    %c0_372 = arith.constant 0 : index
    %224 = vector.load %arg1[%c0_369, %c15_370, %c1_371, %c0_372] : memref<1x18x18x16xf32, #tpu.memory_space<vmem>>, vector<1x1x16x16xf32>
    %225 = vector.shape_cast %224 : vector<1x1x16x16xf32> to vector<16x16xf32>
    %226 = tpu.concatenate %211, %213, %215, %217, %219, %221, %223, %225 in 0 : vector<16x16xf32>, vector<16x16xf32>, vector<16x16xf32>, vector<16x16xf32>, vector<16x16xf32>, vector<16x16xf32>, vector<16x16xf32>, vector<16x16xf32> -> vector<128x16xf32>
    %c0_373 = arith.constant 0 : index
    %c8_374 = arith.constant 8 : index
    %c2_375 = arith.constant 2 : index
    %c0_376 = arith.constant 0 : index
    %227 = vector.load %arg1[%c0_373, %c8_374, %c2_375, %c0_376] : memref<1x18x18x16xf32, #tpu.memory_space<vmem>>, vector<1x1x16x16xf32>
    %228 = vector.shape_cast %227 : vector<1x1x16x16xf32> to vector<16x16xf32>
    %c0_377 = arith.constant 0 : index
    %c9_378 = arith.constant 9 : index
    %c2_379 = arith.constant 2 : index
    %c0_380 = arith.constant 0 : index
    %229 = vector.load %arg1[%c0_377, %c9_378, %c2_379, %c0_380] : memref<1x18x18x16xf32, #tpu.memory_space<vmem>>, vector<1x1x16x16xf32>
    %230 = vector.shape_cast %229 : vector<1x1x16x16xf32> to vector<16x16xf32>
    %c0_381 = arith.constant 0 : index
    %c10_382 = arith.constant 10 : index
    %c2_383 = arith.constant 2 : index
    %c0_384 = arith.constant 0 : index
    %231 = vector.load %arg1[%c0_381, %c10_382, %c2_383, %c0_384] : memref<1x18x18x16xf32, #tpu.memory_space<vmem>>, vector<1x1x16x16xf32>
    %232 = vector.shape_cast %231 : vector<1x1x16x16xf32> to vector<16x16xf32>
    %c0_385 = arith.constant 0 : index
    %c11_386 = arith.constant 11 : index
    %c2_387 = arith.constant 2 : index
    %c0_388 = arith.constant 0 : index
    %233 = vector.load %arg1[%c0_385, %c11_386, %c2_387, %c0_388] : memref<1x18x18x16xf32, #tpu.memory_space<vmem>>, vector<1x1x16x16xf32>
    %234 = vector.shape_cast %233 : vector<1x1x16x16xf32> to vector<16x16xf32>
    %c0_389 = arith.constant 0 : index
    %c12_390 = arith.constant 12 : index
    %c2_391 = arith.constant 2 : index
    %c0_392 = arith.constant 0 : index
    %235 = vector.load %arg1[%c0_389, %c12_390, %c2_391, %c0_392] : memref<1x18x18x16xf32, #tpu.memory_space<vmem>>, vector<1x1x16x16xf32>
    %236 = vector.shape_cast %235 : vector<1x1x16x16xf32> to vector<16x16xf32>
    %c0_393 = arith.constant 0 : index
    %c13_394 = arith.constant 13 : index
    %c2_395 = arith.constant 2 : index
    %c0_396 = arith.constant 0 : index
    %237 = vector.load %arg1[%c0_393, %c13_394, %c2_395, %c0_396] : memref<1x18x18x16xf32, #tpu.memory_space<vmem>>, vector<1x1x16x16xf32>
    %238 = vector.shape_cast %237 : vector<1x1x16x16xf32> to vector<16x16xf32>
    %c0_397 = arith.constant 0 : index
    %c14_398 = arith.constant 14 : index
    %c2_399 = arith.constant 2 : index
    %c0_400 = arith.constant 0 : index
    %239 = vector.load %arg1[%c0_397, %c14_398, %c2_399, %c0_400] : memref<1x18x18x16xf32, #tpu.memory_space<vmem>>, vector<1x1x16x16xf32>
    %240 = vector.shape_cast %239 : vector<1x1x16x16xf32> to vector<16x16xf32>
    %c0_401 = arith.constant 0 : index
    %c15_402 = arith.constant 15 : index
    %c2_403 = arith.constant 2 : index
    %c0_404 = arith.constant 0 : index
    %241 = vector.load %arg1[%c0_401, %c15_402, %c2_403, %c0_404] : memref<1x18x18x16xf32, #tpu.memory_space<vmem>>, vector<1x1x16x16xf32>
    %242 = vector.shape_cast %241 : vector<1x1x16x16xf32> to vector<16x16xf32>
    %243 = tpu.concatenate %228, %230, %232, %234, %236, %238, %240, %242 in 0 : vector<16x16xf32>, vector<16x16xf32>, vector<16x16xf32>, vector<16x16xf32>, vector<16x16xf32>, vector<16x16xf32>, vector<16x16xf32>, vector<16x16xf32> -> vector<128x16xf32>
    %c0_405 = arith.constant 0 : index
    %c9_406 = arith.constant 9 : index
    %c0_407 = arith.constant 0 : index
    %c0_408 = arith.constant 0 : index
    %244 = vector.load %arg1[%c0_405, %c9_406, %c0_407, %c0_408] : memref<1x18x18x16xf32, #tpu.memory_space<vmem>>, vector<1x1x16x16xf32>
    %245 = vector.shape_cast %244 : vector<1x1x16x16xf32> to vector<16x16xf32>
    %c0_409 = arith.constant 0 : index
    %c10_410 = arith.constant 10 : index
    %c0_411 = arith.constant 0 : index
    %c0_412 = arith.constant 0 : index
    %246 = vector.load %arg1[%c0_409, %c10_410, %c0_411, %c0_412] : memref<1x18x18x16xf32, #tpu.memory_space<vmem>>, vector<1x1x16x16xf32>
    %247 = vector.shape_cast %246 : vector<1x1x16x16xf32> to vector<16x16xf32>
    %c0_413 = arith.constant 0 : index
    %c11_414 = arith.constant 11 : index
    %c0_415 = arith.constant 0 : index
    %c0_416 = arith.constant 0 : index
    %248 = vector.load %arg1[%c0_413, %c11_414, %c0_415, %c0_416] : memref<1x18x18x16xf32, #tpu.memory_space<vmem>>, vector<1x1x16x16xf32>
    %249 = vector.shape_cast %248 : vector<1x1x16x16xf32> to vector<16x16xf32>
    %c0_417 = arith.constant 0 : index
    %c12_418 = arith.constant 12 : index
    %c0_419 = arith.constant 0 : index
    %c0_420 = arith.constant 0 : index
    %250 = vector.load %arg1[%c0_417, %c12_418, %c0_419, %c0_420] : memref<1x18x18x16xf32, #tpu.memory_space<vmem>>, vector<1x1x16x16xf32>
    %251 = vector.shape_cast %250 : vector<1x1x16x16xf32> to vector<16x16xf32>
    %c0_421 = arith.constant 0 : index
    %c13_422 = arith.constant 13 : index
    %c0_423 = arith.constant 0 : index
    %c0_424 = arith.constant 0 : index
    %252 = vector.load %arg1[%c0_421, %c13_422, %c0_423, %c0_424] : memref<1x18x18x16xf32, #tpu.memory_space<vmem>>, vector<1x1x16x16xf32>
    %253 = vector.shape_cast %252 : vector<1x1x16x16xf32> to vector<16x16xf32>
    %c0_425 = arith.constant 0 : index
    %c14_426 = arith.constant 14 : index
    %c0_427 = arith.constant 0 : index
    %c0_428 = arith.constant 0 : index
    %254 = vector.load %arg1[%c0_425, %c14_426, %c0_427, %c0_428] : memref<1x18x18x16xf32, #tpu.memory_space<vmem>>, vector<1x1x16x16xf32>
    %255 = vector.shape_cast %254 : vector<1x1x16x16xf32> to vector<16x16xf32>
    %c0_429 = arith.constant 0 : index
    %c15_430 = arith.constant 15 : index
    %c0_431 = arith.constant 0 : index
    %c0_432 = arith.constant 0 : index
    %256 = vector.load %arg1[%c0_429, %c15_430, %c0_431, %c0_432] : memref<1x18x18x16xf32, #tpu.memory_space<vmem>>, vector<1x1x16x16xf32>
    %257 = vector.shape_cast %256 : vector<1x1x16x16xf32> to vector<16x16xf32>
    %c0_433 = arith.constant 0 : index
    %c16 = arith.constant 16 : index
    %c0_434 = arith.constant 0 : index
    %c0_435 = arith.constant 0 : index
    %258 = vector.load %arg1[%c0_433, %c16, %c0_434, %c0_435] : memref<1x18x18x16xf32, #tpu.memory_space<vmem>>, vector<1x1x16x16xf32>
    %259 = vector.shape_cast %258 : vector<1x1x16x16xf32> to vector<16x16xf32>
    %260 = tpu.concatenate %245, %247, %249, %251, %253, %255, %257, %259 in 0 : vector<16x16xf32>, vector<16x16xf32>, vector<16x16xf32>, vector<16x16xf32>, vector<16x16xf32>, vector<16x16xf32>, vector<16x16xf32>, vector<16x16xf32> -> vector<128x16xf32>
    %c0_436 = arith.constant 0 : index
    %c9_437 = arith.constant 9 : index
    %c1_438 = arith.constant 1 : index
    %c0_439 = arith.constant 0 : index
    %261 = vector.load %arg1[%c0_436, %c9_437, %c1_438, %c0_439] : memref<1x18x18x16xf32, #tpu.memory_space<vmem>>, vector<1x1x16x16xf32>
    %262 = vector.shape_cast %261 : vector<1x1x16x16xf32> to vector<16x16xf32>
    %c0_440 = arith.constant 0 : index
    %c10_441 = arith.constant 10 : index
    %c1_442 = arith.constant 1 : index
    %c0_443 = arith.constant 0 : index
    %263 = vector.load %arg1[%c0_440, %c10_441, %c1_442, %c0_443] : memref<1x18x18x16xf32, #tpu.memory_space<vmem>>, vector<1x1x16x16xf32>
    %264 = vector.shape_cast %263 : vector<1x1x16x16xf32> to vector<16x16xf32>
    %c0_444 = arith.constant 0 : index
    %c11_445 = arith.constant 11 : index
    %c1_446 = arith.constant 1 : index
    %c0_447 = arith.constant 0 : index
    %265 = vector.load %arg1[%c0_444, %c11_445, %c1_446, %c0_447] : memref<1x18x18x16xf32, #tpu.memory_space<vmem>>, vector<1x1x16x16xf32>
    %266 = vector.shape_cast %265 : vector<1x1x16x16xf32> to vector<16x16xf32>
    %c0_448 = arith.constant 0 : index
    %c12_449 = arith.constant 12 : index
    %c1_450 = arith.constant 1 : index
    %c0_451 = arith.constant 0 : index
    %267 = vector.load %arg1[%c0_448, %c12_449, %c1_450, %c0_451] : memref<1x18x18x16xf32, #tpu.memory_space<vmem>>, vector<1x1x16x16xf32>
    %268 = vector.shape_cast %267 : vector<1x1x16x16xf32> to vector<16x16xf32>
    %c0_452 = arith.constant 0 : index
    %c13_453 = arith.constant 13 : index
    %c1_454 = arith.constant 1 : index
    %c0_455 = arith.constant 0 : index
    %269 = vector.load %arg1[%c0_452, %c13_453, %c1_454, %c0_455] : memref<1x18x18x16xf32, #tpu.memory_space<vmem>>, vector<1x1x16x16xf32>
    %270 = vector.shape_cast %269 : vector<1x1x16x16xf32> to vector<16x16xf32>
    %c0_456 = arith.constant 0 : index
    %c14_457 = arith.constant 14 : index
    %c1_458 = arith.constant 1 : index
    %c0_459 = arith.constant 0 : index
    %271 = vector.load %arg1[%c0_456, %c14_457, %c1_458, %c0_459] : memref<1x18x18x16xf32, #tpu.memory_space<vmem>>, vector<1x1x16x16xf32>
    %272 = vector.shape_cast %271 : vector<1x1x16x16xf32> to vector<16x16xf32>
    %c0_460 = arith.constant 0 : index
    %c15_461 = arith.constant 15 : index
    %c1_462 = arith.constant 1 : index
    %c0_463 = arith.constant 0 : index
    %273 = vector.load %arg1[%c0_460, %c15_461, %c1_462, %c0_463] : memref<1x18x18x16xf32, #tpu.memory_space<vmem>>, vector<1x1x16x16xf32>
    %274 = vector.shape_cast %273 : vector<1x1x16x16xf32> to vector<16x16xf32>
    %c0_464 = arith.constant 0 : index
    %c16_465 = arith.constant 16 : index
    %c1_466 = arith.constant 1 : index
    %c0_467 = arith.constant 0 : index
    %275 = vector.load %arg1[%c0_464, %c16_465, %c1_466, %c0_467] : memref<1x18x18x16xf32, #tpu.memory_space<vmem>>, vector<1x1x16x16xf32>
    %276 = vector.shape_cast %275 : vector<1x1x16x16xf32> to vector<16x16xf32>
    %277 = tpu.concatenate %262, %264, %266, %268, %270, %272, %274, %276 in 0 : vector<16x16xf32>, vector<16x16xf32>, vector<16x16xf32>, vector<16x16xf32>, vector<16x16xf32>, vector<16x16xf32>, vector<16x16xf32>, vector<16x16xf32> -> vector<128x16xf32>
    %c0_468 = arith.constant 0 : index
    %c9_469 = arith.constant 9 : index
    %c2_470 = arith.constant 2 : index
    %c0_471 = arith.constant 0 : index
    %278 = vector.load %arg1[%c0_468, %c9_469, %c2_470, %c0_471] : memref<1x18x18x16xf32, #tpu.memory_space<vmem>>, vector<1x1x16x16xf32>
    %279 = vector.shape_cast %278 : vector<1x1x16x16xf32> to vector<16x16xf32>
    %c0_472 = arith.constant 0 : index
    %c10_473 = arith.constant 10 : index
    %c2_474 = arith.constant 2 : index
    %c0_475 = arith.constant 0 : index
    %280 = vector.load %arg1[%c0_472, %c10_473, %c2_474, %c0_475] : memref<1x18x18x16xf32, #tpu.memory_space<vmem>>, vector<1x1x16x16xf32>
    %281 = vector.shape_cast %280 : vector<1x1x16x16xf32> to vector<16x16xf32>
    %c0_476 = arith.constant 0 : index
    %c11_477 = arith.constant 11 : index
    %c2_478 = arith.constant 2 : index
    %c0_479 = arith.constant 0 : index
    %282 = vector.load %arg1[%c0_476, %c11_477, %c2_478, %c0_479] : memref<1x18x18x16xf32, #tpu.memory_space<vmem>>, vector<1x1x16x16xf32>
    %283 = vector.shape_cast %282 : vector<1x1x16x16xf32> to vector<16x16xf32>
    %c0_480 = arith.constant 0 : index
    %c12_481 = arith.constant 12 : index
    %c2_482 = arith.constant 2 : index
    %c0_483 = arith.constant 0 : index
    %284 = vector.load %arg1[%c0_480, %c12_481, %c2_482, %c0_483] : memref<1x18x18x16xf32, #tpu.memory_space<vmem>>, vector<1x1x16x16xf32>
    %285 = vector.shape_cast %284 : vector<1x1x16x16xf32> to vector<16x16xf32>
    %c0_484 = arith.constant 0 : index
    %c13_485 = arith.constant 13 : index
    %c2_486 = arith.constant 2 : index
    %c0_487 = arith.constant 0 : index
    %286 = vector.load %arg1[%c0_484, %c13_485, %c2_486, %c0_487] : memref<1x18x18x16xf32, #tpu.memory_space<vmem>>, vector<1x1x16x16xf32>
    %287 = vector.shape_cast %286 : vector<1x1x16x16xf32> to vector<16x16xf32>
    %c0_488 = arith.constant 0 : index
    %c14_489 = arith.constant 14 : index
    %c2_490 = arith.constant 2 : index
    %c0_491 = arith.constant 0 : index
    %288 = vector.load %arg1[%c0_488, %c14_489, %c2_490, %c0_491] : memref<1x18x18x16xf32, #tpu.memory_space<vmem>>, vector<1x1x16x16xf32>
    %289 = vector.shape_cast %288 : vector<1x1x16x16xf32> to vector<16x16xf32>
    %c0_492 = arith.constant 0 : index
    %c15_493 = arith.constant 15 : index
    %c2_494 = arith.constant 2 : index
    %c0_495 = arith.constant 0 : index
    %290 = vector.load %arg1[%c0_492, %c15_493, %c2_494, %c0_495] : memref<1x18x18x16xf32, #tpu.memory_space<vmem>>, vector<1x1x16x16xf32>
    %291 = vector.shape_cast %290 : vector<1x1x16x16xf32> to vector<16x16xf32>
    %c0_496 = arith.constant 0 : index
    %c16_497 = arith.constant 16 : index
    %c2_498 = arith.constant 2 : index
    %c0_499 = arith.constant 0 : index
    %292 = vector.load %arg1[%c0_496, %c16_497, %c2_498, %c0_499] : memref<1x18x18x16xf32, #tpu.memory_space<vmem>>, vector<1x1x16x16xf32>
    %293 = vector.shape_cast %292 : vector<1x1x16x16xf32> to vector<16x16xf32>
    %294 = tpu.concatenate %279, %281, %283, %285, %287, %289, %291, %293 in 0 : vector<16x16xf32>, vector<16x16xf32>, vector<16x16xf32>, vector<16x16xf32>, vector<16x16xf32>, vector<16x16xf32>, vector<16x16xf32>, vector<16x16xf32> -> vector<128x16xf32>
    %c0_500 = arith.constant 0 : index
    %c10_501 = arith.constant 10 : index
    %c0_502 = arith.constant 0 : index
    %c0_503 = arith.constant 0 : index
    %295 = vector.load %arg1[%c0_500, %c10_501, %c0_502, %c0_503] : memref<1x18x18x16xf32, #tpu.memory_space<vmem>>, vector<1x1x16x16xf32>
    %296 = vector.shape_cast %295 : vector<1x1x16x16xf32> to vector<16x16xf32>
    %c0_504 = arith.constant 0 : index
    %c11_505 = arith.constant 11 : index
    %c0_506 = arith.constant 0 : index
    %c0_507 = arith.constant 0 : index
    %297 = vector.load %arg1[%c0_504, %c11_505, %c0_506, %c0_507] : memref<1x18x18x16xf32, #tpu.memory_space<vmem>>, vector<1x1x16x16xf32>
    %298 = vector.shape_cast %297 : vector<1x1x16x16xf32> to vector<16x16xf32>
    %c0_508 = arith.constant 0 : index
    %c12_509 = arith.constant 12 : index
    %c0_510 = arith.constant 0 : index
    %c0_511 = arith.constant 0 : index
    %299 = vector.load %arg1[%c0_508, %c12_509, %c0_510, %c0_511] : memref<1x18x18x16xf32, #tpu.memory_space<vmem>>, vector<1x1x16x16xf32>
    %300 = vector.shape_cast %299 : vector<1x1x16x16xf32> to vector<16x16xf32>
    %c0_512 = arith.constant 0 : index
    %c13_513 = arith.constant 13 : index
    %c0_514 = arith.constant 0 : index
    %c0_515 = arith.constant 0 : index
    %301 = vector.load %arg1[%c0_512, %c13_513, %c0_514, %c0_515] : memref<1x18x18x16xf32, #tpu.memory_space<vmem>>, vector<1x1x16x16xf32>
    %302 = vector.shape_cast %301 : vector<1x1x16x16xf32> to vector<16x16xf32>
    %c0_516 = arith.constant 0 : index
    %c14_517 = arith.constant 14 : index
    %c0_518 = arith.constant 0 : index
    %c0_519 = arith.constant 0 : index
    %303 = vector.load %arg1[%c0_516, %c14_517, %c0_518, %c0_519] : memref<1x18x18x16xf32, #tpu.memory_space<vmem>>, vector<1x1x16x16xf32>
    %304 = vector.shape_cast %303 : vector<1x1x16x16xf32> to vector<16x16xf32>
    %c0_520 = arith.constant 0 : index
    %c15_521 = arith.constant 15 : index
    %c0_522 = arith.constant 0 : index
    %c0_523 = arith.constant 0 : index
    %305 = vector.load %arg1[%c0_520, %c15_521, %c0_522, %c0_523] : memref<1x18x18x16xf32, #tpu.memory_space<vmem>>, vector<1x1x16x16xf32>
    %306 = vector.shape_cast %305 : vector<1x1x16x16xf32> to vector<16x16xf32>
    %c0_524 = arith.constant 0 : index
    %c16_525 = arith.constant 16 : index
    %c0_526 = arith.constant 0 : index
    %c0_527 = arith.constant 0 : index
    %307 = vector.load %arg1[%c0_524, %c16_525, %c0_526, %c0_527] : memref<1x18x18x16xf32, #tpu.memory_space<vmem>>, vector<1x1x16x16xf32>
    %308 = vector.shape_cast %307 : vector<1x1x16x16xf32> to vector<16x16xf32>
    %c0_528 = arith.constant 0 : index
    %c17 = arith.constant 17 : index
    %c0_529 = arith.constant 0 : index
    %c0_530 = arith.constant 0 : index
    %309 = vector.load %arg1[%c0_528, %c17, %c0_529, %c0_530] : memref<1x18x18x16xf32, #tpu.memory_space<vmem>>, vector<1x1x16x16xf32>
    %310 = vector.shape_cast %309 : vector<1x1x16x16xf32> to vector<16x16xf32>
    %311 = tpu.concatenate %296, %298, %300, %302, %304, %306, %308, %310 in 0 : vector<16x16xf32>, vector<16x16xf32>, vector<16x16xf32>, vector<16x16xf32>, vector<16x16xf32>, vector<16x16xf32>, vector<16x16xf32>, vector<16x16xf32> -> vector<128x16xf32>
    %c0_531 = arith.constant 0 : index
    %c10_532 = arith.constant 10 : index
    %c1_533 = arith.constant 1 : index
    %c0_534 = arith.constant 0 : index
    %312 = vector.load %arg1[%c0_531, %c10_532, %c1_533, %c0_534] : memref<1x18x18x16xf32, #tpu.memory_space<vmem>>, vector<1x1x16x16xf32>
    %313 = vector.shape_cast %312 : vector<1x1x16x16xf32> to vector<16x16xf32>
    %c0_535 = arith.constant 0 : index
    %c11_536 = arith.constant 11 : index
    %c1_537 = arith.constant 1 : index
    %c0_538 = arith.constant 0 : index
    %314 = vector.load %arg1[%c0_535, %c11_536, %c1_537, %c0_538] : memref<1x18x18x16xf32, #tpu.memory_space<vmem>>, vector<1x1x16x16xf32>
    %315 = vector.shape_cast %314 : vector<1x1x16x16xf32> to vector<16x16xf32>
    %c0_539 = arith.constant 0 : index
    %c12_540 = arith.constant 12 : index
    %c1_541 = arith.constant 1 : index
    %c0_542 = arith.constant 0 : index
    %316 = vector.load %arg1[%c0_539, %c12_540, %c1_541, %c0_542] : memref<1x18x18x16xf32, #tpu.memory_space<vmem>>, vector<1x1x16x16xf32>
    %317 = vector.shape_cast %316 : vector<1x1x16x16xf32> to vector<16x16xf32>
    %c0_543 = arith.constant 0 : index
    %c13_544 = arith.constant 13 : index
    %c1_545 = arith.constant 1 : index
    %c0_546 = arith.constant 0 : index
    %318 = vector.load %arg1[%c0_543, %c13_544, %c1_545, %c0_546] : memref<1x18x18x16xf32, #tpu.memory_space<vmem>>, vector<1x1x16x16xf32>
    %319 = vector.shape_cast %318 : vector<1x1x16x16xf32> to vector<16x16xf32>
    %c0_547 = arith.constant 0 : index
    %c14_548 = arith.constant 14 : index
    %c1_549 = arith.constant 1 : index
    %c0_550 = arith.constant 0 : index
    %320 = vector.load %arg1[%c0_547, %c14_548, %c1_549, %c0_550] : memref<1x18x18x16xf32, #tpu.memory_space<vmem>>, vector<1x1x16x16xf32>
    %321 = vector.shape_cast %320 : vector<1x1x16x16xf32> to vector<16x16xf32>
    %c0_551 = arith.constant 0 : index
    %c15_552 = arith.constant 15 : index
    %c1_553 = arith.constant 1 : index
    %c0_554 = arith.constant 0 : index
    %322 = vector.load %arg1[%c0_551, %c15_552, %c1_553, %c0_554] : memref<1x18x18x16xf32, #tpu.memory_space<vmem>>, vector<1x1x16x16xf32>
    %323 = vector.shape_cast %322 : vector<1x1x16x16xf32> to vector<16x16xf32>
    %c0_555 = arith.constant 0 : index
    %c16_556 = arith.constant 16 : index
    %c1_557 = arith.constant 1 : index
    %c0_558 = arith.constant 0 : index
    %324 = vector.load %arg1[%c0_555, %c16_556, %c1_557, %c0_558] : memref<1x18x18x16xf32, #tpu.memory_space<vmem>>, vector<1x1x16x16xf32>
    %325 = vector.shape_cast %324 : vector<1x1x16x16xf32> to vector<16x16xf32>
    %c0_559 = arith.constant 0 : index
    %c17_560 = arith.constant 17 : index
    %c1_561 = arith.constant 1 : index
    %c0_562 = arith.constant 0 : index
    %326 = vector.load %arg1[%c0_559, %c17_560, %c1_561, %c0_562] : memref<1x18x18x16xf32, #tpu.memory_space<vmem>>, vector<1x1x16x16xf32>
    %327 = vector.shape_cast %326 : vector<1x1x16x16xf32> to vector<16x16xf32>
    %328 = tpu.concatenate %313, %315, %317, %319, %321, %323, %325, %327 in 0 : vector<16x16xf32>, vector<16x16xf32>, vector<16x16xf32>, vector<16x16xf32>, vector<16x16xf32>, vector<16x16xf32>, vector<16x16xf32>, vector<16x16xf32> -> vector<128x16xf32>
    %c0_563 = arith.constant 0 : index
    %c10_564 = arith.constant 10 : index
    %c2_565 = arith.constant 2 : index
    %c0_566 = arith.constant 0 : index
    %329 = vector.load %arg1[%c0_563, %c10_564, %c2_565, %c0_566] : memref<1x18x18x16xf32, #tpu.memory_space<vmem>>, vector<1x1x16x16xf32>
    %330 = vector.shape_cast %329 : vector<1x1x16x16xf32> to vector<16x16xf32>
    %c0_567 = arith.constant 0 : index
    %c11_568 = arith.constant 11 : index
    %c2_569 = arith.constant 2 : index
    %c0_570 = arith.constant 0 : index
    %331 = vector.load %arg1[%c0_567, %c11_568, %c2_569, %c0_570] : memref<1x18x18x16xf32, #tpu.memory_space<vmem>>, vector<1x1x16x16xf32>
    %332 = vector.shape_cast %331 : vector<1x1x16x16xf32> to vector<16x16xf32>
    %c0_571 = arith.constant 0 : index
    %c12_572 = arith.constant 12 : index
    %c2_573 = arith.constant 2 : index
    %c0_574 = arith.constant 0 : index
    %333 = vector.load %arg1[%c0_571, %c12_572, %c2_573, %c0_574] : memref<1x18x18x16xf32, #tpu.memory_space<vmem>>, vector<1x1x16x16xf32>
    %334 = vector.shape_cast %333 : vector<1x1x16x16xf32> to vector<16x16xf32>
    %c0_575 = arith.constant 0 : index
    %c13_576 = arith.constant 13 : index
    %c2_577 = arith.constant 2 : index
    %c0_578 = arith.constant 0 : index
    %335 = vector.load %arg1[%c0_575, %c13_576, %c2_577, %c0_578] : memref<1x18x18x16xf32, #tpu.memory_space<vmem>>, vector<1x1x16x16xf32>
    %336 = vector.shape_cast %335 : vector<1x1x16x16xf32> to vector<16x16xf32>
    %c0_579 = arith.constant 0 : index
    %c14_580 = arith.constant 14 : index
    %c2_581 = arith.constant 2 : index
    %c0_582 = arith.constant 0 : index
    %337 = vector.load %arg1[%c0_579, %c14_580, %c2_581, %c0_582] : memref<1x18x18x16xf32, #tpu.memory_space<vmem>>, vector<1x1x16x16xf32>
    %338 = vector.shape_cast %337 : vector<1x1x16x16xf32> to vector<16x16xf32>
    %c0_583 = arith.constant 0 : index
    %c15_584 = arith.constant 15 : index
    %c2_585 = arith.constant 2 : index
    %c0_586 = arith.constant 0 : index
    %339 = vector.load %arg1[%c0_583, %c15_584, %c2_585, %c0_586] : memref<1x18x18x16xf32, #tpu.memory_space<vmem>>, vector<1x1x16x16xf32>
    %340 = vector.shape_cast %339 : vector<1x1x16x16xf32> to vector<16x16xf32>
    %c0_587 = arith.constant 0 : index
    %c16_588 = arith.constant 16 : index
    %c2_589 = arith.constant 2 : index
    %c0_590 = arith.constant 0 : index
    %341 = vector.load %arg1[%c0_587, %c16_588, %c2_589, %c0_590] : memref<1x18x18x16xf32, #tpu.memory_space<vmem>>, vector<1x1x16x16xf32>
    %342 = vector.shape_cast %341 : vector<1x1x16x16xf32> to vector<16x16xf32>
    %c0_591 = arith.constant 0 : index
    %c17_592 = arith.constant 17 : index
    %c2_593 = arith.constant 2 : index
    %c0_594 = arith.constant 0 : index
    %343 = vector.load %arg1[%c0_591, %c17_592, %c2_593, %c0_594] : memref<1x18x18x16xf32, #tpu.memory_space<vmem>>, vector<1x1x16x16xf32>
    %344 = vector.shape_cast %343 : vector<1x1x16x16xf32> to vector<16x16xf32>
    %345 = tpu.concatenate %330, %332, %334, %336, %338, %340, %342, %344 in 0 : vector<16x16xf32>, vector<16x16xf32>, vector<16x16xf32>, vector<16x16xf32>, vector<16x16xf32>, vector<16x16xf32>, vector<16x16xf32>, vector<16x16xf32> -> vector<128x16xf32>
    %346 = tpu.concatenate %209, %226, %243, %260, %277, %294, %311, %328, %345 in 1 : vector<128x16xf32>, vector<128x16xf32>, vector<128x16xf32>, vector<128x16xf32>, vector<128x16xf32>, vector<128x16xf32>, vector<128x16xf32>, vector<128x16xf32>, vector<128x16xf32> -> vector<128x144xf32>
    %cst_595 = arith.constant dense<0.000000e+00> : vector<128x16xf32>
    %347 = tpu.matmul %346, %0, %cst_595 {dimension_numbers = #tpu.dot_dimension_numbers<[1], [0], [0], [1], [0, 0, 1, 1], [], []>} : vector<128x144xf32>, vector<144x16xf32>, vector<128x16xf32> -> vector<128x16xf32>
    %348 = vector.broadcast %1 : vector<1x16xf32> to vector<128x16xf32>
    %349 = arith.addf %347, %348 : vector<128x16xf32>
    %cst_596 = arith.constant 0.000000e+00 : f32
    %350 = vector.broadcast %cst_596 : f32 to vector<128x16xf32>
    %351 = arith.maximumf %349, %350 : vector<128x16xf32>
    %352 = vector.extract_strided_slice %351 {offsets = [0, 0], sizes = [16, 16], strides = [1, 1]} : vector<128x16xf32> to vector<16x16xf32>
    %c0_597 = arith.constant 0 : index
    %c8_598 = arith.constant 8 : index
    %c0_599 = arith.constant 0 : index
    %c0_600 = arith.constant 0 : index
    %353 = vector.load %arg4[%c0_597, %c8_598, %c0_599, %c0_600] : memref<1x16x16x16xf32, #tpu.memory_space<vmem>>, vector<1x1x16x16xf32>
    %354 = vector.shape_cast %353 : vector<1x1x16x16xf32> to vector<16x16xf32>
    %355 = vector.shape_cast %352 : vector<16x16xf32> to vector<1x1x16x16xf32>
    tpu.vector_store %arg4[%c0_597, %c8_598, %c0_599, %c0_600], %355 {strides = array<i32>} : memref<1x16x16x16xf32, #tpu.memory_space<vmem>>, vector<1x1x16x16xf32>,
    %356 = vector.extract_strided_slice %351 {offsets = [16, 0], sizes = [16, 16], strides = [1, 1]} : vector<128x16xf32> to vector<16x16xf32>
    %c0_601 = arith.constant 0 : index
    %c9_602 = arith.constant 9 : index
    %c0_603 = arith.constant 0 : index
    %c0_604 = arith.constant 0 : index
    %357 = vector.load %arg4[%c0_601, %c9_602, %c0_603, %c0_604] : memref<1x16x16x16xf32, #tpu.memory_space<vmem>>, vector<1x1x16x16xf32>
    %358 = vector.shape_cast %357 : vector<1x1x16x16xf32> to vector<16x16xf32>
    %359 = vector.shape_cast %356 : vector<16x16xf32> to vector<1x1x16x16xf32>
    tpu.vector_store %arg4[%c0_601, %c9_602, %c0_603, %c0_604], %359 {strides = array<i32>} : memref<1x16x16x16xf32, #tpu.memory_space<vmem>>, vector<1x1x16x16xf32>,
    %360 = vector.extract_strided_slice %351 {offsets = [32, 0], sizes = [16, 16], strides = [1, 1]} : vector<128x16xf32> to vector<16x16xf32>
    %c0_605 = arith.constant 0 : index
    %c10_606 = arith.constant 10 : index
    %c0_607 = arith.constant 0 : index
    %c0_608 = arith.constant 0 : index
    %361 = vector.load %arg4[%c0_605, %c10_606, %c0_607, %c0_608] : memref<1x16x16x16xf32, #tpu.memory_space<vmem>>, vector<1x1x16x16xf32>
    %362 = vector.shape_cast %361 : vector<1x1x16x16xf32> to vector<16x16xf32>
    %363 = vector.shape_cast %360 : vector<16x16xf32> to vector<1x1x16x16xf32>
    tpu.vector_store %arg4[%c0_605, %c10_606, %c0_607, %c0_608], %363 {strides = array<i32>} : memref<1x16x16x16xf32, #tpu.memory_space<vmem>>, vector<1x1x16x16xf32>,
    %364 = vector.extract_strided_slice %351 {offsets = [48, 0], sizes = [16, 16], strides = [1, 1]} : vector<128x16xf32> to vector<16x16xf32>
    %c0_609 = arith.constant 0 : index
    %c11_610 = arith.constant 11 : index
    %c0_611 = arith.constant 0 : index
    %c0_612 = arith.constant 0 : index
    %365 = vector.load %arg4[%c0_609, %c11_610, %c0_611, %c0_612] : memref<1x16x16x16xf32, #tpu.memory_space<vmem>>, vector<1x1x16x16xf32>
    %366 = vector.shape_cast %365 : vector<1x1x16x16xf32> to vector<16x16xf32>
    %367 = vector.shape_cast %364 : vector<16x16xf32> to vector<1x1x16x16xf32>
    tpu.vector_store %arg4[%c0_609, %c11_610, %c0_611, %c0_612], %367 {strides = array<i32>} : memref<1x16x16x16xf32, #tpu.memory_space<vmem>>, vector<1x1x16x16xf32>,
    %368 = vector.extract_strided_slice %351 {offsets = [64, 0], sizes = [16, 16], strides = [1, 1]} : vector<128x16xf32> to vector<16x16xf32>
    %c0_613 = arith.constant 0 : index
    %c12_614 = arith.constant 12 : index
    %c0_615 = arith.constant 0 : index
    %c0_616 = arith.constant 0 : index
    %369 = vector.load %arg4[%c0_613, %c12_614, %c0_615, %c0_616] : memref<1x16x16x16xf32, #tpu.memory_space<vmem>>, vector<1x1x16x16xf32>
    %370 = vector.shape_cast %369 : vector<1x1x16x16xf32> to vector<16x16xf32>
    %371 = vector.shape_cast %368 : vector<16x16xf32> to vector<1x1x16x16xf32>
    tpu.vector_store %arg4[%c0_613, %c12_614, %c0_615, %c0_616], %371 {strides = array<i32>} : memref<1x16x16x16xf32, #tpu.memory_space<vmem>>, vector<1x1x16x16xf32>,
    %372 = vector.extract_strided_slice %351 {offsets = [80, 0], sizes = [16, 16], strides = [1, 1]} : vector<128x16xf32> to vector<16x16xf32>
    %c0_617 = arith.constant 0 : index
    %c13_618 = arith.constant 13 : index
    %c0_619 = arith.constant 0 : index
    %c0_620 = arith.constant 0 : index
    %373 = vector.load %arg4[%c0_617, %c13_618, %c0_619, %c0_620] : memref<1x16x16x16xf32, #tpu.memory_space<vmem>>, vector<1x1x16x16xf32>
    %374 = vector.shape_cast %373 : vector<1x1x16x16xf32> to vector<16x16xf32>
    %375 = vector.shape_cast %372 : vector<16x16xf32> to vector<1x1x16x16xf32>
    tpu.vector_store %arg4[%c0_617, %c13_618, %c0_619, %c0_620], %375 {strides = array<i32>} : memref<1x16x16x16xf32, #tpu.memory_space<vmem>>, vector<1x1x16x16xf32>,
    %376 = vector.extract_strided_slice %351 {offsets = [96, 0], sizes = [16, 16], strides = [1, 1]} : vector<128x16xf32> to vector<16x16xf32>
    %c0_621 = arith.constant 0 : index
    %c14_622 = arith.constant 14 : index
    %c0_623 = arith.constant 0 : index
    %c0_624 = arith.constant 0 : index
    %377 = vector.load %arg4[%c0_621, %c14_622, %c0_623, %c0_624] : memref<1x16x16x16xf32, #tpu.memory_space<vmem>>, vector<1x1x16x16xf32>
    %378 = vector.shape_cast %377 : vector<1x1x16x16xf32> to vector<16x16xf32>
    %379 = vector.shape_cast %376 : vector<16x16xf32> to vector<1x1x16x16xf32>
    tpu.vector_store %arg4[%c0_621, %c14_622, %c0_623, %c0_624], %379 {strides = array<i32>} : memref<1x16x16x16xf32, #tpu.memory_space<vmem>>, vector<1x1x16x16xf32>,
    %380 = vector.extract_strided_slice %351 {offsets = [112, 0], sizes = [16, 16], strides = [1, 1]} : vector<128x16xf32> to vector<16x16xf32>
    %c0_625 = arith.constant 0 : index
    %c15_626 = arith.constant 15 : index
    %c0_627 = arith.constant 0 : index
    %c0_628 = arith.constant 0 : index
    %381 = vector.load %arg4[%c0_625, %c15_626, %c0_627, %c0_628] : memref<1x16x16x16xf32, #tpu.memory_space<vmem>>, vector<1x1x16x16xf32>
    %382 = vector.shape_cast %381 : vector<1x1x16x16xf32> to vector<16x16xf32>
    %383 = vector.shape_cast %380 : vector<16x16xf32> to vector<1x1x16x16xf32>
    tpu.vector_store %arg4[%c0_625, %c15_626, %c0_627, %c0_628], %383 {strides = array<i32>} : memref<1x16x16x16xf32, #tpu.memory_space<vmem>>, vector<1x1x16x16xf32>,
    return
  }
  func.func @transform_0(%arg0: i32) -> (i32, i32, i32, i32) {
    %c0_i32 = arith.constant 0 : i32
    %c0_i32_0 = arith.constant 0 : i32
    %c0_i32_1 = arith.constant 0 : i32
    %c0_i32_2 = arith.constant 0 : i32
    return %arg0, %c0_i32, %c0_i32_0, %c0_i32_1 : i32, i32, i32, i32
  }
  func.func @transform_1(%arg0: i32) -> (i32, i32) {
    %c0_i32 = arith.constant 0 : i32
    %c0_i32_0 = arith.constant 0 : i32
    %c0_i32_1 = arith.constant 0 : i32
    return %c0_i32, %c0_i32_0 : i32, i32
  }
  func.func @transform_2(%arg0: i32) -> (i32, i32) {
    %c0_i32 = arith.constant 0 : i32
    %c0_i32_0 = arith.constant 0 : i32
    %c0_i32_1 = arith.constant 0 : i32
    return %c0_i32, %c0_i32_0 : i32, i32
  }
  func.func @transform_3(%arg0: i32) -> (i32, i32, i32, i32) {
    %c0_i32 = arith.constant 0 : i32
    %c0_i32_0 = arith.constant 0 : i32
    %c0_i32_1 = arith.constant 0 : i32
    %c0_i32_2 = arith.constant 0 : i32
    return %arg0, %c0_i32, %c0_i32_0, %c0_i32_1 : i32, i32, i32, i32
  }
}

</mosaic_0001>

<llo_original>
// kernel: tpu_custom_call.1
$region0: #{tpu_custom_call.1}
  #allocation0 [shape = 'u32[]', space=smem, size = 0x4, offset = 0x4, fixed_abs, tag = 'smem constant byte address 0x4 - core index']
  #allocation1 [shape = 'u32[72,128]{1,0:T(1,128)}', space=vmem, size = 0x9000, scoped, tag = 'internal scratch']
  %s0 = inlined_call_operand.vmem [shape: f32[2,18,18,16], index: 0, kind: input, shape index: {}]
  %s1 = inlined_call_operand.vmem [shape: f32[144,16], index: 1, kind: input, shape index: {}]
  %s2 = inlined_call_operand.vmem [shape: f32[1,16], index: 2, kind: input, shape index: {}]
  %s3 = inlined_call_operand.hbm [shape: f32[2,16,16,16], index: 3, kind: output, shape index: {}]
  %s4 = sld [smem:[#allocation0]]
  $region45: #{tpu_custom_call.1} parent=0
    _
  %s6 = ssub.s32 1, %s4
  %s7 = scalar_select 0, %s6, %s4
  $region1: #{tpu_custom_call.1} parent=0
    #allocation2 [shape = 'u8[262144]{0}', space=vmem, size = 0x40000, scoped, tag = 'output window, operand 0']
    #allocation3 [shape = 's32[2]{0}', space=sflag, size = 0x8, scoped, tag = 'scoped memory for tpu_custom_call.1']
    %8 = vsyncpa [#allocation3], 0
    %s9 = scalar_lea.sflag [#allocation3], 1
    %10 = vsyncpa %s9, 0
    loop: start=0, step=1, limit=4
    $region2: #{tpu_custom_call.1} parent=1 // loop_pre_header
      _
    $region3: #{tpu_custom_call.1} parent=1 // loop_header
      %s12 = sphi 0, %s16
      %p13 = scmp.ge.s32.totalorder %s12, 4
      %s22 = sphi 0, %s24
      %s25 = sphi 0, %s22
      %s26 = sphi 0, %s25
      %s42 = sphi 0, %s26
      %s46 = sphi 0, %s46
      %s48 = sphi 0, %s46
      %s49 = sphi 0, %s48
      %s63 = sphi 0, %s49
      %s67 = sphi 0, %s67
      %s69 = sphi 0, %s67
      %s70 = sphi 0, %s69
      %s84 = sphi 0, %s70
      %s90 = sphi 0, %s92
      %s93 = sphi 0, %s90
      %s94 = sphi 0, %s93
      %s110 = sphi 0, %s94
    $region4: #{tpu_custom_call.1} parent=1 // loop_header_branch
      %15 = sbr.rel (%p13) target = $region8
    $region5: #{tpu_custom_call.1} parent=1 // loop_body
      %s17 = ssub.s32 %s12, 1
      %s18 = ssub.s32 %s12, 2
      %s19 = sadd.s32 %s12, 1
      %s20 = ssub.s32 %s12, %s19
      %p21 = scmp.eq.s32.totalorder %s20, 0
      %s23 = sadd.s32 %s22, 1
      %s24 = scalar_select %p21, %s22, %s23
      %p27 = pneg %p21
      %p28 = scmp.eq.s32.totalorder %s12, 1
      %p29 = por %p27, %p28
      %p30 = scmp.ne.s32.totalorder %s22, %s25
      %p31 = scmp.eq.s32.totalorder %s12, 0
      %p32 = por %p30, %p31
      %p33 = scmp.ne.s32.totalorder %s22, %s25
      %p34 = scmp.eq.s32.totalorder %s17, 1
      %p35 = por %p33, %p34
      %p36 = scmp.ne.s32.totalorder %s25, %s26
      %p37 = scmp.eq.s32.totalorder %s17, 0
      %p38 = por %p36, %p37
      %p39 = scmp.ne.s32.totalorder %s25, %s26
      %p40 = scmp.eq.s32.totalorder %s18, 1
      %p41 = por %p39, %p40
      %p43 = scmp.ne.s32.totalorder %s26, %s42
      %p44 = scmp.eq.s32.totalorder %s18, 0
      %p45 = por %p43, %p44
      %s47 = sadd.s32 %s46, 1
      %p50 = scmp.eq.s32.totalorder %s12, 1
      %p51 = scmp.ne.s32.totalorder %s46, %s48
      %p52 = scmp.eq.s32.totalorder %s12, 0
      %p53 = por %p51, %p52
      %p54 = scmp.ne.s32.totalorder %s46, %s48
      %p55 = scmp.eq.s32.totalorder %s17, 1
      %p56 = por %p54, %p55
      %p57 = scmp.ne.s32.totalorder %s48, %s49
      %p58 = scmp.eq.s32.totalorder %s17, 0
      %p59 = por %p57, %p58
      %p60 = scmp.ne.s32.totalorder %s48, %s49
      %p61 = scmp.eq.s32.totalorder %s18, 1
      %p62 = por %p60, %p61
      %p64 = scmp.ne.s32.totalorder %s49, %s63
      %p65 = scmp.eq.s32.totalorder %s18, 0
      %p66 = por %p64, %p65
      %s68 = sadd.s32 %s67, 1
      %p71 = scmp.eq.s32.totalorder %s12, 1
      %p72 = scmp.ne.s32.totalorder %s67, %s69
      %p73 = scmp.eq.s32.totalorder %s12, 0
      %p74 = por %p72, %p73
      %p75 = scmp.ne.s32.totalorder %s67, %s69
      %p76 = scmp.eq.s32.totalorder %s17, 1
      %p77 = por %p75, %p76
      %p78 = scmp.ne.s32.totalorder %s69, %s70
      %p79 = scmp.eq.s32.totalorder %s17, 0
      %p80 = por %p78, %p79
      %p81 = scmp.ne.s32.totalorder %s69, %s70
      %p82 = scmp.eq.s32.totalorder %s18, 1
      %p83 = por %p81, %p82
      %p85 = scmp.ne.s32.totalorder %s70, %s84
      %p86 = scmp.eq.s32.totalorder %s18, 0
      %p87 = por %p85, %p86
      %s88 = ssub.s32 %s12, %s19
      %p89 = scmp.eq.s32.totalorder %s88, 0
      %s91 = sadd.s32 %s90, 1
      %s92 = scalar_select %p89, %s90, %s91
      %p95 = pneg %p89
      %p96 = scmp.eq.s32.totalorder %s12, 1
      %p97 = por %p95, %p96
      %p98 = scmp.ne.s32.totalorder %s90, %s93
      %p99 = scmp.eq.s32.totalorder %s12, 0
      %p100 = por %p98, %p99
      %p101 = scmp.ne.s32.totalorder %s90, %s93
      %p102 = scmp.eq.s32.totalorder %s17, 1
      %p103 = por %p101, %p102
      %p104 = scmp.ne.s32.totalorder %s93, %s94
      %p105 = scmp.eq.s32.totalorder %s17, 0
      %p106 = por %p104, %p105
      %p107 = scmp.ne.s32.totalorder %s93, %s94
      %p108 = scmp.eq.s32.totalorder %s18, 1
      %p109 = por %p107, %p108
      %p111 = scmp.ne.s32.totalorder %s94, %s110
      %p112 = scmp.eq.s32.totalorder %s18, 0
      %p113 = por %p111, %p112
      %p114 = scmp.le.s32.totalorder 1, %s12
      %p115 = scmp.lt.s32.totalorder %s12, 3
      %p116 = pnand %p114, %p115
      %p117 = pneg %p116
      // Predicated region
      $region9: #{tpu_custom_call.1} parent=5 // pred_check
        _
      $region10: #{tpu_custom_call.1} parent=5 // pred_check_branch
        %119 = sbr.rel (%p116) target = $region12
      $region11: #{tpu_custom_call.1} parent=5 // pred_region
        %s120 = ssub.s32 %s12, 1
        // Predicated region
        $region13: #{tpu_custom_call.1} parent=11 // pred_check
          %p121 = pneg %p59
        $region14: #{tpu_custom_call.1} parent=11 // pred_check_branch
          %123 = sbr.rel (%p121) target = $region16
        $region15: #{tpu_custom_call.1} parent=11 // pred_region
          _
        $region16: #{tpu_custom_call.1} parent=11 // pred_fallthru
          _
        // Predicated region
        $region17: #{tpu_custom_call.1} parent=11 // pred_check
          %p124 = pneg %p80
        $region18: #{tpu_custom_call.1} parent=11 // pred_check_branch
          %126 = sbr.rel (%p124) target = $region20
        $region19: #{tpu_custom_call.1} parent=11 // pred_region
          _
        $region20: #{tpu_custom_call.1} parent=11 // pred_fallthru
          _
      $region12: #{tpu_custom_call.1} parent=5 // pred_fallthru
        _
      %p127 = scmp.lt.s32.totalorder %s12, 2
      // Predicated region
      $region21: #{tpu_custom_call.1} parent=5 // pred_check
        %p128 = pneg %p127
      $region22: #{tpu_custom_call.1} parent=5 // pred_check_branch
        %130 = sbr.rel (%p128) target = $region24
      $region23: #{tpu_custom_call.1} parent=5 // pred_region
        // Predicated region
        $region25: #{tpu_custom_call.1} parent=23 // pred_check
          %p131 = pneg %p32
        $region26: #{tpu_custom_call.1} parent=23 // pred_check_branch
          %133 = sbr.rel (%p131) target = $region28
        $region27: #{tpu_custom_call.1} parent=23 // pred_region
          %p134 = scmp.lt.s32.totalorder %s12, 1
          %s135 = scalar_select %p134, %s12, 1
          %s136 = smul.addr %s135, 54
          %s137 = smul.addr %s136, 8
          %s138 = scalar_lea.vmem %s0, %s137
        $region28: #{tpu_custom_call.1} parent=23 // pred_fallthru
          _
      $region24: #{tpu_custom_call.1} parent=5 // pred_fallthru
        _
      %p139 = scmp.le.s32.totalorder 1, %s12
      %p140 = scmp.lt.s32.totalorder %s12, 3
      %p141 = pnand %p139, %p140
      %p142 = pneg %p141
      // Predicated region
      $region29: #{tpu_custom_call.1} parent=5 // pred_check
        _
      $region30: #{tpu_custom_call.1} parent=5 // pred_check_branch
        %144 = sbr.rel (%p141) target = $region32
      $region31: #{tpu_custom_call.1} parent=5 // pred_region
        %s145 = ssub.s32 %s12, 1
        %p146 = scmp.lt.s32.totalorder %s17, 1
        %s147 = scalar_select %p146, %s17, 1
        %s148 = smul.addr %s147, 54
        %s149 = smul.addr %s148, 8
        %s150 = scalar_lea.vmem %s0, %s149
        %p151 = pneg %p38
        %p152 = pneg %p35
        %p153 = pneg %p59
        %p154 = pneg %p56
        %p155 = pneg %p80
        %p156 = pneg %p77
        %p157 = pneg %p106
        %p158 = pneg %p103
        %s159 = sand.u32 %s93, 1
        %s160 = scalar_lea.sflag [#allocation3], %s159
        %s161 = sand.u32 %s93, 1
        %s162 = smul.addr %s161, 256
        %s163 = scalar_lea.vmem [#allocation2], %s162
        %p164 = scmp.lt.s32.totalorder %s17, 1
        %s165 = scalar_select %p164, %s17, 1
        %s166 = smul.addr %s165, 54
        %s167 = smul.addr %s166, 8
        %s168 = scalar_lea.vmem %s0, %s167
        %v169 = vld [vmem:[%s1] sm:$0xff]
        %v170 = vld [vmem:[%s1 + $0x8] sm:$0xff]
        %v171 = vld [vmem:[%s1 + $0x10] sm:$0xff]
        %v172 = vld [vmem:[%s1 + $0x18] sm:$0xff]
        %v173 = vld [vmem:[%s1 + $0x20] sm:$0xff]
        %v174 = vld [vmem:[%s1 + $0x28] sm:$0xff]
        %v175 = vld [vmem:[%s1 + $0x30] sm:$0xff]
        %v176 = vld [vmem:[%s1 + $0x38] sm:$0xff]
        %v177 = vld [vmem:[%s1 + $0x40] sm:$0xff]
        %v178 = vld [vmem:[%s1 + $0x48] sm:$0xff]
        %v179 = vld [vmem:[%s1 + $0x50] sm:$0xff]
        %v180 = vld [vmem:[%s1 + $0x58] sm:$0xff]
        %v181 = vld [vmem:[%s1 + $0x60] sm:$0xff]
        %v182 = vld [vmem:[%s1 + $0x68] sm:$0xff]
        %v183 = vld [vmem:[%s1 + $0x70] sm:$0xff]
        %v184 = vld [vmem:[%s1 + $0x78] sm:$0xff]
        %v185 = vld [vmem:[%s1 + $0x80] sm:$0xff]
        %v186 = vld [vmem:[%s1 + $0x88] sm:$0xff]
        %v187 = vld [vmem:[%s2] sm:$0x1]
        %v188 = vld [vmem:[%s168] sm:$0xff]
        %v189 = vld [vmem:[%s168 + $0x8] sm:$0xff]
        %s190 = scalar_lea.vmem %s168, 24
        %v191 = vld [vmem:[%s190] sm:$0xff]
        %v192 = vld [vmem:[%s190 + $0x8] sm:$0xff]
        %s193 = scalar_lea.vmem %s168, 48
        %v194 = vld [vmem:[%s193] sm:$0xff]
        %v195 = vld [vmem:[%s193 + $0x8] sm:$0xff]
        %s196 = scalar_lea.vmem %s168, 72
        %v197 = vld [vmem:[%s196] sm:$0xff]
        %v198 = vld [vmem:[%s196 + $0x8] sm:$0xff]
        %s199 = scalar_lea.vmem %s168, 96
        %v200 = vld [vmem:[%s199] sm:$0xff]
        %v201 = vld [vmem:[%s199 + $0x8] sm:$0xff]
        %s202 = scalar_lea.vmem %s168, 120
        %v203 = vld [vmem:[%s202] sm:$0xff]
        %v204 = vld [vmem:[%s202 + $0x8] sm:$0xff]
        %s205 = scalar_lea.vmem %s168, 144
        %v206 = vld [vmem:[%s205] sm:$0xff]
        %v207 = vld [vmem:[%s205 + $0x8] sm:$0xff]
        %s208 = scalar_lea.vmem %s168, 168
        %v209 = vld [vmem:[%s208] sm:$0xff]
        %v210 = vld [vmem:[%s208 + $0x8] sm:$0xff]
        %v211 = vld [vmem:[%s168 + $0x1] sm:$0xff]
        %v212 = vld [vmem:[%s168 + $0x9] sm:$0xff]
        %v213 = vld [vmem:[%s190 + $0x1] sm:$0xff]
        %v214 = vld [vmem:[%s190 + $0x9] sm:$0xff]
        %v215 = vld [vmem:[%s193 + $0x1] sm:$0xff]
        %v216 = vld [vmem:[%s193 + $0x9] sm:$0xff]
        %v217 = vld [vmem:[%s196 + $0x1] sm:$0xff]
        %v218 = vld [vmem:[%s196 + $0x9] sm:$0xff]
        %v219 = vld [vmem:[%s199 + $0x1] sm:$0xff]
        %v220 = vld [vmem:[%s199 + $0x9] sm:$0xff]
        %v221 = vld [vmem:[%s202 + $0x1] sm:$0xff]
        %v222 = vld [vmem:[%s202 + $0x9] sm:$0xff]
        %v223 = vld [vmem:[%s205 + $0x1] sm:$0xff]
        %v224 = vld [vmem:[%s205 + $0x9] sm:$0xff]
        %v225 = vld [vmem:[%s208 + $0x1] sm:$0xff]
        %v226 = vld [vmem:[%s208 + $0x9] sm:$0xff]
        %v227 = vld [vmem:[%s168 + $0x2] sm:$0xff]
        %v228 = vld [vmem:[%s168 + $0xa] sm:$0xff]
        %v229 = vld [vmem:[%s190 + $0x2] sm:$0xff]
        %v230 = vld [vmem:[%s190 + $0xa] sm:$0xff]
        %v231 = vld [vmem:[%s193 + $0x2] sm:$0xff]
        %v232 = vld [vmem:[%s193 + $0xa] sm:$0xff]
        %v233 = vld [vmem:[%s196 + $0x2] sm:$0xff]
        %v234 = vld [vmem:[%s196 + $0xa] sm:$0xff]
        %v235 = vld [vmem:[%s199 + $0x2] sm:$0xff]
        %v236 = vld [vmem:[%s199 + $0xa] sm:$0xff]
        %v237 = vld [vmem:[%s202 + $0x2] sm:$0xff]
        %v238 = vld [vmem:[%s202 + $0xa] sm:$0xff]
        %v239 = vld [vmem:[%s205 + $0x2] sm:$0xff]
        %v240 = vld [vmem:[%s205 + $0xa] sm:$0xff]
        %v241 = vld [vmem:[%s208 + $0x2] sm:$0xff]
        %v242 = vld [vmem:[%s208 + $0xa] sm:$0xff]
        %s243 = scalar_lea.vmem %s168, 192
        %v244 = vld [vmem:[%s243] sm:$0xff]
        %v245 = vld [vmem:[%s243 + $0x8] sm:$0xff]
        %v246 = vld [vmem:[%s243 + $0x1] sm:$0xff]
        %v247 = vld [vmem:[%s243 + $0x9] sm:$0xff]
        %v248 = vld [vmem:[%s243 + $0x2] sm:$0xff]
        %v249 = vld [vmem:[%s243 + $0xa] sm:$0xff]
        %s250 = scalar_lea.vmem %s168, 216
        %v251 = vld [vmem:[%s250] sm:$0xff]
        %v252 = vld [vmem:[%s250 + $0x8] sm:$0xff]
        %v253 = vld [vmem:[%s250 + $0x1] sm:$0xff]
        %v254 = vld [vmem:[%s250 + $0x9] sm:$0xff]
        %v255 = vld [vmem:[%s250 + $0x2] sm:$0xff]
        %v256 = vld [vmem:[%s250 + $0xa] sm:$0xff]
        %273 = vrot.lane.b32.xlu0 %v211, 16
        %v274 = vpop.permute.xlu0 %273
        %275 = vrot.lane.b32.xlu0 %v212, 16
        %v276 = vpop.permute.xlu0 %275
        %277 = vrot.lane.b32.xlu0 %v213, 16
        %v278 = vpop.permute.xlu0 %277
        %279 = vrot.lane.b32.xlu0 %v214, 16
        %v280 = vpop.permute.xlu0 %279
        %281 = vrot.lane.b32.xlu0 %v215, 16
        %v282 = vpop.permute.xlu0 %281
        %283 = vrot.lane.b32.xlu0 %v216, 16
        %v284 = vpop.permute.xlu0 %283
        %285 = vrot.lane.b32.xlu0 %v217, 16
        %v286 = vpop.permute.xlu0 %285
        %287 = vrot.lane.b32.xlu0 %v218, 16
        %v288 = vpop.permute.xlu0 %287
        %289 = vrot.lane.b32.xlu0 %v219, 16
        %v290 = vpop.permute.xlu0 %289
        %291 = vrot.lane.b32.xlu0 %v220, 16
        %v292 = vpop.permute.xlu0 %291
        %293 = vrot.lane.b32.xlu0 %v221, 16
        %v294 = vpop.permute.xlu0 %293
        %295 = vrot.lane.b32.xlu0 %v222, 16
        %v296 = vpop.permute.xlu0 %295
        %297 = vrot.lane.b32.xlu0 %v223, 16
        %v298 = vpop.permute.xlu0 %297
        %299 = vrot.lane.b32.xlu0 %v224, 16
        %v300 = vpop.permute.xlu0 %299
        %301 = vrot.lane.b32.xlu0 %v225, 16
        %v302 = vpop.permute.xlu0 %301
        %303 = vrot.lane.b32.xlu0 %v226, 16
        %v304 = vpop.permute.xlu0 %303
        %337 = vrot.lane.b32.xlu0 %v227, 32
        %v338 = vpop.permute.xlu0 %337
        %339 = vrot.lane.b32.xlu0 %v228, 32
        %v340 = vpop.permute.xlu0 %339
        %341 = vrot.lane.b32.xlu0 %v229, 32
        %v342 = vpop.permute.xlu0 %341
        %343 = vrot.lane.b32.xlu0 %v230, 32
        %v344 = vpop.permute.xlu0 %343
        %345 = vrot.lane.b32.xlu0 %v231, 32
        %v346 = vpop.permute.xlu0 %345
        %347 = vrot.lane.b32.xlu0 %v232, 32
        %v348 = vpop.permute.xlu0 %347
        %349 = vrot.lane.b32.xlu0 %v233, 32
        %v350 = vpop.permute.xlu0 %349
        %351 = vrot.lane.b32.xlu0 %v234, 32
        %v352 = vpop.permute.xlu0 %351
        %353 = vrot.lane.b32.xlu0 %v235, 32
        %v354 = vpop.permute.xlu0 %353
        %355 = vrot.lane.b32.xlu0 %v236, 32
        %v356 = vpop.permute.xlu0 %355
        %357 = vrot.lane.b32.xlu0 %v237, 32
        %v358 = vpop.permute.xlu0 %357
        %359 = vrot.lane.b32.xlu0 %v238, 32
        %v360 = vpop.permute.xlu0 %359
        %361 = vrot.lane.b32.xlu0 %v239, 32
        %v362 = vpop.permute.xlu0 %361
        %363 = vrot.lane.b32.xlu0 %v240, 32
        %v364 = vpop.permute.xlu0 %363
        %365 = vrot.lane.b32.xlu0 %v241, 32
        %v366 = vpop.permute.xlu0 %365
        %367 = vrot.lane.b32.xlu0 %v242, 32
        %v368 = vpop.permute.xlu0 %367
        %401 = vrot.lane.b32.xlu0 %v191, 48
        %v402 = vpop.permute.xlu0 %401
        %403 = vrot.lane.b32.xlu0 %v192, 48
        %v404 = vpop.permute.xlu0 %403
        %405 = vrot.lane.b32.xlu0 %v194, 48
        %v406 = vpop.permute.xlu0 %405
        %407 = vrot.lane.b32.xlu0 %v195, 48
        %v408 = vpop.permute.xlu0 %407
        %409 = vrot.lane.b32.xlu0 %v197, 48
        %v410 = vpop.permute.xlu0 %409
        %411 = vrot.lane.b32.xlu0 %v198, 48
        %v412 = vpop.permute.xlu0 %411
        %413 = vrot.lane.b32.xlu0 %v200, 48
        %v414 = vpop.permute.xlu0 %413
        %415 = vrot.lane.b32.xlu0 %v201, 48
        %v416 = vpop.permute.xlu0 %415
        %417 = vrot.lane.b32.xlu0 %v203, 48
        %v418 = vpop.permute.xlu0 %417
        %419 = vrot.lane.b32.xlu0 %v204, 48
        %v420 = vpop.permute.xlu0 %419
        %421 = vrot.lane.b32.xlu0 %v206, 48
        %v422 = vpop.permute.xlu0 %421
        %423 = vrot.lane.b32.xlu0 %v207, 48
        %v424 = vpop.permute.xlu0 %423
        %425 = vrot.lane.b32.xlu0 %v209, 48
        %v426 = vpop.permute.xlu0 %425
        %427 = vrot.lane.b32.xlu0 %v210, 48
        %v428 = vpop.permute.xlu0 %427
        %429 = vrot.lane.b32.xlu0 %v244, 48
        %v430 = vpop.permute.xlu0 %429
        %431 = vrot.lane.b32.xlu0 %v245, 48
        %v432 = vpop.permute.xlu0 %431
        %451 = vrot.lane.b32.xlu0 %v213, 64
        %v452 = vpop.permute.xlu0 %451
        %453 = vrot.lane.b32.xlu0 %v214, 64
        %v454 = vpop.permute.xlu0 %453
        %455 = vrot.lane.b32.xlu0 %v215, 64
        %v456 = vpop.permute.xlu0 %455
        %457 = vrot.lane.b32.xlu0 %v216, 64
        %v458 = vpop.permute.xlu0 %457
        %459 = vrot.lane.b32.xlu0 %v217, 64
        %v460 = vpop.permute.xlu0 %459
        %461 = vrot.lane.b32.xlu0 %v218, 64
        %v462 = vpop.permute.xlu0 %461
        %463 = vrot.lane.b32.xlu0 %v219, 64
        %v464 = vpop.permute.xlu0 %463
        %465 = vrot.lane.b32.xlu0 %v220, 64
        %v466 = vpop.permute.xlu0 %465
        %467 = vrot.lane.b32.xlu0 %v221, 64
        %v468 = vpop.permute.xlu0 %467
        %469 = vrot.lane.b32.xlu0 %v222, 64
        %v470 = vpop.permute.xlu0 %469
        %471 = vrot.lane.b32.xlu0 %v223, 64
        %v472 = vpop.permute.xlu0 %471
        %473 = vrot.lane.b32.xlu0 %v224, 64
        %v474 = vpop.permute.xlu0 %473
        %475 = vrot.lane.b32.xlu0 %v225, 64
        %v476 = vpop.permute.xlu0 %475
        %477 = vrot.lane.b32.xlu0 %v226, 64
        %v478 = vpop.permute.xlu0 %477
        %479 = vrot.lane.b32.xlu0 %v246, 64
        %v480 = vpop.permute.xlu0 %479
        %481 = vrot.lane.b32.xlu0 %v247, 64
        %v482 = vpop.permute.xlu0 %481
        %501 = vrot.lane.b32.xlu0 %v229, 80
        %v502 = vpop.permute.xlu0 %501
        %503 = vrot.lane.b32.xlu0 %v230, 80
        %v504 = vpop.permute.xlu0 %503
        %505 = vrot.lane.b32.xlu0 %v231, 80
        %v506 = vpop.permute.xlu0 %505
        %507 = vrot.lane.b32.xlu0 %v232, 80
        %v508 = vpop.permute.xlu0 %507
        %509 = vrot.lane.b32.xlu0 %v233, 80
        %v510 = vpop.permute.xlu0 %509
        %511 = vrot.lane.b32.xlu0 %v234, 80
        %v512 = vpop.permute.xlu0 %511
        %513 = vrot.lane.b32.xlu0 %v235, 80
        %v514 = vpop.permute.xlu0 %513
        %515 = vrot.lane.b32.xlu0 %v236, 80
        %v516 = vpop.permute.xlu0 %515
        %517 = vrot.lane.b32.xlu0 %v237, 80
        %v518 = vpop.permute.xlu0 %517
        %519 = vrot.lane.b32.xlu0 %v238, 80
        %v520 = vpop.permute.xlu0 %519
        %521 = vrot.lane.b32.xlu0 %v239, 80
        %v522 = vpop.permute.xlu0 %521
        %523 = vrot.lane.b32.xlu0 %v240, 80
        %v524 = vpop.permute.xlu0 %523
        %525 = vrot.lane.b32.xlu0 %v241, 80
        %v526 = vpop.permute.xlu0 %525
        %527 = vrot.lane.b32.xlu0 %v242, 80
        %v528 = vpop.permute.xlu0 %527
        %529 = vrot.lane.b32.xlu0 %v248, 80
        %v530 = vpop.permute.xlu0 %529
        %531 = vrot.lane.b32.xlu0 %v249, 80
        %v532 = vpop.permute.xlu0 %531
        %551 = vrot.lane.b32.xlu0 %v194, 96
        %v552 = vpop.permute.xlu0 %551
        %553 = vrot.lane.b32.xlu0 %v195, 96
        %v554 = vpop.permute.xlu0 %553
        %555 = vrot.lane.b32.xlu0 %v197, 96
        %v556 = vpop.permute.xlu0 %555
        %557 = vrot.lane.b32.xlu0 %v198, 96
        %v558 = vpop.permute.xlu0 %557
        %559 = vrot.lane.b32.xlu0 %v200, 96
        %v560 = vpop.permute.xlu0 %559
        %561 = vrot.lane.b32.xlu0 %v201, 96
        %v562 = vpop.permute.xlu0 %561
        %563 = vrot.lane.b32.xlu0 %v203, 96
        %v564 = vpop.permute.xlu0 %563
        %565 = vrot.lane.b32.xlu0 %v204, 96
        %v566 = vpop.permute.xlu0 %565
        %567 = vrot.lane.b32.xlu0 %v206, 96
        %v568 = vpop.permute.xlu0 %567
        %569 = vrot.lane.b32.xlu0 %v207, 96
        %v570 = vpop.permute.xlu0 %569
        %571 = vrot.lane.b32.xlu0 %v209, 96
        %v572 = vpop.permute.xlu0 %571
        %573 = vrot.lane.b32.xlu0 %v210, 96
        %v574 = vpop.permute.xlu0 %573
        %575 = vrot.lane.b32.xlu0 %v244, 96
        %v576 = vpop.permute.xlu0 %575
        %577 = vrot.lane.b32.xlu0 %v245, 96
        %v578 = vpop.permute.xlu0 %577
        %579 = vrot.lane.b32.xlu0 %v251, 96
        %v580 = vpop.permute.xlu0 %579
        %581 = vrot.lane.b32.xlu0 %v252, 96
        %v582 = vpop.permute.xlu0 %581
        %601 = vrot.lane.b32.xlu0 %v215, 112
        %v602 = vpop.permute.xlu0 %601
        %603 = vrot.lane.b32.xlu0 %v216, 112
        %v604 = vpop.permute.xlu0 %603
        %605 = vrot.lane.b32.xlu0 %v217, 112
        %v606 = vpop.permute.xlu0 %605
        %607 = vrot.lane.b32.xlu0 %v218, 112
        %v608 = vpop.permute.xlu0 %607
        %609 = vrot.lane.b32.xlu0 %v219, 112
        %v610 = vpop.permute.xlu0 %609
        %611 = vrot.lane.b32.xlu0 %v220, 112
        %v612 = vpop.permute.xlu0 %611
        %613 = vrot.lane.b32.xlu0 %v221, 112
        %v614 = vpop.permute.xlu0 %613
        %615 = vrot.lane.b32.xlu0 %v222, 112
        %v616 = vpop.permute.xlu0 %615
        %617 = vrot.lane.b32.xlu0 %v223, 112
        %v618 = vpop.permute.xlu0 %617
        %619 = vrot.lane.b32.xlu0 %v224, 112
        %v620 = vpop.permute.xlu0 %619
        %621 = vrot.lane.b32.xlu0 %v225, 112
        %v622 = vpop.permute.xlu0 %621
        %623 = vrot.lane.b32.xlu0 %v226, 112
        %v624 = vpop.permute.xlu0 %623
        %625 = vrot.lane.b32.xlu0 %v246, 112
        %v626 = vpop.permute.xlu0 %625
        %627 = vrot.lane.b32.xlu0 %v247, 112
        %v628 = vpop.permute.xlu0 %627
        %629 = vrot.lane.b32.xlu0 %v253, 112
        %v630 = vpop.permute.xlu0 %629
        %631 = vrot.lane.b32.xlu0 %v254, 112
        %v632 = vpop.permute.xlu0 %631
        %vm649 = vcmask 130048
        %v650 = vsel %vm649, %v188, %v274
        %v651 = vsel %vm649, %v189, %v276
        %v652 = vsel %vm649, %v191, %v278
        %v653 = vsel %vm649, %v192, %v280
        %v654 = vsel %vm649, %v194, %v282
        %v655 = vsel %vm649, %v195, %v284
        %v656 = vsel %vm649, %v197, %v286
        %v657 = vsel %vm649, %v198, %v288
        %v658 = vsel %vm649, %v200, %v290
        %v659 = vsel %vm649, %v201, %v292
        %v660 = vsel %vm649, %v203, %v294
        %v661 = vsel %vm649, %v204, %v296
        %v662 = vsel %vm649, %v206, %v298
        %v663 = vsel %vm649, %v207, %v300
        %v664 = vsel %vm649, %v209, %v302
        %v665 = vsel %vm649, %v210, %v304
        %vm666 = vcmask 261120
        %v667 = vsel %vm666, %v650, %v338
        %v668 = vsel %vm666, %v651, %v340
        %v669 = vsel %vm666, %v652, %v342
        %v670 = vsel %vm666, %v653, %v344
        %v671 = vsel %vm666, %v654, %v346
        %v672 = vsel %vm666, %v655, %v348
        %v673 = vsel %vm666, %v656, %v350
        %v674 = vsel %vm666, %v657, %v352
        %v675 = vsel %vm666, %v658, %v354
        %v676 = vsel %vm666, %v659, %v356
        %v677 = vsel %vm666, %v660, %v358
        %v678 = vsel %vm666, %v661, %v360
        %v679 = vsel %vm666, %v662, %v362
        %v680 = vsel %vm666, %v663, %v364
        %v681 = vsel %vm666, %v664, %v366
        %v682 = vsel %vm666, %v665, %v368
        %vm683 = vcmask 392192
        %v684 = vsel %vm683, %v667, %v402
        %v685 = vsel %vm683, %v668, %v404
        %v686 = vsel %vm683, %v669, %v406
        %v687 = vsel %vm683, %v670, %v408
        %v688 = vsel %vm683, %v671, %v410
        %v689 = vsel %vm683, %v672, %v412
        %v690 = vsel %vm683, %v673, %v414
        %v691 = vsel %vm683, %v674, %v416
        %v692 = vsel %vm683, %v675, %v418
        %v693 = vsel %vm683, %v676, %v420
        %v694 = vsel %vm683, %v677, %v422
        %v695 = vsel %vm683, %v678, %v424
        %v696 = vsel %vm683, %v679, %v426
        %v697 = vsel %vm683, %v680, %v428
        %v698 = vsel %vm683, %v681, %v430
        %v699 = vsel %vm683, %v682, %v432
        %vm700 = vcmask 523264
        %v701 = vsel %vm700, %v684, %v452
        %v702 = vsel %vm700, %v685, %v454
        %v703 = vsel %vm700, %v686, %v456
        %v704 = vsel %vm700, %v687, %v458
        %v705 = vsel %vm700, %v688, %v460
        %v706 = vsel %vm700, %v689, %v462
        %v707 = vsel %vm700, %v690, %v464
        %v708 = vsel %vm700, %v691, %v466
        %v709 = vsel %vm700, %v692, %v468
        %v710 = vsel %vm700, %v693, %v470
        %v711 = vsel %vm700, %v694, %v472
        %v712 = vsel %vm700, %v695, %v474
        %v713 = vsel %vm700, %v696, %v476
        %v714 = vsel %vm700, %v697, %v478
        %v715 = vsel %vm700, %v698, %v480
        %v716 = vsel %vm700, %v699, %v482
        %vm717 = vcmask 654336
        %v718 = vsel %vm717, %v701, %v502
        %v719 = vsel %vm717, %v702, %v504
        %v720 = vsel %vm717, %v703, %v506
        %v721 = vsel %vm717, %v704, %v508
        %v722 = vsel %vm717, %v705, %v510
        %v723 = vsel %vm717, %v706, %v512
        %v724 = vsel %vm717, %v707, %v514
        %v725 = vsel %vm717, %v708, %v516
        %v726 = vsel %vm717, %v709, %v518
        %v727 = vsel %vm717, %v710, %v520
        %v728 = vsel %vm717, %v711, %v522
        %v729 = vsel %vm717, %v712, %v524
        %v730 = vsel %vm717, %v713, %v526
        %v731 = vsel %vm717, %v714, %v528
        %v732 = vsel %vm717, %v715, %v530
        %v733 = vsel %vm717, %v716, %v532
        %vm734 = vcmask 785408
        %v735 = vsel %vm734, %v718, %v552
        %v736 = vsel %vm734, %v719, %v554
        %v737 = vsel %vm734, %v720, %v556
        %v738 = vsel %vm734, %v721, %v558
        %v739 = vsel %vm734, %v722, %v560
        %v740 = vsel %vm734, %v723, %v562
        %v741 = vsel %vm734, %v724, %v564
        %v742 = vsel %vm734, %v725, %v566
        %v743 = vsel %vm734, %v726, %v568
        %v744 = vsel %vm734, %v727, %v570
        %v745 = vsel %vm734, %v728, %v572
        %v746 = vsel %vm734, %v729, %v574
        %v747 = vsel %vm734, %v730, %v576
        %v748 = vsel %vm734, %v731, %v578
        %v749 = vsel %vm734, %v732, %v580
        %v750 = vsel %vm734, %v733, %v582
        %vm751 = vcmask 916480
        %v752 = vsel %vm751, %v735, %v602
        %v753 = vsel %vm751, %v736, %v604
        %v754 = vsel %vm751, %v737, %v606
        %v755 = vsel %vm751, %v738, %v608
        %v756 = vsel %vm751, %v739, %v610
        %v757 = vsel %vm751, %v740, %v612
        %v758 = vsel %vm751, %v741, %v614
        %v759 = vsel %vm751, %v742, %v616
        %v760 = vsel %vm751, %v743, %v618
        %v761 = vsel %vm751, %v744, %v620
        %v762 = vsel %vm751, %v745, %v622
        %v763 = vsel %vm751, %v746, %v624
        %v764 = vsel %vm751, %v747, %v626
        %v765 = vsel %vm751, %v748, %v628
        %v766 = vsel %vm751, %v749, %v630
        %v767 = vsel %vm751, %v750, %v632
        %v769 = vperm.slane %v187, 0
        %v771 = vsel %vm649, %v231, 0
        %v773 = vsel %vm649, %v232, 0
        %v775 = vsel %vm649, %v233, 0
        %v777 = vsel %vm649, %v234, 0
        %v779 = vsel %vm649, %v235, 0
        %v781 = vsel %vm649, %v236, 0
        %v783 = vsel %vm649, %v237, 0
        %v785 = vsel %vm649, %v238, 0
        %v787 = vsel %vm649, %v239, 0
        %v789 = vsel %vm649, %v240, 0
        %v791 = vsel %vm649, %v241, 0
        %v793 = vsel %vm649, %v242, 0
        %v795 = vsel %vm649, %v248, 0
        %v797 = vsel %vm649, %v249, 0
        %v800 = vsel %vm649, %v255, 0
        %v803 = vsel %vm649, %v256, 0
        %805 = vmatpush.msra.mxu0 %v184
        %806 = vmatpush.msra.mxu0 %v183
        %807 = vmatpush.msra.mxu0 %v182
        %808 = vmatpush.msra.mxu0 %v181
        %809 = vmatpush.msra.mxu0 %v180
        %810 = vmatpush.msra.mxu0 %v179
        %811 = vmatpush.msra.mxu0 %v178
        %812 = vmatpush.msra.mxu0 %v177
        %813 = vmatpush.msra.mxu0 %v176
        %814 = vmatpush.msra.mxu0 %v175
        %815 = vmatpush.msra.mxu0 %v174
        %816 = vmatpush.msra.mxu0 %v173
        %817 = vmatpush.msra.mxu0 %v172
        %818 = vmatpush.msra.mxu0 %v171
        %819 = vmatpush.msra.mxu0 %v170
        %820 = vmatpush.msra.mxu0 %v169
        %821 = vmatmul.f32.gmra.mxu0 %v752
        %v822 = vpop.f32.mrf.mxu0
        %v823 = vadd.f32 %v769, %v822
        %824 = vmatmul.f32.gmra.mxu0 %v753
        %v825 = vpop.f32.mrf.mxu0
        %v826 = vadd.f32 %v769, %v825
        %827 = vmatmul.f32.gmra.mxu0 %v754
        %v828 = vpop.f32.mrf.mxu0
        %v829 = vadd.f32 %v769, %v828
        %830 = vmatmul.f32.gmra.mxu0 %v755
        %v831 = vpop.f32.mrf.mxu0
        %v832 = vadd.f32 %v769, %v831
        %833 = vmatmul.f32.gmra.mxu0 %v756
        %v834 = vpop.f32.mrf.mxu0
        %v835 = vadd.f32 %v769, %v834
        %836 = vmatmul.f32.gmra.mxu0 %v757
        %v837 = vpop.f32.mrf.mxu0
        %v838 = vadd.f32 %v769, %v837
        %839 = vmatmul.f32.gmra.mxu0 %v758
        %v840 = vpop.f32.mrf.mxu0
        %v841 = vadd.f32 %v769, %v840
        %842 = vmatmul.f32.gmra.mxu0 %v759
        %v843 = vpop.f32.mrf.mxu0
        %v844 = vadd.f32 %v769, %v843
        %845 = vmatmul.f32.gmra.mxu0 %v760
        %v846 = vpop.f32.mrf.mxu0
        %v847 = vadd.f32 %v769, %v846
        %848 = vmatmul.f32.gmra.mxu0 %v761
        %v849 = vpop.f32.mrf.mxu0
        %v850 = vadd.f32 %v769, %v849
        %851 = vmatmul.f32.gmra.mxu0 %v762
        %v852 = vpop.f32.mrf.mxu0
        %v853 = vadd.f32 %v769, %v852
        %854 = vmatmul.f32.gmra.mxu0 %v763
        %v855 = vpop.f32.mrf.mxu0
        %v856 = vadd.f32 %v769, %v855
        %857 = vmatmul.f32.gmra.mxu0 %v764
        %v858 = vpop.f32.mrf.mxu0
        %v859 = vadd.f32 %v769, %v858
        %860 = vmatmul.f32.gmra.mxu0 %v765
        %v861 = vpop.f32.mrf.mxu0
        %v862 = vadd.f32 %v769, %v861
        %863 = vmatmul.f32.gmra.mxu0 %v766
        %v864 = vpop.f32.mrf.mxu0
        %v865 = vadd.f32 %v769, %v864
        %866 = vmatmul.f32.gmra.mxu0 %v767
        %v867 = vpop.f32.mrf.mxu0
        %v868 = vadd.f32 %v769, %v867
        %869 = vdwg.mxu0
        %870 = vmatpush.msra.mxu0 0.0
        %871 = vmatpush.msra.mxu0 0.0
        %872 = vmatpush.msra.mxu0 0.0
        %873 = vmatpush.msra.mxu0 0.0
        %874 = vmatpush.msra.mxu0 0.0
        %875 = vmatpush.msra.mxu0 0.0
        %876 = vmatpush.msra.mxu0 0.0
        %877 = vmatpush.msra.mxu0 0.0
        %878 = vmatpush.msra.mxu0 0.0
        %879 = vmatpush.msra.mxu0 0.0
        %880 = vmatpush.msra.mxu0 0.0
        %881 = vmatpush.msra.mxu0 0.0
        %882 = vmatpush.msra.mxu0 0.0
        %883 = vmatpush.msra.mxu0 0.0
        %884 = vmatpush.msra.mxu0 %v186
        %885 = vmatpush.msra.mxu0 %v185
        %886 = vmatmul.f32.gmra.mxu0 %v771
        %v887 = vpop.f32.mrf.mxu0
        %v888 = vadd.f32 %v823, %v887
        %889 = vmatmul.f32.gmra.mxu0 %v773
        %v890 = vpop.f32.mrf.mxu0
        %v891 = vadd.f32 %v826, %v890
        %892 = vmatmul.f32.gmra.mxu0 %v775
        %v893 = vpop.f32.mrf.mxu0
        %v894 = vadd.f32 %v829, %v893
        %895 = vmatmul.f32.gmra.mxu0 %v777
        %v896 = vpop.f32.mrf.mxu0
        %v897 = vadd.f32 %v832, %v896
        %898 = vmatmul.f32.gmra.mxu0 %v779
        %v899 = vpop.f32.mrf.mxu0
        %v900 = vadd.f32 %v835, %v899
        %901 = vmatmul.f32.gmra.mxu0 %v781
        %v902 = vpop.f32.mrf.mxu0
        %v903 = vadd.f32 %v838, %v902
        %904 = vmatmul.f32.gmra.mxu0 %v783
        %v905 = vpop.f32.mrf.mxu0
        %v906 = vadd.f32 %v841, %v905
        %907 = vmatmul.f32.gmra.mxu0 %v785
        %v908 = vpop.f32.mrf.mxu0
        %v909 = vadd.f32 %v844, %v908
        %910 = vmatmul.f32.gmra.mxu0 %v787
        %v911 = vpop.f32.mrf.mxu0
        %v912 = vadd.f32 %v847, %v911
        %913 = vmatmul.f32.gmra.mxu0 %v789
        %v914 = vpop.f32.mrf.mxu0
        %v915 = vadd.f32 %v850, %v914
        %916 = vmatmul.f32.gmra.mxu0 %v791
        %v917 = vpop.f32.mrf.mxu0
        %v918 = vadd.f32 %v853, %v917
        %919 = vmatmul.f32.gmra.mxu0 %v793
        %v920 = vpop.f32.mrf.mxu0
        %v921 = vadd.f32 %v856, %v920
        %922 = vmatmul.f32.gmra.mxu0 %v795
        %v923 = vpop.f32.mrf.mxu0
        %v924 = vadd.f32 %v859, %v923
        %925 = vmatmul.f32.gmra.mxu0 %v797
        %v926 = vpop.f32.mrf.mxu0
        %v927 = vadd.f32 %v862, %v926
        %928 = vmatmul.f32.gmra.mxu0 %v800
        %v929 = vpop.f32.mrf.mxu0
        %v930 = vadd.f32 %v865, %v929
        %931 = vmatmul.f32.gmra.mxu0 %v803
        %v932 = vpop.f32.mrf.mxu0
        %v933 = vadd.f32 %v868, %v932
        %934 = vdwg.mxu0
        %v935 = vmax.f32 %v888, 0.0
        %v936 = vmax.f32 %v891, 0.0
        %v937 = vmax.f32 %v894, 0.0
        %v938 = vmax.f32 %v897, 0.0
        %v939 = vmax.f32 %v900, 0.0
        %v940 = vmax.f32 %v903, 0.0
        %v941 = vmax.f32 %v906, 0.0
        %v942 = vmax.f32 %v909, 0.0
        %v943 = vmax.f32 %v912, 0.0
        %v944 = vmax.f32 %v915, 0.0
        %v945 = vmax.f32 %v918, 0.0
        %v946 = vmax.f32 %v921, 0.0
        %v947 = vmax.f32 %v924, 0.0
        %v948 = vmax.f32 %v927, 0.0
        %v949 = vmax.f32 %v930, 0.0
        %v950 = vmax.f32 %v933, 0.0
        %951 = vst.msk [vmem:[%s163] sm:$0xff] %vm649, %v935
        %952 = vst.msk [vmem:[%s163 + $0x8] sm:$0xff] %vm649, %v936
        %s953 = scalar_lea.vmem %s163, 16 [#allocation2]
        %954 = vst.msk [vmem:[%s953] sm:$0xff] %vm649, %v937
        %955 = vst.msk [vmem:[%s953 + $0x8] sm:$0xff] %vm649, %v938
        %s956 = scalar_lea.vmem %s163, 32 [#allocation2]
        %957 = vst.msk [vmem:[%s956] sm:$0xff] %vm649, %v939
        %958 = vst.msk [vmem:[%s956 + $0x8] sm:$0xff] %vm649, %v940
        %s959 = scalar_lea.vmem %s163, 48 [#allocation2]
        %960 = vst.msk [vmem:[%s959] sm:$0xff] %vm649, %v941
        %961 = vst.msk [vmem:[%s959 + $0x8] sm:$0xff] %vm649, %v942
        %s962 = scalar_lea.vmem %s163, 64 [#allocation2]
        %963 = vst.msk [vmem:[%s962] sm:$0xff] %vm649, %v943
        %964 = vst.msk [vmem:[%s962 + $0x8] sm:$0xff] %vm649, %v944
        %s965 = scalar_lea.vmem %s163, 80 [#allocation2]
        %966 = vst.msk [vmem:[%s965] sm:$0xff] %vm649, %v945
        %967 = vst.msk [vmem:[%s965 + $0x8] sm:$0xff] %vm649, %v946
        %s968 = scalar_lea.vmem %s163, 96 [#allocation2]
        %969 = vst.msk [vmem:[%s968] sm:$0xff] %vm649, %v947
        %970 = vst.msk [vmem:[%s968 + $0x8] sm:$0xff] %vm649, %v948
        %s971 = scalar_lea.vmem %s163, 112 [#allocation2]
        %972 = vst.msk [vmem:[%s971] sm:$0xff] %vm649, %v949
        %973 = vst.msk [vmem:[%s971 + $0x8] sm:$0xff] %vm649, %v950
        %v974 = vld [vmem:[%s243] sm:$0xff]
        %v975 = vld [vmem:[%s243 + $0x8] sm:$0xff]
        %v976 = vld [vmem:[%s250] sm:$0xff]
        %v977 = vld [vmem:[%s250 + $0x8] sm:$0xff]
        %s978 = scalar_lea.vmem %s168, 240
        %v979 = vld [vmem:[%s978] sm:$0xff]
        %v980 = vld [vmem:[%s978 + $0x8] sm:$0xff]
        %s981 = scalar_lea.vmem %s168, 264
        %v982 = vld [vmem:[%s981] sm:$0xff]
        %v983 = vld [vmem:[%s981 + $0x8] sm:$0xff]
        %s984 = scalar_lea.vmem %s168, 288
        %v985 = vld [vmem:[%s984] sm:$0xff]
        %v986 = vld [vmem:[%s984 + $0x8] sm:$0xff]
        %s987 = scalar_lea.vmem %s168, 312
        %v988 = vld [vmem:[%s987] sm:$0xff]
        %v989 = vld [vmem:[%s987 + $0x8] sm:$0xff]
        %s990 = scalar_lea.vmem %s168, 336
        %v991 = vld [vmem:[%s990] sm:$0xff]
        %v992 = vld [vmem:[%s990 + $0x8] sm:$0xff]
        %s993 = scalar_lea.vmem %s168, 360
        %v994 = vld [vmem:[%s993] sm:$0xff]
        %v995 = vld [vmem:[%s993 + $0x8] sm:$0xff]
        %v996 = vld [vmem:[%s243 + $0x1] sm:$0xff]
        %v997 = vld [vmem:[%s243 + $0x9] sm:$0xff]
        %v998 = vld [vmem:[%s250 + $0x1] sm:$0xff]
        %v999 = vld [vmem:[%s250 + $0x9] sm:$0xff]
        %v1000 = vld [vmem:[%s978 + $0x1] sm:$0xff]
        %v1001 = vld [vmem:[%s978 + $0x9] sm:$0xff]
        %v1002 = vld [vmem:[%s981 + $0x1] sm:$0xff]
        %v1003 = vld [vmem:[%s981 + $0x9] sm:$0xff]
        %v1004 = vld [vmem:[%s984 + $0x1] sm:$0xff]
        %v1005 = vld [vmem:[%s984 + $0x9] sm:$0xff]
        %v1006 = vld [vmem:[%s987 + $0x1] sm:$0xff]
        %v1007 = vld [vmem:[%s987 + $0x9] sm:$0xff]
        %v1008 = vld [vmem:[%s990 + $0x1] sm:$0xff]
        %v1009 = vld [vmem:[%s990 + $0x9] sm:$0xff]
        %v1010 = vld [vmem:[%s993 + $0x1] sm:$0xff]
        %v1011 = vld [vmem:[%s993 + $0x9] sm:$0xff]
        %v1012 = vld [vmem:[%s243 + $0x2] sm:$0xff]
        %v1013 = vld [vmem:[%s243 + $0xa] sm:$0xff]
        %v1014 = vld [vmem:[%s250 + $0x2] sm:$0xff]
        %v1015 = vld [vmem:[%s250 + $0xa] sm:$0xff]
        %v1016 = vld [vmem:[%s978 + $0x2] sm:$0xff]
        %v1017 = vld [vmem:[%s978 + $0xa] sm:$0xff]
        %v1018 = vld [vmem:[%s981 + $0x2] sm:$0xff]
        %v1019 = vld [vmem:[%s981 + $0xa] sm:$0xff]
        %v1020 = vld [vmem:[%s984 + $0x2] sm:$0xff]
        %v1021 = vld [vmem:[%s984 + $0xa] sm:$0xff]
        %v1022 = vld [vmem:[%s987 + $0x2] sm:$0xff]
        %v1023 = vld [vmem:[%s987 + $0xa] sm:$0xff]
        %v1024 = vld [vmem:[%s990 + $0x2] sm:$0xff]
        %v1025 = vld [vmem:[%s990 + $0xa] sm:$0xff]
        %v1026 = vld [vmem:[%s993 + $0x2] sm:$0xff]
        %v1027 = vld [vmem:[%s993 + $0xa] sm:$0xff]
        %s1028 = scalar_lea.vmem %s168, 384
        %v1029 = vld [vmem:[%s1028] sm:$0xff]
        %v1030 = vld [vmem:[%s1028 + $0x8] sm:$0xff]
        %v1031 = vld [vmem:[%s1028 + $0x1] sm:$0xff]
        %v1032 = vld [vmem:[%s1028 + $0x9] sm:$0xff]
        %v1033 = vld [vmem:[%s1028 + $0x2] sm:$0xff]
        %v1034 = vld [vmem:[%s1028 + $0xa] sm:$0xff]
        %s1035 = scalar_lea.vmem %s168, 408
        %v1036 = vld [vmem:[%s1035] sm:$0xff]
        %v1037 = vld [vmem:[%s1035 + $0x8] sm:$0xff]
        %v1038 = vld [vmem:[%s1035 + $0x1] sm:$0xff]
        %v1039 = vld [vmem:[%s1035 + $0x9] sm:$0xff]
        %v1040 = vld [vmem:[%s1035 + $0x2] sm:$0xff]
        %v1041 = vld [vmem:[%s1035 + $0xa] sm:$0xff]
        %1058 = vrot.lane.b32.xlu0 %v996, 16
        %v1059 = vpop.permute.xlu0 %1058
        %1060 = vrot.lane.b32.xlu0 %v997, 16
        %v1061 = vpop.permute.xlu0 %1060
        %1062 = vrot.lane.b32.xlu0 %v998, 16
        %v1063 = vpop.permute.xlu0 %1062
        %1064 = vrot.lane.b32.xlu0 %v999, 16
        %v1065 = vpop.permute.xlu0 %1064
        %1066 = vrot.lane.b32.xlu0 %v1000, 16
        %v1067 = vpop.permute.xlu0 %1066
        %1068 = vrot.lane.b32.xlu0 %v1001, 16
        %v1069 = vpop.permute.xlu0 %1068
        %1070 = vrot.lane.b32.xlu0 %v1002, 16
        %v1071 = vpop.permute.xlu0 %1070
        %1072 = vrot.lane.b32.xlu0 %v1003, 16
        %v1073 = vpop.permute.xlu0 %1072
        %1074 = vrot.lane.b32.xlu0 %v1004, 16
        %v1075 = vpop.permute.xlu0 %1074
        %1076 = vrot.lane.b32.xlu0 %v1005, 16
        %v1077 = vpop.permute.xlu0 %1076
        %1078 = vrot.lane.b32.xlu0 %v1006, 16
        %v1079 = vpop.permute.xlu0 %1078
        %1080 = vrot.lane.b32.xlu0 %v1007, 16
        %v1081 = vpop.permute.xlu0 %1080
        %1082 = vrot.lane.b32.xlu0 %v1008, 16
        %v1083 = vpop.permute.xlu0 %1082
        %1084 = vrot.lane.b32.xlu0 %v1009, 16
        %v1085 = vpop.permute.xlu0 %1084
        %1086 = vrot.lane.b32.xlu0 %v1010, 16
        %v1087 = vpop.permute.xlu0 %1086
        %1088 = vrot.lane.b32.xlu0 %v1011, 16
        %v1089 = vpop.permute.xlu0 %1088
        %1122 = vrot.lane.b32.xlu0 %v1012, 32
        %v1123 = vpop.permute.xlu0 %1122
        %1124 = vrot.lane.b32.xlu0 %v1013, 32
        %v1125 = vpop.permute.xlu0 %1124
        %1126 = vrot.lane.b32.xlu0 %v1014, 32
        %v1127 = vpop.permute.xlu0 %1126
        %1128 = vrot.lane.b32.xlu0 %v1015, 32
        %v1129 = vpop.permute.xlu0 %1128
        %1130 = vrot.lane.b32.xlu0 %v1016, 32
        %v1131 = vpop.permute.xlu0 %1130
        %1132 = vrot.lane.b32.xlu0 %v1017, 32
        %v1133 = vpop.permute.xlu0 %1132
        %1134 = vrot.lane.b32.xlu0 %v1018, 32
        %v1135 = vpop.permute.xlu0 %1134
        %1136 = vrot.lane.b32.xlu0 %v1019, 32
        %v1137 = vpop.permute.xlu0 %1136
        %1138 = vrot.lane.b32.xlu0 %v1020, 32
        %v1139 = vpop.permute.xlu0 %1138
        %1140 = vrot.lane.b32.xlu0 %v1021, 32
        %v1141 = vpop.permute.xlu0 %1140
        %1142 = vrot.lane.b32.xlu0 %v1022, 32
        %v1143 = vpop.permute.xlu0 %1142
        %1144 = vrot.lane.b32.xlu0 %v1023, 32
        %v1145 = vpop.permute.xlu0 %1144
        %1146 = vrot.lane.b32.xlu0 %v1024, 32
        %v1147 = vpop.permute.xlu0 %1146
        %1148 = vrot.lane.b32.xlu0 %v1025, 32
        %v1149 = vpop.permute.xlu0 %1148
        %1150 = vrot.lane.b32.xlu0 %v1026, 32
        %v1151 = vpop.permute.xlu0 %1150
        %1152 = vrot.lane.b32.xlu0 %v1027, 32
        %v1153 = vpop.permute.xlu0 %1152
        %1186 = vrot.lane.b32.xlu0 %v976, 48
        %v1187 = vpop.permute.xlu0 %1186
        %1188 = vrot.lane.b32.xlu0 %v977, 48
        %v1189 = vpop.permute.xlu0 %1188
        %1190 = vrot.lane.b32.xlu0 %v979, 48
        %v1191 = vpop.permute.xlu0 %1190
        %1192 = vrot.lane.b32.xlu0 %v980, 48
        %v1193 = vpop.permute.xlu0 %1192
        %1194 = vrot.lane.b32.xlu0 %v982, 48
        %v1195 = vpop.permute.xlu0 %1194
        %1196 = vrot.lane.b32.xlu0 %v983, 48
        %v1197 = vpop.permute.xlu0 %1196
        %1198 = vrot.lane.b32.xlu0 %v985, 48
        %v1199 = vpop.permute.xlu0 %1198
        %1200 = vrot.lane.b32.xlu0 %v986, 48
        %v1201 = vpop.permute.xlu0 %1200
        %1202 = vrot.lane.b32.xlu0 %v988, 48
        %v1203 = vpop.permute.xlu0 %1202
        %1204 = vrot.lane.b32.xlu0 %v989, 48
        %v1205 = vpop.permute.xlu0 %1204
        %1206 = vrot.lane.b32.xlu0 %v991, 48
        %v1207 = vpop.permute.xlu0 %1206
        %1208 = vrot.lane.b32.xlu0 %v992, 48
        %v1209 = vpop.permute.xlu0 %1208
        %1210 = vrot.lane.b32.xlu0 %v994, 48
        %v1211 = vpop.permute.xlu0 %1210
        %1212 = vrot.lane.b32.xlu0 %v995, 48
        %v1213 = vpop.permute.xlu0 %1212
        %1214 = vrot.lane.b32.xlu0 %v1029, 48
        %v1215 = vpop.permute.xlu0 %1214
        %1216 = vrot.lane.b32.xlu0 %v1030, 48
        %v1217 = vpop.permute.xlu0 %1216
        %1236 = vrot.lane.b32.xlu0 %v998, 64
        %v1237 = vpop.permute.xlu0 %1236
        %1238 = vrot.lane.b32.xlu0 %v999, 64
        %v1239 = vpop.permute.xlu0 %1238
        %1240 = vrot.lane.b32.xlu0 %v1000, 64
        %v1241 = vpop.permute.xlu0 %1240
        %1242 = vrot.lane.b32.xlu0 %v1001, 64
        %v1243 = vpop.permute.xlu0 %1242
        %1244 = vrot.lane.b32.xlu0 %v1002, 64
        %v1245 = vpop.permute.xlu0 %1244
        %1246 = vrot.lane.b32.xlu0 %v1003, 64
        %v1247 = vpop.permute.xlu0 %1246
        %1248 = vrot.lane.b32.xlu0 %v1004, 64
        %v1249 = vpop.permute.xlu0 %1248
        %1250 = vrot.lane.b32.xlu0 %v1005, 64
        %v1251 = vpop.permute.xlu0 %1250
        %1252 = vrot.lane.b32.xlu0 %v1006, 64
        %v1253 = vpop.permute.xlu0 %1252
        %1254 = vrot.lane.b32.xlu0 %v1007, 64
        %v1255 = vpop.permute.xlu0 %1254
        %1256 = vrot.lane.b32.xlu0 %v1008, 64
        %v1257 = vpop.permute.xlu0 %1256
        %1258 = vrot.lane.b32.xlu0 %v1009, 64
        %v1259 = vpop.permute.xlu0 %1258
        %1260 = vrot.lane.b32.xlu0 %v1010, 64
        %v1261 = vpop.permute.xlu0 %1260
        %1262 = vrot.lane.b32.xlu0 %v1011, 64
        %v1263 = vpop.permute.xlu0 %1262
        %1264 = vrot.lane.b32.xlu0 %v1031, 64
        %v1265 = vpop.permute.xlu0 %1264
        %1266 = vrot.lane.b32.xlu0 %v1032, 64
        %v1267 = vpop.permute.xlu0 %1266
        %1286 = vrot.lane.b32.xlu0 %v1014, 80
        %v1287 = vpop.permute.xlu0 %1286
        %1288 = vrot.lane.b32.xlu0 %v1015, 80
        %v1289 = vpop.permute.xlu0 %1288
        %1290 = vrot.lane.b32.xlu0 %v1016, 80
        %v1291 = vpop.permute.xlu0 %1290
        %1292 = vrot.lane.b32.xlu0 %v1017, 80
        %v1293 = vpop.permute.xlu0 %1292
        %1294 = vrot.lane.b32.xlu0 %v1018, 80
        %v1295 = vpop.permute.xlu0 %1294
        %1296 = vrot.lane.b32.xlu0 %v1019, 80
        %v1297 = vpop.permute.xlu0 %1296
        %1298 = vrot.lane.b32.xlu0 %v1020, 80
        %v1299 = vpop.permute.xlu0 %1298
        %1300 = vrot.lane.b32.xlu0 %v1021, 80
        %v1301 = vpop.permute.xlu0 %1300
        %1302 = vrot.lane.b32.xlu0 %v1022, 80
        %v1303 = vpop.permute.xlu0 %1302
        %1304 = vrot.lane.b32.xlu0 %v1023, 80
        %v1305 = vpop.permute.xlu0 %1304
        %1306 = vrot.lane.b32.xlu0 %v1024, 80
        %v1307 = vpop.permute.xlu0 %1306
        %1308 = vrot.lane.b32.xlu0 %v1025, 80
        %v1309 = vpop.permute.xlu0 %1308
        %1310 = vrot.lane.b32.xlu0 %v1026, 80
        %v1311 = vpop.permute.xlu0 %1310
        %1312 = vrot.lane.b32.xlu0 %v1027, 80
        %v1313 = vpop.permute.xlu0 %1312
        %1314 = vrot.lane.b32.xlu0 %v1033, 80
        %v1315 = vpop.permute.xlu0 %1314
        %1316 = vrot.lane.b32.xlu0 %v1034, 80
        %v1317 = vpop.permute.xlu0 %1316
        %1336 = vrot.lane.b32.xlu0 %v979, 96
        %v1337 = vpop.permute.xlu0 %1336
        %1338 = vrot.lane.b32.xlu0 %v980, 96
        %v1339 = vpop.permute.xlu0 %1338
        %1340 = vrot.lane.b32.xlu0 %v982, 96
        %v1341 = vpop.permute.xlu0 %1340
        %1342 = vrot.lane.b32.xlu0 %v983, 96
        %v1343 = vpop.permute.xlu0 %1342
        %1344 = vrot.lane.b32.xlu0 %v985, 96
        %v1345 = vpop.permute.xlu0 %1344
        %1346 = vrot.lane.b32.xlu0 %v986, 96
        %v1347 = vpop.permute.xlu0 %1346
        %1348 = vrot.lane.b32.xlu0 %v988, 96
        %v1349 = vpop.permute.xlu0 %1348
        %1350 = vrot.lane.b32.xlu0 %v989, 96
        %v1351 = vpop.permute.xlu0 %1350
        %1352 = vrot.lane.b32.xlu0 %v991, 96
        %v1353 = vpop.permute.xlu0 %1352
        %1354 = vrot.lane.b32.xlu0 %v992, 96
        %v1355 = vpop.permute.xlu0 %1354
        %1356 = vrot.lane.b32.xlu0 %v994, 96
        %v1357 = vpop.permute.xlu0 %1356
        %1358 = vrot.lane.b32.xlu0 %v995, 96
        %v1359 = vpop.permute.xlu0 %1358
        %1360 = vrot.lane.b32.xlu0 %v1029, 96
        %v1361 = vpop.permute.xlu0 %1360
        %1362 = vrot.lane.b32.xlu0 %v1030, 96
        %v1363 = vpop.permute.xlu0 %1362
        %1364 = vrot.lane.b32.xlu0 %v1036, 96
        %v1365 = vpop.permute.xlu0 %1364
        %1366 = vrot.lane.b32.xlu0 %v1037, 96
        %v1367 = vpop.permute.xlu0 %1366
        %1386 = vrot.lane.b32.xlu0 %v1000, 112
        %v1387 = vpop.permute.xlu0 %1386
        %1388 = vrot.lane.b32.xlu0 %v1001, 112
        %v1389 = vpop.permute.xlu0 %1388
        %1390 = vrot.lane.b32.xlu0 %v1002, 112
        %v1391 = vpop.permute.xlu0 %1390
        %1392 = vrot.lane.b32.xlu0 %v1003, 112
        %v1393 = vpop.permute.xlu0 %1392
        %1394 = vrot.lane.b32.xlu0 %v1004, 112
        %v1395 = vpop.permute.xlu0 %1394
        %1396 = vrot.lane.b32.xlu0 %v1005, 112
        %v1397 = vpop.permute.xlu0 %1396
        %1398 = vrot.lane.b32.xlu0 %v1006, 112
        %v1399 = vpop.permute.xlu0 %1398
        %1400 = vrot.lane.b32.xlu0 %v1007, 112
        %v1401 = vpop.permute.xlu0 %1400
        %1402 = vrot.lane.b32.xlu0 %v1008, 112
        %v1403 = vpop.permute.xlu0 %1402
        %1404 = vrot.lane.b32.xlu0 %v1009, 112
        %v1405 = vpop.permute.xlu0 %1404
        %1406 = vrot.lane.b32.xlu0 %v1010, 112
        %v1407 = vpop.permute.xlu0 %1406
        %1408 = vrot.lane.b32.xlu0 %v1011, 112
        %v1409 = vpop.permute.xlu0 %1408
        %1410 = vrot.lane.b32.xlu0 %v1031, 112
        %v1411 = vpop.permute.xlu0 %1410
        %1412 = vrot.lane.b32.xlu0 %v1032, 112
        %v1413 = vpop.permute.xlu0 %1412
        %1414 = vrot.lane.b32.xlu0 %v1038, 112
        %v1415 = vpop.permute.xlu0 %1414
        %1416 = vrot.lane.b32.xlu0 %v1039, 112
        %v1417 = vpop.permute.xlu0 %1416
        %v1434 = vsel %vm649, %v974, %v1059
        %v1435 = vsel %vm649, %v975, %v1061
        %v1436 = vsel %vm649, %v976, %v1063
        %v1437 = vsel %vm649, %v977, %v1065
        %v1438 = vsel %vm649, %v979, %v1067
        %v1439 = vsel %vm649, %v980, %v1069
        %v1440 = vsel %vm649, %v982, %v1071
        %v1441 = vsel %vm649, %v983, %v1073
        %v1442 = vsel %vm649, %v985, %v1075
        %v1443 = vsel %vm649, %v986, %v1077
        %v1444 = vsel %vm649, %v988, %v1079
        %v1445 = vsel %vm649, %v989, %v1081
        %v1446 = vsel %vm649, %v991, %v1083
        %v1447 = vsel %vm649, %v992, %v1085
        %v1448 = vsel %vm649, %v994, %v1087
        %v1449 = vsel %vm649, %v995, %v1089
        %v1450 = vsel %vm666, %v1434, %v1123
        %v1451 = vsel %vm666, %v1435, %v1125
        %v1452 = vsel %vm666, %v1436, %v1127
        %v1453 = vsel %vm666, %v1437, %v1129
        %v1454 = vsel %vm666, %v1438, %v1131
        %v1455 = vsel %vm666, %v1439, %v1133
        %v1456 = vsel %vm666, %v1440, %v1135
        %v1457 = vsel %vm666, %v1441, %v1137
        %v1458 = vsel %vm666, %v1442, %v1139
        %v1459 = vsel %vm666, %v1443, %v1141
        %v1460 = vsel %vm666, %v1444, %v1143
        %v1461 = vsel %vm666, %v1445, %v1145
        %v1462 = vsel %vm666, %v1446, %v1147
        %v1463 = vsel %vm666, %v1447, %v1149
        %v1464 = vsel %vm666, %v1448, %v1151
        %v1465 = vsel %vm666, %v1449, %v1153
        %v1466 = vsel %vm683, %v1450, %v1187
        %v1467 = vsel %vm683, %v1451, %v1189
        %v1468 = vsel %vm683, %v1452, %v1191
        %v1469 = vsel %vm683, %v1453, %v1193
        %v1470 = vsel %vm683, %v1454, %v1195
        %v1471 = vsel %vm683, %v1455, %v1197
        %v1472 = vsel %vm683, %v1456, %v1199
        %v1473 = vsel %vm683, %v1457, %v1201
        %v1474 = vsel %vm683, %v1458, %v1203
        %v1475 = vsel %vm683, %v1459, %v1205
        %v1476 = vsel %vm683, %v1460, %v1207
        %v1477 = vsel %vm683, %v1461, %v1209
        %v1478 = vsel %vm683, %v1462, %v1211
        %v1479 = vsel %vm683, %v1463, %v1213
        %v1480 = vsel %vm683, %v1464, %v1215
        %v1481 = vsel %vm683, %v1465, %v1217
        %v1482 = vsel %vm700, %v1466, %v1237
        %v1483 = vsel %vm700, %v1467, %v1239
        %v1484 = vsel %vm700, %v1468, %v1241
        %v1485 = vsel %vm700, %v1469, %v1243
        %v1486 = vsel %vm700, %v1470, %v1245
        %v1487 = vsel %vm700, %v1471, %v1247
        %v1488 = vsel %vm700, %v1472, %v1249
        %v1489 = vsel %vm700, %v1473, %v1251
        %v1490 = vsel %vm700, %v1474, %v1253
        %v1491 = vsel %vm700, %v1475, %v1255
        %v1492 = vsel %vm700, %v1476, %v1257
        %v1493 = vsel %vm700, %v1477, %v1259
        %v1494 = vsel %vm700, %v1478, %v1261
        %v1495 = vsel %vm700, %v1479, %v1263
        %v1496 = vsel %vm700, %v1480, %v1265
        %v1497 = vsel %vm700, %v1481, %v1267
        %v1498 = vsel %vm717, %v1482, %v1287
        %v1499 = vsel %vm717, %v1483, %v1289
        %v1500 = vsel %vm717, %v1484, %v1291
        %v1501 = vsel %vm717, %v1485, %v1293
        %v1502 = vsel %vm717, %v1486, %v1295
        %v1503 = vsel %vm717, %v1487, %v1297
        %v1504 = vsel %vm717, %v1488, %v1299
        %v1505 = vsel %vm717, %v1489, %v1301
        %v1506 = vsel %vm717, %v1490, %v1303
        %v1507 = vsel %vm717, %v1491, %v1305
        %v1508 = vsel %vm717, %v1492, %v1307
        %v1509 = vsel %vm717, %v1493, %v1309
        %v1510 = vsel %vm717, %v1494, %v1311
        %v1511 = vsel %vm717, %v1495, %v1313
        %v1512 = vsel %vm717, %v1496, %v1315
        %v1513 = vsel %vm717, %v1497, %v1317
        %v1514 = vsel %vm734, %v1498, %v1337
        %v1515 = vsel %vm734, %v1499, %v1339
        %v1516 = vsel %vm734, %v1500, %v1341
        %v1517 = vsel %vm734, %v1501, %v1343
        %v1518 = vsel %vm734, %v1502, %v1345
        %v1519 = vsel %vm734, %v1503, %v1347
        %v1520 = vsel %vm734, %v1504, %v1349
        %v1521 = vsel %vm734, %v1505, %v1351
        %v1522 = vsel %vm734, %v1506, %v1353
        %v1523 = vsel %vm734, %v1507, %v1355
        %v1524 = vsel %vm734, %v1508, %v1357
        %v1525 = vsel %vm734, %v1509, %v1359
        %v1526 = vsel %vm734, %v1510, %v1361
        %v1527 = vsel %vm734, %v1511, %v1363
        %v1528 = vsel %vm734, %v1512, %v1365
        %v1529 = vsel %vm734, %v1513, %v1367
        %v1530 = vsel %vm751, %v1514, %v1387
        %v1531 = vsel %vm751, %v1515, %v1389
        %v1532 = vsel %vm751, %v1516, %v1391
        %v1533 = vsel %vm751, %v1517, %v1393
        %v1534 = vsel %vm751, %v1518, %v1395
        %v1535 = vsel %vm751, %v1519, %v1397
        %v1536 = vsel %vm751, %v1520, %v1399
        %v1537 = vsel %vm751, %v1521, %v1401
        %v1538 = vsel %vm751, %v1522, %v1403
        %v1539 = vsel %vm751, %v1523, %v1405
        %v1540 = vsel %vm751, %v1524, %v1407
        %v1541 = vsel %vm751, %v1525, %v1409
        %v1542 = vsel %vm751, %v1526, %v1411
        %v1543 = vsel %vm751, %v1527, %v1413
        %v1544 = vsel %vm751, %v1528, %v1415
        %v1545 = vsel %vm751, %v1529, %v1417
        %v1546 = vsel %vm649, %v1016, 0
        %v1548 = vsel %vm649, %v1017, 0
        %v1550 = vsel %vm649, %v1018, 0
        %v1552 = vsel %vm649, %v1019, 0
        %v1554 = vsel %vm649, %v1020, 0
        %v1556 = vsel %vm649, %v1021, 0
        %v1558 = vsel %vm649, %v1022, 0
        %v1560 = vsel %vm649, %v1023, 0
        %v1562 = vsel %vm649, %v1024, 0
        %v1564 = vsel %vm649, %v1025, 0
        %v1566 = vsel %vm649, %v1026, 0
        %v1568 = vsel %vm649, %v1027, 0
        %v1570 = vsel %vm649, %v1033, 0
        %v1572 = vsel %vm649, %v1034, 0
        %v1575 = vsel %vm649, %v1040, 0
        %v1578 = vsel %vm649, %v1041, 0
        %1580 = vmatpush.msra.mxu0 %v184
        %1581 = vmatpush.msra.mxu0 %v183
        %1582 = vmatpush.msra.mxu0 %v182
        %1583 = vmatpush.msra.mxu0 %v181
        %1584 = vmatpush.msra.mxu0 %v180
        %1585 = vmatpush.msra.mxu0 %v179
        %1586 = vmatpush.msra.mxu0 %v178
        %1587 = vmatpush.msra.mxu0 %v177
        %1588 = vmatpush.msra.mxu0 %v176
        %1589 = vmatpush.msra.mxu0 %v175
        %1590 = vmatpush.msra.mxu0 %v174
        %1591 = vmatpush.msra.mxu0 %v173
        %1592 = vmatpush.msra.mxu0 %v172
        %1593 = vmatpush.msra.mxu0 %v171
        %1594 = vmatpush.msra.mxu0 %v170
        %1595 = vmatpush.msra.mxu0 %v169
        %1596 = vmatmul.f32.gmra.mxu0 %v1530
        %v1597 = vpop.f32.mrf.mxu0
        %v1598 = vadd.f32 %v769, %v1597
        %1599 = vmatmul.f32.gmra.mxu0 %v1531
        %v1600 = vpop.f32.mrf.mxu0
        %v1601 = vadd.f32 %v769, %v1600
        %1602 = vmatmul.f32.gmra.mxu0 %v1532
        %v1603 = vpop.f32.mrf.mxu0
        %v1604 = vadd.f32 %v769, %v1603
        %1605 = vmatmul.f32.gmra.mxu0 %v1533
        %v1606 = vpop.f32.mrf.mxu0
        %v1607 = vadd.f32 %v769, %v1606
        %1608 = vmatmul.f32.gmra.mxu0 %v1534
        %v1609 = vpop.f32.mrf.mxu0
        %v1610 = vadd.f32 %v769, %v1609
        %1611 = vmatmul.f32.gmra.mxu0 %v1535
        %v1612 = vpop.f32.mrf.mxu0
        %v1613 = vadd.f32 %v769, %v1612
        %1614 = vmatmul.f32.gmra.mxu0 %v1536
        %v1615 = vpop.f32.mrf.mxu0
        %v1616 = vadd.f32 %v769, %v1615
        %1617 = vmatmul.f32.gmra.mxu0 %v1537
        %v1618 = vpop.f32.mrf.mxu0
        %v1619 = vadd.f32 %v769, %v1618
        %1620 = vmatmul.f32.gmra.mxu0 %v1538
        %v1621 = vpop.f32.mrf.mxu0
        %v1622 = vadd.f32 %v769, %v1621
        %1623 = vmatmul.f32.gmra.mxu0 %v1539
        %v1624 = vpop.f32.mrf.mxu0
        %v1625 = vadd.f32 %v769, %v1624
        %1626 = vmatmul.f32.gmra.mxu0 %v1540
        %v1627 = vpop.f32.mrf.mxu0
        %v1628 = vadd.f32 %v769, %v1627
        %1629 = vmatmul.f32.gmra.mxu0 %v1541
        %v1630 = vpop.f32.mrf.mxu0
        %v1631 = vadd.f32 %v769, %v1630
        %1632 = vmatmul.f32.gmra.mxu0 %v1542
        %v1633 = vpop.f32.mrf.mxu0
        %v1634 = vadd.f32 %v769, %v1633
        %1635 = vmatmul.f32.gmra.mxu0 %v1543
        %v1636 = vpop.f32.mrf.mxu0
        %v1637 = vadd.f32 %v769, %v1636
        %1638 = vmatmul.f32.gmra.mxu0 %v1544
        %v1639 = vpop.f32.mrf.mxu0
        %v1640 = vadd.f32 %v769, %v1639
        %1641 = vmatmul.f32.gmra.mxu0 %v1545
        %v1642 = vpop.f32.mrf.mxu0
        %v1643 = vadd.f32 %v769, %v1642
        %1644 = vdwg.mxu0
        %1645 = vmatpush.msra.mxu0 0.0
        %1646 = vmatpush.msra.mxu0 0.0
        %1647 = vmatpush.msra.mxu0 0.0
        %1648 = vmatpush.msra.mxu0 0.0
        %1649 = vmatpush.msra.mxu0 0.0
        %1650 = vmatpush.msra.mxu0 0.0
        %1651 = vmatpush.msra.mxu0 0.0
        %1652 = vmatpush.msra.mxu0 0.0
        %1653 = vmatpush.msra.mxu0 0.0
        %1654 = vmatpush.msra.mxu0 0.0
        %1655 = vmatpush.msra.mxu0 0.0
        %1656 = vmatpush.msra.mxu0 0.0
        %1657 = vmatpush.msra.mxu0 0.0
        %1658 = vmatpush.msra.mxu0 0.0
        %1659 = vmatpush.msra.mxu0 %v186
        %1660 = vmatpush.msra.mxu0 %v185
        %1661 = vmatmul.f32.gmra.mxu0 %v1546
        %v1662 = vpop.f32.mrf.mxu0
        %v1663 = vadd.f32 %v1598, %v1662
        %1664 = vmatmul.f32.gmra.mxu0 %v1548
        %v1665 = vpop.f32.mrf.mxu0
        %v1666 = vadd.f32 %v1601, %v1665
        %1667 = vmatmul.f32.gmra.mxu0 %v1550
        %v1668 = vpop.f32.mrf.mxu0
        %v1669 = vadd.f32 %v1604, %v1668
        %1670 = vmatmul.f32.gmra.mxu0 %v1552
        %v1671 = vpop.f32.mrf.mxu0
        %v1672 = vadd.f32 %v1607, %v1671
        %1673 = vmatmul.f32.gmra.mxu0 %v1554
        %v1674 = vpop.f32.mrf.mxu0
        %v1675 = vadd.f32 %v1610, %v1674
        %1676 = vmatmul.f32.gmra.mxu0 %v1556
        %v1677 = vpop.f32.mrf.mxu0
        %v1678 = vadd.f32 %v1613, %v1677
        %1679 = vmatmul.f32.gmra.mxu0 %v1558
        %v1680 = vpop.f32.mrf.mxu0
        %v1681 = vadd.f32 %v1616, %v1680
        %1682 = vmatmul.f32.gmra.mxu0 %v1560
        %v1683 = vpop.f32.mrf.mxu0
        %v1684 = vadd.f32 %v1619, %v1683
        %1685 = vmatmul.f32.gmra.mxu0 %v1562
        %v1686 = vpop.f32.mrf.mxu0
        %v1687 = vadd.f32 %v1622, %v1686
        %1688 = vmatmul.f32.gmra.mxu0 %v1564
        %v1689 = vpop.f32.mrf.mxu0
        %v1690 = vadd.f32 %v1625, %v1689
        %1691 = vmatmul.f32.gmra.mxu0 %v1566
        %v1692 = vpop.f32.mrf.mxu0
        %v1693 = vadd.f32 %v1628, %v1692
        %1694 = vmatmul.f32.gmra.mxu0 %v1568
        %v1695 = vpop.f32.mrf.mxu0
        %v1696 = vadd.f32 %v1631, %v1695
        %1697 = vmatmul.f32.gmra.mxu0 %v1570
        %v1698 = vpop.f32.mrf.mxu0
        %v1699 = vadd.f32 %v1634, %v1698
        %1700 = vmatmul.f32.gmra.mxu0 %v1572
        %v1701 = vpop.f32.mrf.mxu0
        %v1702 = vadd.f32 %v1637, %v1701
        %1703 = vmatmul.f32.gmra.mxu0 %v1575
        %v1704 = vpop.f32.mrf.mxu0
        %v1705 = vadd.f32 %v1640, %v1704
        %1706 = vmatmul.f32.gmra.mxu0 %v1578
        %v1707 = vpop.f32.mrf.mxu0
        %v1708 = vadd.f32 %v1643, %v1707
        %1709 = vdwg.mxu0
        %v1710 = vmax.f32 %v1663, 0.0
        %v1711 = vmax.f32 %v1666, 0.0
        %v1712 = vmax.f32 %v1669, 0.0
        %v1713 = vmax.f32 %v1672, 0.0
        %v1714 = vmax.f32 %v1675, 0.0
        %v1715 = vmax.f32 %v1678, 0.0
        %v1716 = vmax.f32 %v1681, 0.0
        %v1717 = vmax.f32 %v1684, 0.0
        %v1718 = vmax.f32 %v1687, 0.0
        %v1719 = vmax.f32 %v1690, 0.0
        %v1720 = vmax.f32 %v1693, 0.0
        %v1721 = vmax.f32 %v1696, 0.0
        %v1722 = vmax.f32 %v1699, 0.0
        %v1723 = vmax.f32 %v1702, 0.0
        %v1724 = vmax.f32 %v1705, 0.0
        %v1725 = vmax.f32 %v1708, 0.0
        %s1726 = scalar_lea.vmem %s163, 128 [#allocation2]
        %1727 = vst.msk [vmem:[%s1726] sm:$0xff] %vm649, %v1710
        %1728 = vst.msk [vmem:[%s1726 + $0x8] sm:$0xff] %vm649, %v1711
        %s1729 = scalar_lea.vmem %s163, 144 [#allocation2]
        %1730 = vst.msk [vmem:[%s1729] sm:$0xff] %vm649, %v1712
        %1731 = vst.msk [vmem:[%s1729 + $0x8] sm:$0xff] %vm649, %v1713
        %s1732 = scalar_lea.vmem %s163, 160 [#allocation2]
        %1733 = vst.msk [vmem:[%s1732] sm:$0xff] %vm649, %v1714
        %1734 = vst.msk [vmem:[%s1732 + $0x8] sm:$0xff] %vm649, %v1715
        %s1735 = scalar_lea.vmem %s163, 176 [#allocation2]
        %1736 = vst.msk [vmem:[%s1735] sm:$0xff] %vm649, %v1716
        %1737 = vst.msk [vmem:[%s1735 + $0x8] sm:$0xff] %vm649, %v1717
        %s1738 = scalar_lea.vmem %s163, 192 [#allocation2]
        %1739 = vst.msk [vmem:[%s1738] sm:$0xff] %vm649, %v1718
        %1740 = vst.msk [vmem:[%s1738 + $0x8] sm:$0xff] %vm649, %v1719
        %s1741 = scalar_lea.vmem %s163, 208 [#allocation2]
        %1742 = vst.msk [vmem:[%s1741] sm:$0xff] %vm649, %v1720
        %1743 = vst.msk [vmem:[%s1741 + $0x8] sm:$0xff] %vm649, %v1721
        %s1744 = scalar_lea.vmem %s163, 224 [#allocation2]
        %1745 = vst.msk [vmem:[%s1744] sm:$0xff] %vm649, %v1722
        %1746 = vst.msk [vmem:[%s1744 + $0x8] sm:$0xff] %vm649, %v1723
        %s1747 = scalar_lea.vmem %s163, 240 [#allocation2]
        %1748 = vst.msk [vmem:[%s1747] sm:$0xff] %vm649, %v1724
        %1749 = vst.msk [vmem:[%s1747 + $0x8] sm:$0xff] %vm649, %v1725
        %s1750 = sand.u32 %s93, 1
        %s1751 = scalar_lea.sflag [#allocation3], %s1750
        %s1752 = sand.u32 %s93, 1
        %s1753 = smul.addr %s1752, 256
        %s1754 = scalar_lea.vmem [#allocation2], %s1753
        // Predicated region
        $region33: #{tpu_custom_call.1} parent=31 // pred_check
          %p1755 = pneg %p103
        $region34: #{tpu_custom_call.1} parent=31 // pred_check_branch
          %1757 = sbr.rel (%p1755) target = $region36
        $region35: #{tpu_custom_call.1} parent=31 // pred_region
          %1759 = vsyncadd %s1751, 0
          %s1760 = smul.addr %s17, 32
          %s1761 = smul.addr %s1760, 8
          %s1762 = scalar_lea.hbm %s3, %s1761
          %s1763 = sshll.u32 %s1754, 4
          %s1764 = int_to_ptr.vmem [resolvable:$true] %s1763
          %s1765 = sshll.u32 %s1762, 4
          %s1766 = int_to_ptr.hbm [resolvable:$true] %s1765
          %1771 = dma.vmem_to_hbm [thread:$0]  %s1764, 4096, %s1766, %s1751, 128, 128, 8
        $region36: #{tpu_custom_call.1} parent=31 // pred_fallthru
          _
      $region32: #{tpu_custom_call.1} parent=5 // pred_fallthru
        _
      %p1772 = scmp.le.s32.totalorder 2, %s12
      // Predicated region
      $region37: #{tpu_custom_call.1} parent=5 // pred_check
        %p1773 = pneg %p1772
      $region38: #{tpu_custom_call.1} parent=5 // pred_check_branch
        %1775 = sbr.rel (%p1773) target = $region40
      $region39: #{tpu_custom_call.1} parent=5 // pred_region
        %s1776 = ssub.s32 %s12, 2
        // Predicated region
        $region41: #{tpu_custom_call.1} parent=39 // pred_check
          %p1777 = pneg %p109
        $region42: #{tpu_custom_call.1} parent=39 // pred_check_branch
          %1779 = sbr.rel (%p1777) target = $region44
        $region43: #{tpu_custom_call.1} parent=39 // pred_region
          %s1780 = sand.u32 %s94, 1
          %s1781 = scalar_lea.sflag [#allocation3], %s1780
          %s1782 = sand.u32 %s94, 1
          %s1783 = smul.addr %s1782, 256
          %s1784 = scalar_lea.vmem [#allocation2], %s1783
          %1786 = dma.done %s1781, 4096
        $region44: #{tpu_custom_call.1} parent=39 // pred_fallthru
          _
      $region40: #{tpu_custom_call.1} parent=5 // pred_fallthru
        _
    $region6: #{tpu_custom_call.1} parent=1 // loop_footer
      %s16 = sadd.s32 1, %s12
    $region7: #{tpu_custom_call.1} parent=1 // loop_footer_branch
      %11 = sbr.rel target = $region3
    $region8: #{tpu_custom_call.1} parent=1 // loop_exit
      _
    %1787 = vsyncpa [#allocation3], 1
    %s1788 = scalar_lea.sflag [#allocation3], 1
    %1789 = vsyncpa %s1788, 1

</llo_original>
